<compile_context>
chip_gen: v7x
topology: tpu7x:2x2x1
jax: 0.10.0
libtpu: 0.0.40
codegen_flags: <defaults>
</compile_context>

<pallas_src>
import functools
import math

import jax
import jax.numpy as jnp
from jax import lax
from jax.experimental import pallas as pl
from jax.experimental.pallas import tpu as pltpu


# ---------------------------------------------------------------------------
# Stage 1: fused Q/K/V projection, head-major outputs.
# Grid = (B, S // TM).  One step: (TM, hidden) @ (hidden, hidden) x3 on the MXU,
# then per-head static column slices written to (B, H, S, D) outputs.
# ---------------------------------------------------------------------------
def _qkv_proj_kernel(x_ref, wq_ref, bq_ref, wk_ref, bk_ref, wv_ref, bv_ref,
                     q_ref, k_ref, v_ref, *, num_heads, head_dim, q_scale):
    # f32 -> bf16 cast folded into the kernel (saves a wrapper-side HBM pass).
    x = x_ref[0].astype(wq_ref.dtype)                       # (TM, hidden)

    q = (jnp.dot(x, wq_ref[...], preferred_element_type=jnp.float32)
         + bq_ref[...]) * q_scale                            # scale+log2e folded in
    k = jnp.dot(x, wk_ref[...], preferred_element_type=jnp.float32) + bk_ref[...]
    v = jnp.dot(x, wv_ref[...], preferred_element_type=jnp.float32) + bv_ref[...]

    q = q.astype(q_ref.dtype)
    k = k.astype(k_ref.dtype)
    v = v.astype(v_ref.dtype)

    # Head split happens ONCE here (static lane slices), not per kv step.
    for h in range(num_heads):
        sl = slice(h * head_dim, (h + 1) * head_dim)
        q_ref[0, h] = q[:, sl]
        k_ref[0, h] = k[:, sl]
        v_ref[0, h] = v[:, sl]


# ---------------------------------------------------------------------------
# Stage 2: flash attention (online softmax, exp2) + fused output projection.
# Grid = (B, S/TQ, H, S/TK); (H, TK) are the "arbitrary" accumulation axes.
# Blocks are head-contiguous (tq, D)/(tk, D) tiles -> no reshapes in the loop.
# ---------------------------------------------------------------------------
def _flash_attn_kernel(*refs, has_bias):
    if has_bias:
        (q_ref, k_ref, v_ref, bias_ref, wo_ref, bo_ref, o_ref,
         m_sc, l_sc, ctx_sc, out_sc) = refs
    else:
        (q_ref, k_ref, v_ref, wo_ref, bo_ref, o_ref,
         m_sc, l_sc, ctx_sc, out_sc) = refs
        bias_ref = None

    h = pl.program_id(2)
    ki = pl.program_id(3)
    n_h = pl.num_programs(2)
    n_k = pl.num_programs(3)

    @pl.when(jnp.logical_and(h == 0, ki == 0))
    def _init_output_acc():
        out_sc[...] = jnp.zeros_like(out_sc)

    @pl.when(ki == 0)
    def _init_head_state():
        m_sc[...] = jnp.full_like(m_sc, -jnp.inf)
        l_sc[...] = jnp.zeros_like(l_sc)
        ctx_sc[...] = jnp.zeros_like(ctx_sc)

    q = q_ref[0, 0]                                          # (tq, D) bf16, pre-scaled
    k = k_ref[0, 0]                                          # (tk, D) bf16
    v = v_ref[0, 0]                                          # (tk, D) bf16

    # scores in log2(e)-scaled space: (tq, tk) f32 on the MXU from bf16 operands
    s = lax.dot_general(q, k, (((1,), (1,)), ((), ())),
                        preferred_element_type=jnp.float32)
    if has_bias:
        s = s + bias_ref[0, 0].astype(jnp.float32)           # additive 0 / -1e9 bias

    # --- online softmax (all f32, exp2 because log2(e) was folded into Q) ---
    m_prev = m_sc[...]                                       # (tq, 1)
    m_new = jnp.maximum(m_prev, jnp.max(s, axis=-1, keepdims=True))
    alpha = jnp.exp2(m_prev - m_new)                         # (tq, 1)
    p = jnp.exp2(s - m_new)                                  # (tq, tk)
    l_sc[...] = alpha * l_sc[...] + jnp.sum(p, axis=-1, keepdims=True)
    ctx_sc[...] = alpha * ctx_sc[...] + jnp.dot(
        p.astype(v.dtype), v, preferred_element_type=jnp.float32)   # (tq, D)
    m_sc[...] = m_new

    # End of this head's kv loop: normalize and fold into the output projection.
    @pl.when(ki == n_k - 1)
    def _head_done():
        inv_l = pl.reciprocal(l_sc[...], approx=False)       # exact; once per head
        ctx = (ctx_sc[...] * inv_l).astype(wo_ref.dtype)     # (tq, D) bf16
        out_sc[...] += jnp.dot(ctx, wo_ref[0],
                               preferred_element_type=jnp.float32)  # (tq, hidden)

    @pl.when(jnp.logical_and(h == n_h - 1, ki == n_k - 1))
    def _finalize():
        o_ref[0] = (out_sc[...] + bo_ref[...]).astype(o_ref.dtype)


# ---------------------------------------------------------------------------
# Wrapper
# ---------------------------------------------------------------------------
def _pick_tile(n, pref):
    """Largest tile <= pref that divides n (multiple of 8). Never falls back to n
    when n is huge/odd -> prevents a silent O(S^2) VMEM blow-up."""
    for t in (pref, 512, 256, 128, 64, 32, 16, 8):
        if t <= n and n % t == 0:
            return t
    raise ValueError(
        f"sequence/row extent {n} has no tile divisor that is a multiple of 8; "
        "pad the sequence length to a multiple of 8.")  # TODO(synk): masked-tail tiles


def multi_head_attention(hidden_states, params, *, num_heads, attention_mask=None,
                         q_tile=256, kv_tile=256, row_tile=256,
                         compute_dtype=jnp.bfloat16, out_dtype=None):
    """hidden_states: (B, S, HIDDEN) f32.  attention_mask: (B, 1, S, S) or None."""
    B, S, hidden = hidden_states.shape
    assert hidden % num_heads == 0
    head_dim = hidden // num_heads
    out_dtype = hidden_states.dtype if out_dtype is None else out_dtype

    wq, bq, wk, bk, wv, bv, wo, bo = params
    wq_c, wk_c, wv_c, wo_c = (w.astype(compute_dtype) for w in (wq, wk, wv, wo))
    # wo rows are grouped by head: wo_hm[h] == wo[h*D:(h+1)*D, :]  (metadata-only)
    wo_hm = wo_c.reshape(num_heads, head_dim, hidden)

    # fold 1/sqrt(D) and log2(e) (for exp2 softmax) into Q once, in stage 1
    q_scale = math.log2(math.e) / math.sqrt(head_dim)

    # ---- stage 1: Q/K/V projections -> head-major (B, H, S, D) bf16 ----------
    tm = _pick_tile(S, row_tile)

    x_spec = pl.BlockSpec((1, tm, hidden), lambda b, i: (b, i, 0))
    w_spec = pl.BlockSpec((hidden, hidden), lambda b, i: (0, 0))
    bias_spec = pl.BlockSpec((1, hidden), lambda b, i: (0, 0))
    hm_spec = pl.BlockSpec((1, num_heads, tm, head_dim), lambda b, i: (b, 0, i, 0))

    qkv_shape = jax.ShapeDtypeStruct((B, num_heads, S, head_dim), compute_dtype)
    q_hm, k_hm, v_hm = pl.pallas_call(
        functools.partial(_qkv_proj_kernel, num_heads=num_heads,
                          head_dim=head_dim, q_scale=q_scale),
        out_shape=(qkv_shape, qkv_shape, qkv_shape),
        grid_spec=pltpu.PrefetchScalarGridSpec(
            num_scalar_prefetch=0,
            grid=(B, S // tm),
            in_specs=[x_spec, w_spec, bias_spec, w_spec, bias_spec, w_spec, bias_spec],
            out_specs=[hm_spec, hm_spec, hm_spec],
        ),
        compiler_params=pltpu.CompilerParams(
            dimension_semantics=("parallel", "parallel")),
    )(hidden_states, wq_c, bq, wk_c, bk, wv_c, bv)

    # ---- stage 2: flash attention + fused output projection ------------------
    tq = _pick_tile(S, q_tile)
    tk = _pick_tile(S, kv_tile)
    has_bias = attention_mask is not None

    in_specs = [
        pl.BlockSpec((1, 1, tq, head_dim), lambda b, qi, h, ki: (b, h, qi, 0)),  # q
        pl.BlockSpec((1, 1, tk, head_dim), lambda b, qi, h, ki: (b, h, ki, 0)),  # k
        pl.BlockSpec((1, 1, tk, head_dim), lambda b, qi, h, ki: (b, h, ki, 0)),  # v
    ]
    inputs = [q_hm, k_hm, v_hm]
    if has_bias:
        # additive bf16 bias: 0 where visible, -1e9 where mask == 0
        bias = jnp.where(attention_mask == 0, jnp.float32(-1e9),
                         jnp.float32(0.0)).astype(compute_dtype)
        in_specs.append(pl.BlockSpec((1, 1, tq, tk),
                                     lambda b, qi, h, ki: (b, 0, qi, ki)))
        inputs.append(bias)
    in_specs += [
        pl.BlockSpec((1, head_dim, hidden), lambda b, qi, h, ki: (h, 0, 0)),  # wo[h]
        pl.BlockSpec((1, hidden), lambda b, qi, h, ki: (0, 0)),               # bo
    ]
    inputs += [wo_hm, bo]

    kernel = functools.partial(_flash_attn_kernel, has_bias=has_bias)

    return pl.pallas_call(
        kernel,
        out_shape=jax.ShapeDtypeStruct((B, S, hidden), out_dtype),
        grid_spec=pltpu.PrefetchScalarGridSpec(
            num_scalar_prefetch=0,
            grid=(B, S // tq, num_heads, S // tk),
            in_specs=in_specs,
            out_specs=pl.BlockSpec((1, tq, hidden), lambda b, qi, h, ki: (b, qi, 0)),
            scratch_shapes=[
                pltpu.VMEM((tq, 1), jnp.float32),         # running max (log2 space)
                pltpu.VMEM((tq, 1), jnp.float32),         # running denom
                pltpu.VMEM((tq, head_dim), jnp.float32),  # per-head ctx accumulator
                pltpu.VMEM((tq, hidden), jnp.float32),    # lane-dense output accum
            ],
        ),
        compiler_params=pltpu.CompilerParams(
            dimension_semantics=("parallel", "parallel", "arbitrary", "arbitrary")),
    )(*inputs)


# ---------------------------------------------------------------------------
# Synthetic params + pure-JAX reference (PyTorch eval-mode semantics)
# ---------------------------------------------------------------------------
def init_params(key, hidden):
    """Deterministic synthetic weights.  W stored as (in, out); b as (1, out)."""
    ks = jax.random.split(key, 8)
    scale = 1.0 / math.sqrt(hidden)
    wq = jax.random.normal(ks[0], (hidden, hidden), jnp.float32) * scale
    bq = jax.random.normal(ks[1], (1, hidden), jnp.float32) * 0.01
    wk = jax.random.normal(ks[2], (hidden, hidden), jnp.float32) * scale
    bk = jax.random.normal(ks[3], (1, hidden), jnp.float32) * 0.01
    wv = jax.random.normal(ks[4], (hidden, hidden), jnp.float32) * scale
    bv = jax.random.normal(ks[5], (1, hidden), jnp.float32) * 0.01
    wo = jax.random.normal(ks[6], (hidden, hidden), jnp.float32) * scale
    bo = jax.random.normal(ks[7], (1, hidden), jnp.float32) * 0.01
    return (wq, bq, wk, bk, wv, bv, wo, bo)


def reference_mha(x, params, num_heads, mask=None):
    """Pure-JAX f32 reference matching the PyTorch forward (eval mode)."""
    wq, bq, wk, bk, wv, bv, wo, bo = params
    B, S, hidden = x.shape
    D = hidden // num_heads
    q = (x @ wq + bq[0]).reshape(B, S, num_heads, D).transpose(0, 2, 1, 3)
    k = (x @ wk + bk[0]).reshape(B, S, num_heads, D).transpose(0, 2, 1, 3)
    v = (x @ wv + bv[0]).reshape(B, S, num_heads, D).transpose(0, 2, 1, 3)
    scores = jnp.einsum("bhsd,bhtd->bhst", q, k) / math.sqrt(D)
    if mask is not None:
        scores = jnp.where(mask == 0, -1e9, scores)
    attn = jax.nn.softmax(scores, axis=-1)
    out = jnp.einsum("bhst,bhtd->bhsd", attn, v)
    out = out.transpose(0, 2, 1, 3).reshape(B, S, hidden)
    return out @ wo + bo[0]


if __name__ == "__main__":
    # Small but TPU-tile-aligned shapes (head_dim=64 matches the module default).
    B, S, HIDDEN, NUM_HEADS = 2, 256, 256, 4

    key = jax.random.PRNGKey(0)
    k_x, k_p = jax.random.split(key)
    x = jax.random.normal(k_x, (B, S, HIDDEN), jnp.float32)
    params = init_params(k_p, HIDDEN)

    # --- no-mask path (no bias tensor built or DMA'd) ---
    out = multi_head_attention(x, params, num_heads=NUM_HEADS, attention_mask=None)
    out = jax.block_until_ready(out)
    ref = reference_mha(x, params, NUM_HEADS, mask=None)
    assert out.shape == (B, S, HIDDEN)
    err = float(jnp.max(jnp.abs(out - ref)))
    # bf16 MXU operands (f32 accumulation) vs f32 reference => loose-but-safe tol
    assert err < 5e-2, f"no-mask mismatch vs reference: max|diff|={err}"

    # --- masked path (causal mask, additive-bias specialization) ---
    mask = jnp.broadcast_to(jnp.tril(jnp.ones((S, S), jnp.float32)), (B, 1, S, S))
    out_m = multi_head_attention(x, params, num_heads=NUM_HEADS, attention_mask=mask)
    out_m = jax.block_until_ready(out_m)
    ref_m = reference_mha(x, params, NUM_HEADS, mask=mask)
    err_m = float(jnp.max(jnp.abs(out_m - ref_m)))
    assert err_m < 5e-2, f"masked mismatch vs reference: max|diff|={err_m}"

    print("KERNEL_OK")
</pallas_src>

<mosaic_0001>
module attributes {stable_mosaic.version = 11 : i64} {
  func.func @_qkv_proj_kernel(%arg0: i32, %arg1: i32, %arg2: memref<1x256x256xf32, #tpu.memory_space<vmem>>, %arg3: memref<256x256xbf16, #tpu.memory_space<vmem>>, %arg4: memref<1x256xf32, #tpu.memory_space<vmem>>, %arg5: memref<256x256xbf16, #tpu.memory_space<vmem>>, %arg6: memref<1x256xf32, #tpu.memory_space<vmem>>, %arg7: memref<256x256xbf16, #tpu.memory_space<vmem>>, %arg8: memref<1x256xf32, #tpu.memory_space<vmem>>, %arg9: memref<1x4x256x64xbf16, #tpu.memory_space<vmem>>, %arg10: memref<1x4x256x64xbf16, #tpu.memory_space<vmem>>, %arg11: memref<1x4x256x64xbf16, #tpu.memory_space<vmem>>) attributes {dimension_semantics = [#tpu.dimension_semantics<parallel>, #tpu.dimension_semantics<parallel>], iteration_bounds = array<i64: 2, 1>, scalar_prefetch = 0 : i64, scratch_operands = 0 : i64, tpu.core_type = #tpu.core_type<tc>, window_params = [{transform_indices = @transform_0, window_bounds = array<i64: 1, 256, 256>}, {pipeline_mode = #tpu.pipeline_mode<synchronous>, transform_indices = @transform_1, window_bounds = array<i64: 256, 256>}, {pipeline_mode = #tpu.pipeline_mode<synchronous>, transform_indices = @transform_2, window_bounds = array<i64: 1, 256>}, {pipeline_mode = #tpu.pipeline_mode<synchronous>, transform_indices = @transform_3, window_bounds = array<i64: 256, 256>}, {pipeline_mode = #tpu.pipeline_mode<synchronous>, transform_indices = @transform_4, window_bounds = array<i64: 1, 256>}, {pipeline_mode = #tpu.pipeline_mode<synchronous>, transform_indices = @transform_5, window_bounds = array<i64: 256, 256>}, {pipeline_mode = #tpu.pipeline_mode<synchronous>, transform_indices = @transform_6, window_bounds = array<i64: 1, 256>}, {transform_indices = @transform_7, window_bounds = array<i64: 1, 4, 256, 64>}, {transform_indices = @transform_8, window_bounds = array<i64: 1, 4, 256, 64>}, {transform_indices = @transform_9, window_bounds = array<i64: 1, 4, 256, 64>}]} {
    %c0 = arith.constant 0 : index
    %c0_0 = arith.constant 0 : index
    %c0_1 = arith.constant 0 : index
    %0 = vector.load %arg2[%c0, %c0_0, %c0_1] : memref<1x256x256xf32, #tpu.memory_space<vmem>>, vector<1x256x256xf32>
    %1 = vector.shape_cast %0 : vector<1x256x256xf32> to vector<256x256xf32>
    %2 = arith.truncf %1 : vector<256x256xf32> to vector<256x256xbf16>
    %c0_2 = arith.constant 0 : index
    %c0_3 = arith.constant 0 : index
    %3 = vector.load %arg3[%c0_2, %c0_3] : memref<256x256xbf16, #tpu.memory_space<vmem>>, vector<256x256xbf16>
    %cst = arith.constant dense<0.000000e+00> : vector<256x256xf32>
    %4 = tpu.matmul %2, %3, %cst {dimension_numbers = #tpu.dot_dimension_numbers<[1], [0], [0], [1], [0, 0, 1, 1], [], []>} : vector<256x256xbf16>, vector<256x256xbf16>, vector<256x256xf32> -> vector<256x256xf32>
    %c0_4 = arith.constant 0 : index
    %c0_5 = arith.constant 0 : index
    %5 = vector.load %arg4[%c0_4, %c0_5] : memref<1x256xf32, #tpu.memory_space<vmem>>, vector<1x256xf32>
    %6 = vector.broadcast %5 : vector<1x256xf32> to vector<256x256xf32>
    %7 = arith.addf %4, %6 : vector<256x256xf32>
    %cst_6 = arith.constant 0.180336878 : f32
    %8 = vector.broadcast %cst_6 : f32 to vector<256x256xf32>
    %9 = arith.mulf %7, %8 : vector<256x256xf32>
    %c0_7 = arith.constant 0 : index
    %c0_8 = arith.constant 0 : index
    %10 = vector.load %arg5[%c0_7, %c0_8] : memref<256x256xbf16, #tpu.memory_space<vmem>>, vector<256x256xbf16>
    %cst_9 = arith.constant dense<0.000000e+00> : vector<256x256xf32>
    %11 = tpu.matmul %2, %10, %cst_9 {dimension_numbers = #tpu.dot_dimension_numbers<[1], [0], [0], [1], [0, 0, 1, 1], [], []>} : vector<256x256xbf16>, vector<256x256xbf16>, vector<256x256xf32> -> vector<256x256xf32>
    %c0_10 = arith.constant 0 : index
    %c0_11 = arith.constant 0 : index
    %12 = vector.load %arg6[%c0_10, %c0_11] : memref<1x256xf32, #tpu.memory_space<vmem>>, vector<1x256xf32>
    %13 = vector.broadcast %12 : vector<1x256xf32> to vector<256x256xf32>
    %14 = arith.addf %11, %13 : vector<256x256xf32>
    %c0_12 = arith.constant 0 : index
    %c0_13 = arith.constant 0 : index
    %15 = vector.load %arg7[%c0_12, %c0_13] : memref<256x256xbf16, #tpu.memory_space<vmem>>, vector<256x256xbf16>
    %cst_14 = arith.constant dense<0.000000e+00> : vector<256x256xf32>
    %16 = tpu.matmul %2, %15, %cst_14 {dimension_numbers = #tpu.dot_dimension_numbers<[1], [0], [0], [1], [0, 0, 1, 1], [], []>} : vector<256x256xbf16>, vector<256x256xbf16>, vector<256x256xf32> -> vector<256x256xf32>
    %c0_15 = arith.constant 0 : index
    %c0_16 = arith.constant 0 : index
    %17 = vector.load %arg8[%c0_15, %c0_16] : memref<1x256xf32, #tpu.memory_space<vmem>>, vector<1x256xf32>
    %18 = vector.broadcast %17 : vector<1x256xf32> to vector<256x256xf32>
    %19 = arith.addf %16, %18 : vector<256x256xf32>
    %20 = arith.truncf %9 : vector<256x256xf32> to vector<256x256xbf16>
    %21 = arith.truncf %14 : vector<256x256xf32> to vector<256x256xbf16>
    %22 = arith.truncf %19 : vector<256x256xf32> to vector<256x256xbf16>
    %23 = vector.extract_strided_slice %20 {offsets = [0, 0], sizes = [256, 64], strides = [1, 1]} : vector<256x256xbf16> to vector<256x64xbf16>
    %c0_17 = arith.constant 0 : index
    %c0_18 = arith.constant 0 : index
    %c0_19 = arith.constant 0 : index
    %c0_20 = arith.constant 0 : index
    %24 = vector.load %arg9[%c0_17, %c0_18, %c0_19, %c0_20] : memref<1x4x256x64xbf16, #tpu.memory_space<vmem>>, vector<1x1x256x64xbf16>
    %25 = vector.shape_cast %24 : vector<1x1x256x64xbf16> to vector<256x64xbf16>
    %26 = vector.shape_cast %23 : vector<256x64xbf16> to vector<1x1x256x64xbf16>
    tpu.vector_store %arg9[%c0_17, %c0_18, %c0_19, %c0_20], %26 {strides = array<i32>} : memref<1x4x256x64xbf16, #tpu.memory_space<vmem>>, vector<1x1x256x64xbf16>,
    %27 = vector.extract_strided_slice %21 {offsets = [0, 0], sizes = [256, 64], strides = [1, 1]} : vector<256x256xbf16> to vector<256x64xbf16>
    %c0_21 = arith.constant 0 : index
    %c0_22 = arith.constant 0 : index
    %c0_23 = arith.constant 0 : index
    %c0_24 = arith.constant 0 : index
    %28 = vector.load %arg10[%c0_21, %c0_22, %c0_23, %c0_24] : memref<1x4x256x64xbf16, #tpu.memory_space<vmem>>, vector<1x1x256x64xbf16>
    %29 = vector.shape_cast %28 : vector<1x1x256x64xbf16> to vector<256x64xbf16>
    %30 = vector.shape_cast %27 : vector<256x64xbf16> to vector<1x1x256x64xbf16>
    tpu.vector_store %arg10[%c0_21, %c0_22, %c0_23, %c0_24], %30 {strides = array<i32>} : memref<1x4x256x64xbf16, #tpu.memory_space<vmem>>, vector<1x1x256x64xbf16>,
    %31 = vector.extract_strided_slice %22 {offsets = [0, 0], sizes = [256, 64], strides = [1, 1]} : vector<256x256xbf16> to vector<256x64xbf16>
    %c0_25 = arith.constant 0 : index
    %c0_26 = arith.constant 0 : index
    %c0_27 = arith.constant 0 : index
    %c0_28 = arith.constant 0 : index
    %32 = vector.load %arg11[%c0_25, %c0_26, %c0_27, %c0_28] : memref<1x4x256x64xbf16, #tpu.memory_space<vmem>>, vector<1x1x256x64xbf16>
    %33 = vector.shape_cast %32 : vector<1x1x256x64xbf16> to vector<256x64xbf16>
    %34 = vector.shape_cast %31 : vector<256x64xbf16> to vector<1x1x256x64xbf16>
    tpu.vector_store %arg11[%c0_25, %c0_26, %c0_27, %c0_28], %34 {strides = array<i32>} : memref<1x4x256x64xbf16, #tpu.memory_space<vmem>>, vector<1x1x256x64xbf16>,
    %35 = vector.extract_strided_slice %20 {offsets = [0, 64], sizes = [256, 64], strides = [1, 1]} : vector<256x256xbf16> to vector<256x64xbf16>
    %c0_29 = arith.constant 0 : index
    %c1 = arith.constant 1 : index
    %c0_30 = arith.constant 0 : index
    %c0_31 = arith.constant 0 : index
    %36 = vector.load %arg9[%c0_29, %c1, %c0_30, %c0_31] : memref<1x4x256x64xbf16, #tpu.memory_space<vmem>>, vector<1x1x256x64xbf16>
    %37 = vector.shape_cast %36 : vector<1x1x256x64xbf16> to vector<256x64xbf16>
    %38 = vector.shape_cast %35 : vector<256x64xbf16> to vector<1x1x256x64xbf16>
    tpu.vector_store %arg9[%c0_29, %c1, %c0_30, %c0_31], %38 {strides = array<i32>} : memref<1x4x256x64xbf16, #tpu.memory_space<vmem>>, vector<1x1x256x64xbf16>,
    %39 = vector.extract_strided_slice %21 {offsets = [0, 64], sizes = [256, 64], strides = [1, 1]} : vector<256x256xbf16> to vector<256x64xbf16>
    %c0_32 = arith.constant 0 : index
    %c1_33 = arith.constant 1 : index
    %c0_34 = arith.constant 0 : index
    %c0_35 = arith.constant 0 : index
    %40 = vector.load %arg10[%c0_32, %c1_33, %c0_34, %c0_35] : memref<1x4x256x64xbf16, #tpu.memory_space<vmem>>, vector<1x1x256x64xbf16>
    %41 = vector.shape_cast %40 : vector<1x1x256x64xbf16> to vector<256x64xbf16>
    %42 = vector.shape_cast %39 : vector<256x64xbf16> to vector<1x1x256x64xbf16>
    tpu.vector_store %arg10[%c0_32, %c1_33, %c0_34, %c0_35], %42 {strides = array<i32>} : memref<1x4x256x64xbf16, #tpu.memory_space<vmem>>, vector<1x1x256x64xbf16>,
    %43 = vector.extract_strided_slice %22 {offsets = [0, 64], sizes = [256, 64], strides = [1, 1]} : vector<256x256xbf16> to vector<256x64xbf16>
    %c0_36 = arith.constant 0 : index
    %c1_37 = arith.constant 1 : index
    %c0_38 = arith.constant 0 : index
    %c0_39 = arith.constant 0 : index
    %44 = vector.load %arg11[%c0_36, %c1_37, %c0_38, %c0_39] : memref<1x4x256x64xbf16, #tpu.memory_space<vmem>>, vector<1x1x256x64xbf16>
    %45 = vector.shape_cast %44 : vector<1x1x256x64xbf16> to vector<256x64xbf16>
    %46 = vector.shape_cast %43 : vector<256x64xbf16> to vector<1x1x256x64xbf16>
    tpu.vector_store %arg11[%c0_36, %c1_37, %c0_38, %c0_39], %46 {strides = array<i32>} : memref<1x4x256x64xbf16, #tpu.memory_space<vmem>>, vector<1x1x256x64xbf16>,
    %47 = vector.extract_strided_slice %20 {offsets = [0, 128], sizes = [256, 64], strides = [1, 1]} : vector<256x256xbf16> to vector<256x64xbf16>
    %c0_40 = arith.constant 0 : index
    %c2 = arith.constant 2 : index
    %c0_41 = arith.constant 0 : index
    %c0_42 = arith.constant 0 : index
    %48 = vector.load %arg9[%c0_40, %c2, %c0_41, %c0_42] : memref<1x4x256x64xbf16, #tpu.memory_space<vmem>>, vector<1x1x256x64xbf16>
    %49 = vector.shape_cast %48 : vector<1x1x256x64xbf16> to vector<256x64xbf16>
    %50 = vector.shape_cast %47 : vector<256x64xbf16> to vector<1x1x256x64xbf16>
    tpu.vector_store %arg9[%c0_40, %c2, %c0_41, %c0_42], %50 {strides = array<i32>} : memref<1x4x256x64xbf16, #tpu.memory_space<vmem>>, vector<1x1x256x64xbf16>,
    %51 = vector.extract_strided_slice %21 {offsets = [0, 128], sizes = [256, 64], strides = [1, 1]} : vector<256x256xbf16> to vector<256x64xbf16>
    %c0_43 = arith.constant 0 : index
    %c2_44 = arith.constant 2 : index
    %c0_45 = arith.constant 0 : index
    %c0_46 = arith.constant 0 : index
    %52 = vector.load %arg10[%c0_43, %c2_44, %c0_45, %c0_46] : memref<1x4x256x64xbf16, #tpu.memory_space<vmem>>, vector<1x1x256x64xbf16>
    %53 = vector.shape_cast %52 : vector<1x1x256x64xbf16> to vector<256x64xbf16>
    %54 = vector.shape_cast %51 : vector<256x64xbf16> to vector<1x1x256x64xbf16>
    tpu.vector_store %arg10[%c0_43, %c2_44, %c0_45, %c0_46], %54 {strides = array<i32>} : memref<1x4x256x64xbf16, #tpu.memory_space<vmem>>, vector<1x1x256x64xbf16>,
    %55 = vector.extract_strided_slice %22 {offsets = [0, 128], sizes = [256, 64], strides = [1, 1]} : vector<256x256xbf16> to vector<256x64xbf16>
    %c0_47 = arith.constant 0 : index
    %c2_48 = arith.constant 2 : index
    %c0_49 = arith.constant 0 : index
    %c0_50 = arith.constant 0 : index
    %56 = vector.load %arg11[%c0_47, %c2_48, %c0_49, %c0_50] : memref<1x4x256x64xbf16, #tpu.memory_space<vmem>>, vector<1x1x256x64xbf16>
    %57 = vector.shape_cast %56 : vector<1x1x256x64xbf16> to vector<256x64xbf16>
    %58 = vector.shape_cast %55 : vector<256x64xbf16> to vector<1x1x256x64xbf16>
    tpu.vector_store %arg11[%c0_47, %c2_48, %c0_49, %c0_50], %58 {strides = array<i32>} : memref<1x4x256x64xbf16, #tpu.memory_space<vmem>>, vector<1x1x256x64xbf16>,
    %59 = vector.extract_strided_slice %20 {offsets = [0, 192], sizes = [256, 64], strides = [1, 1]} : vector<256x256xbf16> to vector<256x64xbf16>
    %c0_51 = arith.constant 0 : index
    %c3 = arith.constant 3 : index
    %c0_52 = arith.constant 0 : index
    %c0_53 = arith.constant 0 : index
    %60 = vector.load %arg9[%c0_51, %c3, %c0_52, %c0_53] : memref<1x4x256x64xbf16, #tpu.memory_space<vmem>>, vector<1x1x256x64xbf16>
    %61 = vector.shape_cast %60 : vector<1x1x256x64xbf16> to vector<256x64xbf16>
    %62 = vector.shape_cast %59 : vector<256x64xbf16> to vector<1x1x256x64xbf16>
    tpu.vector_store %arg9[%c0_51, %c3, %c0_52, %c0_53], %62 {strides = array<i32>} : memref<1x4x256x64xbf16, #tpu.memory_space<vmem>>, vector<1x1x256x64xbf16>,
    %63 = vector.extract_strided_slice %21 {offsets = [0, 192], sizes = [256, 64], strides = [1, 1]} : vector<256x256xbf16> to vector<256x64xbf16>
    %c0_54 = arith.constant 0 : index
    %c3_55 = arith.constant 3 : index
    %c0_56 = arith.constant 0 : index
    %c0_57 = arith.constant 0 : index
    %64 = vector.load %arg10[%c0_54, %c3_55, %c0_56, %c0_57] : memref<1x4x256x64xbf16, #tpu.memory_space<vmem>>, vector<1x1x256x64xbf16>
    %65 = vector.shape_cast %64 : vector<1x1x256x64xbf16> to vector<256x64xbf16>
    %66 = vector.shape_cast %63 : vector<256x64xbf16> to vector<1x1x256x64xbf16>
    tpu.vector_store %arg10[%c0_54, %c3_55, %c0_56, %c0_57], %66 {strides = array<i32>} : memref<1x4x256x64xbf16, #tpu.memory_space<vmem>>, vector<1x1x256x64xbf16>,
    %67 = vector.extract_strided_slice %22 {offsets = [0, 192], sizes = [256, 64], strides = [1, 1]} : vector<256x256xbf16> to vector<256x64xbf16>
    %c0_58 = arith.constant 0 : index
    %c3_59 = arith.constant 3 : index
    %c0_60 = arith.constant 0 : index
    %c0_61 = arith.constant 0 : index
    %68 = vector.load %arg11[%c0_58, %c3_59, %c0_60, %c0_61] : memref<1x4x256x64xbf16, #tpu.memory_space<vmem>>, vector<1x1x256x64xbf16>
    %69 = vector.shape_cast %68 : vector<1x1x256x64xbf16> to vector<256x64xbf16>
    %70 = vector.shape_cast %67 : vector<256x64xbf16> to vector<1x1x256x64xbf16>
    tpu.vector_store %arg11[%c0_58, %c3_59, %c0_60, %c0_61], %70 {strides = array<i32>} : memref<1x4x256x64xbf16, #tpu.memory_space<vmem>>, vector<1x1x256x64xbf16>,
    return
  }
  func.func @transform_0(%arg0: i32, %arg1: i32) -> (i32, i32, i32) {
    %c0_i32 = arith.constant 0 : i32
    %c0_i32_0 = arith.constant 0 : i32
    return %arg0, %arg1, %c0_i32 : i32, i32, i32
  }
  func.func @transform_1(%arg0: i32, %arg1: i32) -> (i32, i32) {
    %c0_i32 = arith.constant 0 : i32
    %c0_i32_0 = arith.constant 0 : i32
    %c0_i32_1 = arith.constant 0 : i32
    return %c0_i32, %c0_i32_0 : i32, i32
  }
  func.func @transform_2(%arg0: i32, %arg1: i32) -> (i32, i32) {
    %c0_i32 = arith.constant 0 : i32
    %c0_i32_0 = arith.constant 0 : i32
    %c0_i32_1 = arith.constant 0 : i32
    return %c0_i32, %c0_i32_0 : i32, i32
  }
  func.func @transform_3(%arg0: i32, %arg1: i32) -> (i32, i32) {
    %c0_i32 = arith.constant 0 : i32
    %c0_i32_0 = arith.constant 0 : i32
    %c0_i32_1 = arith.constant 0 : i32
    return %c0_i32, %c0_i32_0 : i32, i32
  }
  func.func @transform_4(%arg0: i32, %arg1: i32) -> (i32, i32) {
    %c0_i32 = arith.constant 0 : i32
    %c0_i32_0 = arith.constant 0 : i32
    %c0_i32_1 = arith.constant 0 : i32
    return %c0_i32, %c0_i32_0 : i32, i32
  }
  func.func @transform_5(%arg0: i32, %arg1: i32) -> (i32, i32) {
    %c0_i32 = arith.constant 0 : i32
    %c0_i32_0 = arith.constant 0 : i32
    %c0_i32_1 = arith.constant 0 : i32
    return %c0_i32, %c0_i32_0 : i32, i32
  }
  func.func @transform_6(%arg0: i32, %arg1: i32) -> (i32, i32) {
    %c0_i32 = arith.constant 0 : i32
    %c0_i32_0 = arith.constant 0 : i32
    %c0_i32_1 = arith.constant 0 : i32
    return %c0_i32, %c0_i32_0 : i32, i32
  }
  func.func @transform_7(%arg0: i32, %arg1: i32) -> (i32, i32, i32, i32) {
    %c0_i32 = arith.constant 0 : i32
    %c0_i32_0 = arith.constant 0 : i32
    %c0_i32_1 = arith.constant 0 : i32
    return %arg0, %c0_i32, %arg1, %c0_i32_0 : i32, i32, i32, i32
  }
  func.func @transform_8(%arg0: i32, %arg1: i32) -> (i32, i32, i32, i32) {
    %c0_i32 = arith.constant 0 : i32
    %c0_i32_0 = arith.constant 0 : i32
    %c0_i32_1 = arith.constant 0 : i32
    return %arg0, %c0_i32, %arg1, %c0_i32_0 : i32, i32, i32, i32
  }
  func.func @transform_9(%arg0: i32, %arg1: i32) -> (i32, i32, i32, i32) {
    %c0_i32 = arith.constant 0 : i32
    %c0_i32_0 = arith.constant 0 : i32
    %c0_i32_1 = arith.constant 0 : i32
    return %arg0, %c0_i32, %arg1, %c0_i32_0 : i32, i32, i32, i32
  }
}

</mosaic_0001>

<llo_original>
// kernel: tpu_custom_call.1
$region0: #{tpu_custom_call.1}
  #allocation0 [shape = 'u32[]', space=smem, size = 0x4, offset = 0x4, fixed_abs, tag = 'smem constant byte address 0x4 - core index']
  #allocation1 [shape = 'u32[144,128]{1,0:T(1,128)}', space=vmem, size = 0x12000, scoped, tag = 'internal scratch']
  %s0 = inlined_call_operand.hbm [shape: f32[2,256,256], index: 0, kind: input, shape index: {}]
  %s1 = inlined_call_operand.hbm [shape: bf16[256,256], index: 1, kind: input, shape index: {}]
  %s2 = inlined_call_operand.vmem [shape: f32[1,256], index: 2, kind: input, shape index: {}]
  %s3 = inlined_call_operand.hbm [shape: bf16[256,256], index: 3, kind: input, shape index: {}]
  %s4 = inlined_call_operand.vmem [shape: f32[1,256], index: 4, kind: input, shape index: {}]
  %s5 = inlined_call_operand.hbm [shape: bf16[256,256], index: 5, kind: input, shape index: {}]
  %s6 = inlined_call_operand.vmem [shape: f32[1,256], index: 6, kind: input, shape index: {}]
  %s7 = inlined_call_operand.vmem [shape: bf16[2,4,256,64], index: 7, kind: output, shape index: {0}]
  %s8 = inlined_call_operand.vmem [shape: bf16[2,4,256,64], index: 8, kind: output, shape index: {1}]
  %s9 = inlined_call_operand.vmem [shape: bf16[2,4,256,64], index: 9, kind: output, shape index: {2}]
  %10 = xla_tuple %s7, %s8, %s9
  %s11 = sld [smem:[#allocation0]]
  $region93: #{tpu_custom_call.1} parent=0
    _
  %s13 = ssub.s32 1, %s11
  %s14 = scalar_select 0, %s13, %s11
  $region1: #{tpu_custom_call.1} parent=0
    #allocation2 [shape = 'u8[524288]{0}', space=vmem, size = 0x80000, scoped, tag = 'input window, operand 0']
    #allocation3 [shape = 's32[2]{0}', space=sflag, size = 0x8, scoped, tag = 'scoped memory for tpu_custom_call.1']
    #allocation4 [shape = 'u8[131072]{0}', space=vmem, size = 0x20000, scoped, tag = 'input window, operand 1, single buffered']
    #allocation5 [shape = 's32[1]{0}', space=sflag, size = 0x4, scoped, tag = 'scoped memory for tpu_custom_call.1']
    #allocation6 [shape = 'u8[131072]{0}', space=vmem, size = 0x20000, scoped, tag = 'input window, operand 3, single buffered']
    #allocation7 [shape = 'u8[131072]{0}', space=vmem, size = 0x20000, scoped, tag = 'input window, operand 5, single buffered']
    #allocation8 [shape = 's32[1]{0}', space=sflag, size = 0x4, scoped, tag = 'scoped memory for tpu_custom_call.1']
    %15 = vsyncpa [#allocation3], 0
    %s16 = scalar_lea.sflag [#allocation3], 1
    %17 = vsyncpa %s16, 0
    %18 = vsyncpa [#allocation5], 0
    %19 = vsyncpa [#allocation8], 0
    loop: start=0, step=1, limit=4
    $region2: #{tpu_custom_call.1} parent=1 // loop_pre_header
      _
    $region3: #{tpu_custom_call.1} parent=1 // loop_header
      %s21 = sphi 0, %s25
      %p22 = scmp.ge.s32.totalorder %s21, 4
      %s28 = sphi 0, %s40
      %s29 = sphi 0, %s36
      %s30 = sphi 0, %s28
      %s31 = sphi 0, %s29
      %s32 = sphi 0, %s30
      %s33 = sphi 0, %s31
      %s45 = sphi 0, %s47
      %s48 = sphi 0, %s45
      %s49 = sphi 0, %s48
      %s65 = sphi 0, %s49
      %s69 = sphi 0, %s69
      %s71 = sphi 0, %s69
      %s72 = sphi 0, %s71
      %s86 = sphi 0, %s72
      %s90 = sphi 0, %s90
      %s92 = sphi 0, %s90
      %s93 = sphi 0, %s92
      %s107 = sphi 0, %s93
      %s111 = sphi 0, %s111
      %s113 = sphi 0, %s111
      %s114 = sphi 0, %s113
      %s128 = sphi 0, %s114
      %s132 = sphi 0, %s132
      %s134 = sphi 0, %s132
      %s135 = sphi 0, %s134
      %s149 = sphi 0, %s135
      %s153 = sphi 0, %s153
      %s155 = sphi 0, %s153
      %s156 = sphi 0, %s155
      %s170 = sphi 0, %s156
      %s174 = sphi 0, %s174
      %s176 = sphi 0, %s174
      %s177 = sphi 0, %s176
      %s191 = sphi 0, %s177
      %s199 = sphi 0, %s201
      %s202 = sphi 0, %s199
      %s203 = sphi 0, %s202
      %s219 = sphi 0, %s203
      %s227 = sphi 0, %s229
      %s230 = sphi 0, %s227
      %s231 = sphi 0, %s230
      %s247 = sphi 0, %s231
      %s255 = sphi 0, %s257
      %s258 = sphi 0, %s255
      %s259 = sphi 0, %s258
      %s275 = sphi 0, %s259
    $region4: #{tpu_custom_call.1} parent=1 // loop_header_branch
      %24 = sbr.rel (%p22) target = $region8
    $region5: #{tpu_custom_call.1} parent=1 // loop_body
      %s26 = ssub.s32 %s21, 1
      %s27 = ssub.s32 %s21, 2
      %s34 = sadd.s32 1, %s29
      %p35 = scmp.ge.s32.totalorder %s34, 1
      %s36 = scalar_select %p35, 0, %s34
      %s37 = sadd.s32 1, %s28
      %s38 = scalar_select %p35, %s37, %s28
      %p39 = scmp.ge.s32.totalorder %s38, 2
      %s40 = scalar_select %p39, 0, %s38
      %s41 = ssub.s32 %s28, %s40
      %s42 = ssub.s32 %s29, %s36
      %s43 = sor.u32 %s41, %s42
      %p44 = scmp.eq.s32.totalorder %s43, 0
      %s46 = sadd.s32 %s45, 1
      %s47 = scalar_select %p44, %s45, %s46
      %p50 = pneg %p44
      %p51 = scmp.eq.s32.totalorder %s21, 1
      %p52 = por %p50, %p51
      %p53 = scmp.ne.s32.totalorder %s45, %s48
      %p54 = scmp.eq.s32.totalorder %s21, 0
      %p55 = por %p53, %p54
      %p56 = scmp.ne.s32.totalorder %s45, %s48
      %p57 = scmp.eq.s32.totalorder %s26, 1
      %p58 = por %p56, %p57
      %p59 = scmp.ne.s32.totalorder %s48, %s49
      %p60 = scmp.eq.s32.totalorder %s26, 0
      %p61 = por %p59, %p60
      %p62 = scmp.ne.s32.totalorder %s48, %s49
      %p63 = scmp.eq.s32.totalorder %s27, 1
      %p64 = por %p62, %p63
      %p66 = scmp.ne.s32.totalorder %s49, %s65
      %p67 = scmp.eq.s32.totalorder %s27, 0
      %p68 = por %p66, %p67
      %s70 = sadd.s32 %s69, 1
      %p73 = scmp.eq.s32.totalorder %s21, 1
      %p74 = scmp.ne.s32.totalorder %s69, %s71
      %p75 = scmp.eq.s32.totalorder %s21, 0
      %p76 = por %p74, %p75
      %p77 = scmp.ne.s32.totalorder %s69, %s71
      %p78 = scmp.eq.s32.totalorder %s26, 1
      %p79 = por %p77, %p78
      %p80 = scmp.ne.s32.totalorder %s71, %s72
      %p81 = scmp.eq.s32.totalorder %s26, 0
      %p82 = por %p80, %p81
      %p83 = scmp.ne.s32.totalorder %s71, %s72
      %p84 = scmp.eq.s32.totalorder %s27, 1
      %p85 = por %p83, %p84
      %p87 = scmp.ne.s32.totalorder %s72, %s86
      %p88 = scmp.eq.s32.totalorder %s27, 0
      %p89 = por %p87, %p88
      %s91 = sadd.s32 %s90, 1
      %p94 = scmp.eq.s32.totalorder %s21, 1
      %p95 = scmp.ne.s32.totalorder %s90, %s92
      %p96 = scmp.eq.s32.totalorder %s21, 0
      %p97 = por %p95, %p96
      %p98 = scmp.ne.s32.totalorder %s90, %s92
      %p99 = scmp.eq.s32.totalorder %s26, 1
      %p100 = por %p98, %p99
      %p101 = scmp.ne.s32.totalorder %s92, %s93
      %p102 = scmp.eq.s32.totalorder %s26, 0
      %p103 = por %p101, %p102
      %p104 = scmp.ne.s32.totalorder %s92, %s93
      %p105 = scmp.eq.s32.totalorder %s27, 1
      %p106 = por %p104, %p105
      %p108 = scmp.ne.s32.totalorder %s93, %s107
      %p109 = scmp.eq.s32.totalorder %s27, 0
      %p110 = por %p108, %p109
      %s112 = sadd.s32 %s111, 1
      %p115 = scmp.eq.s32.totalorder %s21, 1
      %p116 = scmp.ne.s32.totalorder %s111, %s113
      %p117 = scmp.eq.s32.totalorder %s21, 0
      %p118 = por %p116, %p117
      %p119 = scmp.ne.s32.totalorder %s111, %s113
      %p120 = scmp.eq.s32.totalorder %s26, 1
      %p121 = por %p119, %p120
      %p122 = scmp.ne.s32.totalorder %s113, %s114
      %p123 = scmp.eq.s32.totalorder %s26, 0
      %p124 = por %p122, %p123
      %p125 = scmp.ne.s32.totalorder %s113, %s114
      %p126 = scmp.eq.s32.totalorder %s27, 1
      %p127 = por %p125, %p126
      %p129 = scmp.ne.s32.totalorder %s114, %s128
      %p130 = scmp.eq.s32.totalorder %s27, 0
      %p131 = por %p129, %p130
      %s133 = sadd.s32 %s132, 1
      %p136 = scmp.eq.s32.totalorder %s21, 1
      %p137 = scmp.ne.s32.totalorder %s132, %s134
      %p138 = scmp.eq.s32.totalorder %s21, 0
      %p139 = por %p137, %p138
      %p140 = scmp.ne.s32.totalorder %s132, %s134
      %p141 = scmp.eq.s32.totalorder %s26, 1
      %p142 = por %p140, %p141
      %p143 = scmp.ne.s32.totalorder %s134, %s135
      %p144 = scmp.eq.s32.totalorder %s26, 0
      %p145 = por %p143, %p144
      %p146 = scmp.ne.s32.totalorder %s134, %s135
      %p147 = scmp.eq.s32.totalorder %s27, 1
      %p148 = por %p146, %p147
      %p150 = scmp.ne.s32.totalorder %s135, %s149
      %p151 = scmp.eq.s32.totalorder %s27, 0
      %p152 = por %p150, %p151
      %s154 = sadd.s32 %s153, 1
      %p157 = scmp.eq.s32.totalorder %s21, 1
      %p158 = scmp.ne.s32.totalorder %s153, %s155
      %p159 = scmp.eq.s32.totalorder %s21, 0
      %p160 = por %p158, %p159
      %p161 = scmp.ne.s32.totalorder %s153, %s155
      %p162 = scmp.eq.s32.totalorder %s26, 1
      %p163 = por %p161, %p162
      %p164 = scmp.ne.s32.totalorder %s155, %s156
      %p165 = scmp.eq.s32.totalorder %s26, 0
      %p166 = por %p164, %p165
      %p167 = scmp.ne.s32.totalorder %s155, %s156
      %p168 = scmp.eq.s32.totalorder %s27, 1
      %p169 = por %p167, %p168
      %p171 = scmp.ne.s32.totalorder %s156, %s170
      %p172 = scmp.eq.s32.totalorder %s27, 0
      %p173 = por %p171, %p172
      %s175 = sadd.s32 %s174, 1
      %p178 = scmp.eq.s32.totalorder %s21, 1
      %p179 = scmp.ne.s32.totalorder %s174, %s176
      %p180 = scmp.eq.s32.totalorder %s21, 0
      %p181 = por %p179, %p180
      %p182 = scmp.ne.s32.totalorder %s174, %s176
      %p183 = scmp.eq.s32.totalorder %s26, 1
      %p184 = por %p182, %p183
      %p185 = scmp.ne.s32.totalorder %s176, %s177
      %p186 = scmp.eq.s32.totalorder %s26, 0
      %p187 = por %p185, %p186
      %p188 = scmp.ne.s32.totalorder %s176, %s177
      %p189 = scmp.eq.s32.totalorder %s27, 1
      %p190 = por %p188, %p189
      %p192 = scmp.ne.s32.totalorder %s177, %s191
      %p193 = scmp.eq.s32.totalorder %s27, 0
      %p194 = por %p192, %p193
      %s195 = ssub.s32 %s28, %s40
      %s196 = ssub.s32 %s29, %s36
      %s197 = sor.u32 %s195, %s196
      %p198 = scmp.eq.s32.totalorder %s197, 0
      %s200 = sadd.s32 %s199, 1
      %s201 = scalar_select %p198, %s199, %s200
      %p204 = pneg %p198
      %p205 = scmp.eq.s32.totalorder %s21, 1
      %p206 = por %p204, %p205
      %p207 = scmp.ne.s32.totalorder %s199, %s202
      %p208 = scmp.eq.s32.totalorder %s21, 0
      %p209 = por %p207, %p208
      %p210 = scmp.ne.s32.totalorder %s199, %s202
      %p211 = scmp.eq.s32.totalorder %s26, 1
      %p212 = por %p210, %p211
      %p213 = scmp.ne.s32.totalorder %s202, %s203
      %p214 = scmp.eq.s32.totalorder %s26, 0
      %p215 = por %p213, %p214
      %p216 = scmp.ne.s32.totalorder %s202, %s203
      %p217 = scmp.eq.s32.totalorder %s27, 1
      %p218 = por %p216, %p217
      %p220 = scmp.ne.s32.totalorder %s203, %s219
      %p221 = scmp.eq.s32.totalorder %s27, 0
      %p222 = por %p220, %p221
      %s223 = ssub.s32 %s28, %s40
      %s224 = ssub.s32 %s29, %s36
      %s225 = sor.u32 %s223, %s224
      %p226 = scmp.eq.s32.totalorder %s225, 0
      %s228 = sadd.s32 %s227, 1
      %s229 = scalar_select %p226, %s227, %s228
      %p232 = pneg %p226
      %p233 = scmp.eq.s32.totalorder %s21, 1
      %p234 = por %p232, %p233
      %p235 = scmp.ne.s32.totalorder %s227, %s230
      %p236 = scmp.eq.s32.totalorder %s21, 0
      %p237 = por %p235, %p236
      %p238 = scmp.ne.s32.totalorder %s227, %s230
      %p239 = scmp.eq.s32.totalorder %s26, 1
      %p240 = por %p238, %p239
      %p241 = scmp.ne.s32.totalorder %s230, %s231
      %p242 = scmp.eq.s32.totalorder %s26, 0
      %p243 = por %p241, %p242
      %p244 = scmp.ne.s32.totalorder %s230, %s231
      %p245 = scmp.eq.s32.totalorder %s27, 1
      %p246 = por %p244, %p245
      %p248 = scmp.ne.s32.totalorder %s231, %s247
      %p249 = scmp.eq.s32.totalorder %s27, 0
      %p250 = por %p248, %p249
      %s251 = ssub.s32 %s28, %s40
      %s252 = ssub.s32 %s29, %s36
      %s253 = sor.u32 %s251, %s252
      %p254 = scmp.eq.s32.totalorder %s253, 0
      %s256 = sadd.s32 %s255, 1
      %s257 = scalar_select %p254, %s255, %s256
      %p260 = pneg %p254
      %p261 = scmp.eq.s32.totalorder %s21, 1
      %p262 = por %p260, %p261
      %p263 = scmp.ne.s32.totalorder %s255, %s258
      %p264 = scmp.eq.s32.totalorder %s21, 0
      %p265 = por %p263, %p264
      %p266 = scmp.ne.s32.totalorder %s255, %s258
      %p267 = scmp.eq.s32.totalorder %s26, 1
      %p268 = por %p266, %p267
      %p269 = scmp.ne.s32.totalorder %s258, %s259
      %p270 = scmp.eq.s32.totalorder %s26, 0
      %p271 = por %p269, %p270
      %p272 = scmp.ne.s32.totalorder %s258, %s259
      %p273 = scmp.eq.s32.totalorder %s27, 1
      %p274 = por %p272, %p273
      %p276 = scmp.ne.s32.totalorder %s259, %s275
      %p277 = scmp.eq.s32.totalorder %s27, 0
      %p278 = por %p276, %p277
      %p279 = scmp.le.s32.totalorder 1, %s21
      %p280 = scmp.lt.s32.totalorder %s21, 3
      %p281 = pnand %p279, %p280
      %p282 = pneg %p281
      // Predicated region
      $region9: #{tpu_custom_call.1} parent=5 // pred_check
        _
      $region10: #{tpu_custom_call.1} parent=5 // pred_check_branch
        %284 = sbr.rel (%p281) target = $region12
      $region11: #{tpu_custom_call.1} parent=5 // pred_region
        %s285 = ssub.s32 %s21, 1
        // Predicated region
        $region13: #{tpu_custom_call.1} parent=11 // pred_check
          %p286 = pneg %p82
        $region14: #{tpu_custom_call.1} parent=11 // pred_check_branch
          %288 = sbr.rel (%p286) target = $region16
        $region15: #{tpu_custom_call.1} parent=11 // pred_region
          %s290 = ssub.s32 4096, 4096
          %291 = vsyncadd [#allocation5], %s290
          %s292 = sshll.u32 [#allocation4], 4
          %s293 = int_to_ptr.vmem [resolvable:$true] %s292
          %298 = dma.hbm_to_vmem [thread:$0]  %s1, 4096, %s293, [#allocation5], 128, 128, 8
        $region16: #{tpu_custom_call.1} parent=11 // pred_fallthru
          _
        // Predicated region
        $region17: #{tpu_custom_call.1} parent=11 // pred_check
          %p299 = pneg %p103
        $region18: #{tpu_custom_call.1} parent=11 // pred_check_branch
          %301 = sbr.rel (%p299) target = $region20
        $region19: #{tpu_custom_call.1} parent=11 // pred_region
          _
        $region20: #{tpu_custom_call.1} parent=11 // pred_fallthru
          _
        // Predicated region
        $region21: #{tpu_custom_call.1} parent=11 // pred_check
          %p302 = pneg %p124
        $region22: #{tpu_custom_call.1} parent=11 // pred_check_branch
          %304 = sbr.rel (%p302) target = $region24
        $region23: #{tpu_custom_call.1} parent=11 // pred_region
          %s306 = ssub.s32 4096, 4096
          %307 = vsyncadd [#allocation5], %s306
          %s308 = sshll.u32 [#allocation6], 4
          %s309 = int_to_ptr.vmem [resolvable:$true] %s308
          %314 = dma.hbm_to_vmem [thread:$0]  %s3, 4096, %s309, [#allocation5], 128, 128, 8
        $region24: #{tpu_custom_call.1} parent=11 // pred_fallthru
          _
        // Predicated region
        $region25: #{tpu_custom_call.1} parent=11 // pred_check
          %p315 = pneg %p145
        $region26: #{tpu_custom_call.1} parent=11 // pred_check_branch
          %317 = sbr.rel (%p315) target = $region28
        $region27: #{tpu_custom_call.1} parent=11 // pred_region
          _
        $region28: #{tpu_custom_call.1} parent=11 // pred_fallthru
          _
        // Predicated region
        $region29: #{tpu_custom_call.1} parent=11 // pred_check
          %p318 = pneg %p166
        $region30: #{tpu_custom_call.1} parent=11 // pred_check_branch
          %320 = sbr.rel (%p318) target = $region32
        $region31: #{tpu_custom_call.1} parent=11 // pred_region
          %s322 = ssub.s32 4096, 4096
          %323 = vsyncadd [#allocation8], %s322
          %s324 = sshll.u32 [#allocation7], 4
          %s325 = int_to_ptr.vmem [resolvable:$true] %s324
          %330 = dma.hbm_to_vmem [thread:$0]  %s5, 4096, %s325, [#allocation8], 128, 128, 8
        $region32: #{tpu_custom_call.1} parent=11 // pred_fallthru
          _
        // Predicated region
        $region33: #{tpu_custom_call.1} parent=11 // pred_check
          %p331 = pneg %p187
        $region34: #{tpu_custom_call.1} parent=11 // pred_check_branch
          %333 = sbr.rel (%p331) target = $region36
        $region35: #{tpu_custom_call.1} parent=11 // pred_region
          _
        $region36: #{tpu_custom_call.1} parent=11 // pred_fallthru
          _
      $region12: #{tpu_custom_call.1} parent=5 // pred_fallthru
        _
      %p334 = scmp.lt.s32.totalorder %s21, 2
      // Predicated region
      $region37: #{tpu_custom_call.1} parent=5 // pred_check
        %p335 = pneg %p334
      $region38: #{tpu_custom_call.1} parent=5 // pred_check_branch
        %337 = sbr.rel (%p335) target = $region40
      $region39: #{tpu_custom_call.1} parent=5 // pred_region
        // Predicated region
        $region41: #{tpu_custom_call.1} parent=39 // pred_check
          %p338 = pneg %p55
        $region42: #{tpu_custom_call.1} parent=39 // pred_check_branch
          %340 = sbr.rel (%p338) target = $region44
        $region43: #{tpu_custom_call.1} parent=39 // pred_region
          %s341 = sand.u32 %s45, 1
          %s342 = scalar_lea.sflag [#allocation3], %s341
          %s343 = sand.u32 %s45, 1
          %s344 = smul.addr %s343, 512
          %s345 = scalar_lea.vmem [#allocation2], %s344
          %s346 = smul.u32 32, %s29
          %s348 = ssub.s32 8192, 8192
          %349 = vsyncadd %s342, %s348
          %s350 = smul.addr %s346, 2
          %s351 = smul.addr %s28, 64
          %s352 = sadd.s32 %s350, %s351
          %s353 = smul.addr %s352, 128
          %s354 = scalar_lea.hbm %s0, %s353
          %s355 = sshll.u32 %s345, 4
          %s356 = int_to_ptr.vmem [resolvable:$true] %s355
          %361 = dma.hbm_to_vmem [thread:$0]  %s354, 8192, %s356, %s342, 256, 256, 16
        $region44: #{tpu_custom_call.1} parent=39 // pred_fallthru
          _
      $region40: #{tpu_custom_call.1} parent=5 // pred_fallthru
        _
      %p362 = scmp.le.s32.totalorder 1, %s21
      %p363 = scmp.lt.s32.totalorder %s21, 3
      %p364 = pnand %p362, %p363
      %p365 = pneg %p364
      // Predicated region
      $region45: #{tpu_custom_call.1} parent=5 // pred_check
        _
      $region46: #{tpu_custom_call.1} parent=5 // pred_check_branch
        %367 = sbr.rel (%p364) target = $region48
      $region47: #{tpu_custom_call.1} parent=5 // pred_region
        %s368 = ssub.s32 %s21, 1
        %s369 = sand.u32 %s48, 1
        %s370 = scalar_lea.sflag [#allocation3], %s369
        %s371 = sand.u32 %s48, 1
        %s372 = smul.addr %s371, 512
        %s373 = scalar_lea.vmem [#allocation2], %s372
        // Predicated region
        $region49: #{tpu_custom_call.1} parent=47 // pred_check
          %p374 = pneg %p61
        $region50: #{tpu_custom_call.1} parent=47 // pred_check_branch
          %376 = sbr.rel (%p374) target = $region52
        $region51: #{tpu_custom_call.1} parent=47 // pred_region
          %377 = dma.done %s370, 8192
        $region52: #{tpu_custom_call.1} parent=47 // pred_fallthru
          _
        // Predicated region
        $region53: #{tpu_custom_call.1} parent=47 // pred_check
          %p378 = pneg %p82
        $region54: #{tpu_custom_call.1} parent=47 // pred_check_branch
          %380 = sbr.rel (%p378) target = $region56
        $region55: #{tpu_custom_call.1} parent=47 // pred_region
          %381 = dma.done [#allocation5], 4096
        $region56: #{tpu_custom_call.1} parent=47 // pred_fallthru
          _
        // Predicated region
        $region57: #{tpu_custom_call.1} parent=47 // pred_check
          %p382 = pneg %p124
        $region58: #{tpu_custom_call.1} parent=47 // pred_check_branch
          %384 = sbr.rel (%p382) target = $region60
        $region59: #{tpu_custom_call.1} parent=47 // pred_region
          %385 = dma.done [#allocation5], 4096
        $region60: #{tpu_custom_call.1} parent=47 // pred_fallthru
          _
        // Predicated region
        $region61: #{tpu_custom_call.1} parent=47 // pred_check
          %p386 = pneg %p166
        $region62: #{tpu_custom_call.1} parent=47 // pred_check_branch
          %388 = sbr.rel (%p386) target = $region64
        $region63: #{tpu_custom_call.1} parent=47 // pred_region
          %389 = dma.done [#allocation8], 4096
        $region64: #{tpu_custom_call.1} parent=47 // pred_fallthru
          _
        %s390 = sand.u32 %s48, 1
        %s391 = scalar_lea.sflag [#allocation3], %s390
        %s392 = sand.u32 %s48, 1
        %s393 = smul.addr %s392, 512
        %s394 = scalar_lea.vmem [#allocation2], %s393
        %p395 = pneg %p61
        %p396 = pneg %p58
        %p397 = pneg %p82
        %p398 = pneg %p79
        %p399 = pneg %p103
        %p400 = pneg %p100
        %p401 = pneg %p124
        %p402 = pneg %p121
        %p403 = pneg %p145
        %p404 = pneg %p142
        %p405 = pneg %p166
        %p406 = pneg %p163
        %p407 = pneg %p187
        %p408 = pneg %p184
        %p409 = pneg %p215
        %p410 = pneg %p212
        %s411 = smul.u32 32, %s31
        %p412 = scmp.lt.s32.totalorder %s30, 1
        %s413 = scalar_select %p412, %s30, 1
        %p414 = scmp.lt.s32.totalorder %s411, 31
        %s415 = scalar_select %p414, %s411, 31
        %s416 = smul.addr %s413, 128
        %s417 = sadd.s32 %s415, %s416
        %s418 = smul.addr %s417, 4
        %s419 = scalar_lea.vmem %s7, %s418
        %p420 = pneg %p243
        %p421 = pneg %p240
        %s422 = smul.u32 32, %s31
        %p423 = scmp.lt.s32.totalorder %s30, 1
        %s424 = scalar_select %p423, %s30, 1
        %p425 = scmp.lt.s32.totalorder %s422, 31
        %s426 = scalar_select %p425, %s422, 31
        %s427 = smul.addr %s424, 128
        %s428 = sadd.s32 %s426, %s427
        %s429 = smul.addr %s428, 4
        %s430 = scalar_lea.vmem %s8, %s429
        %p431 = pneg %p271
        %p432 = pneg %p268
        %s433 = smul.u32 32, %s31
        %p434 = scmp.lt.s32.totalorder %s30, 1
        %s435 = scalar_select %p434, %s30, 1
        %p436 = scmp.lt.s32.totalorder %s433, 31
        %s437 = scalar_select %p436, %s433, 31
        %s438 = smul.addr %s435, 128
        %s439 = sadd.s32 %s437, %s438
        %s440 = smul.addr %s439, 4
        %s441 = scalar_lea.vmem %s9, %s440
        %s442 = smul.u32 32, %s31
        %s443 = smul.u32 32, %s31
        %p444 = scmp.lt.s32.totalorder %s30, 1
        %s445 = scalar_select %p444, %s30, 1
        %p446 = scmp.lt.s32.totalorder %s443, 31
        %s447 = scalar_select %p446, %s443, 31
        %s448 = smul.addr %s445, 128
        %s449 = sadd.s32 %s447, %s448
        %s450 = smul.addr %s449, 4
        %s451 = scalar_lea.vmem %s7, %s450
        %s452 = smul.u32 32, %s31
        %s453 = smul.u32 32, %s31
        %p454 = scmp.lt.s32.totalorder %s30, 1
        %s455 = scalar_select %p454, %s30, 1
        %p456 = scmp.lt.s32.totalorder %s453, 31
        %s457 = scalar_select %p456, %s453, 31
        %s458 = smul.addr %s455, 128
        %s459 = sadd.s32 %s457, %s458
        %s460 = smul.addr %s459, 4
        %s461 = scalar_lea.vmem %s8, %s460
        %s462 = smul.u32 32, %s31
        %s463 = smul.u32 32, %s31
        %p464 = scmp.lt.s32.totalorder %s30, 1
        %s465 = scalar_select %p464, %s30, 1
        %p466 = scmp.lt.s32.totalorder %s463, 31
        %s467 = scalar_select %p466, %s463, 31
        %s468 = smul.addr %s465, 128
        %s469 = sadd.s32 %s467, %s468
        %s470 = smul.addr %s469, 4
        %s471 = scalar_lea.vmem %s9, %s470
        %s472 = smul.u32 32, %s31
        %v473 = vld [vmem:[%s373] sm:$0xff]
        %v474 = vld [vmem:[%s373 + $0x8] sm:$0xff]
        %v475 = vld [vmem:[%s373 + $0x10] sm:$0xff]
        %v476 = vld [vmem:[%s373 + $0x18] sm:$0xff]
        %v477 = vld [vmem:[%s373 + $0x20] sm:$0xff]
        %v478 = vld [vmem:[%s373 + $0x28] sm:$0xff]
        %v479 = vld [vmem:[%s373 + $0x30] sm:$0xff]
        %v480 = vld [vmem:[%s373 + $0x38] sm:$0xff]
        %v481 = vld [vmem:[%s373 + $0x40] sm:$0xff]
        %v482 = vld [vmem:[%s373 + $0x48] sm:$0xff]
        %v483 = vld [vmem:[%s373 + $0x50] sm:$0xff]
        %v484 = vld [vmem:[%s373 + $0x58] sm:$0xff]
        %v485 = vld [vmem:[%s373 + $0x60] sm:$0xff]
        %v486 = vld [vmem:[%s373 + $0x68] sm:$0xff]
        %v487 = vld [vmem:[%s373 + $0x70] sm:$0xff]
        %v488 = vld [vmem:[%s373 + $0x78] sm:$0xff]
        %v489 = vld [vmem:[%s373 + $0x80] sm:$0xff]
        %v490 = vld [vmem:[%s373 + $0x88] sm:$0xff]
        %v491 = vld [vmem:[%s373 + $0x90] sm:$0xff]
        %v492 = vld [vmem:[%s373 + $0x98] sm:$0xff]
        %v493 = vld [vmem:[%s373 + $0xa0] sm:$0xff]
        %v494 = vld [vmem:[%s373 + $0xa8] sm:$0xff]
        %v495 = vld [vmem:[%s373 + $0xb0] sm:$0xff]
        %v496 = vld [vmem:[%s373 + $0xb8] sm:$0xff]
        %v497 = vld [vmem:[%s373 + $0xc0] sm:$0xff]
        %v498 = vld [vmem:[%s373 + $0xc8] sm:$0xff]
        %v499 = vld [vmem:[%s373 + $0xd0] sm:$0xff]
        %v500 = vld [vmem:[%s373 + $0xd8] sm:$0xff]
        %v501 = vld [vmem:[%s373 + $0xe0] sm:$0xff]
        %v502 = vld [vmem:[%s373 + $0xe8] sm:$0xff]
        %v503 = vld [vmem:[%s373 + $0xf0] sm:$0xff]
        %v504 = vld [vmem:[%s373 + $0xf8] sm:$0xff]
        %v505 = vld [vmem:[%s373 + $0x100] sm:$0xff]
        %v506 = vld [vmem:[%s373 + $0x108] sm:$0xff]
        %v507 = vld [vmem:[%s373 + $0x110] sm:$0xff]
        %v508 = vld [vmem:[%s373 + $0x118] sm:$0xff]
        %v509 = vld [vmem:[%s373 + $0x120] sm:$0xff]
        %v510 = vld [vmem:[%s373 + $0x128] sm:$0xff]
        %v511 = vld [vmem:[%s373 + $0x130] sm:$0xff]
        %v512 = vld [vmem:[%s373 + $0x138] sm:$0xff]
        %v513 = vld [vmem:[%s373 + $0x140] sm:$0xff]
        %v514 = vld [vmem:[%s373 + $0x148] sm:$0xff]
        %v515 = vld [vmem:[%s373 + $0x150] sm:$0xff]
        %v516 = vld [vmem:[%s373 + $0x158] sm:$0xff]
        %v517 = vld [vmem:[%s373 + $0x160] sm:$0xff]
        %v518 = vld [vmem:[%s373 + $0x168] sm:$0xff]
        %v519 = vld [vmem:[%s373 + $0x170] sm:$0xff]
        %v520 = vld [vmem:[%s373 + $0x178] sm:$0xff]
        %v521 = vld [vmem:[%s373 + $0x180] sm:$0xff]
        %v522 = vld [vmem:[%s373 + $0x188] sm:$0xff]
        %v523 = vld [vmem:[%s373 + $0x190] sm:$0xff]
        %v524 = vld [vmem:[%s373 + $0x198] sm:$0xff]
        %v525 = vld [vmem:[%s373 + $0x1a0] sm:$0xff]
        %v526 = vld [vmem:[%s373 + $0x1a8] sm:$0xff]
        %v527 = vld [vmem:[%s373 + $0x1b0] sm:$0xff]
        %v528 = vld [vmem:[%s373 + $0x1b8] sm:$0xff]
        %v529 = vld [vmem:[%s373 + $0x1c0] sm:$0xff]
        %v530 = vld [vmem:[%s373 + $0x1c8] sm:$0xff]
        %v531 = vld [vmem:[%s373 + $0x1d0] sm:$0xff]
        %v532 = vld [vmem:[%s373 + $0x1d8] sm:$0xff]
        %v533 = vld [vmem:[%s373 + $0x1e0] sm:$0xff]
        %v534 = vld [vmem:[%s373 + $0x1e8] sm:$0xff]
        %v535 = vld [vmem:[%s373 + $0x1f0] sm:$0xff]
        %v536 = vld [vmem:[%s373 + $0x1f8] sm:$0xff]
        %v537 = vpack.c.bf16 %v475, %v473
        %v538 = vpack.c.bf16 %v476, %v474
        %v539 = vpack.c.bf16 %v479, %v477
        %v540 = vpack.c.bf16 %v480, %v478
        %v541 = vpack.c.bf16 %v483, %v481
        %v542 = vpack.c.bf16 %v484, %v482
        %v543 = vpack.c.bf16 %v487, %v485
        %v544 = vpack.c.bf16 %v488, %v486
        %v545 = vpack.c.bf16 %v491, %v489
        %v546 = vpack.c.bf16 %v492, %v490
        %v547 = vpack.c.bf16 %v495, %v493
        %v548 = vpack.c.bf16 %v496, %v494
        %v549 = vpack.c.bf16 %v499, %v497
        %v550 = vpack.c.bf16 %v500, %v498
        %v551 = vpack.c.bf16 %v503, %v501
        %v552 = vpack.c.bf16 %v504, %v502
        %v553 = vpack.c.bf16 %v507, %v505
        %v554 = vpack.c.bf16 %v508, %v506
        %v555 = vpack.c.bf16 %v511, %v509
        %v556 = vpack.c.bf16 %v512, %v510
        %v557 = vpack.c.bf16 %v515, %v513
        %v558 = vpack.c.bf16 %v516, %v514
        %v559 = vpack.c.bf16 %v519, %v517
        %v560 = vpack.c.bf16 %v520, %v518
        %v561 = vpack.c.bf16 %v523, %v521
        %v562 = vpack.c.bf16 %v524, %v522
        %v563 = vpack.c.bf16 %v527, %v525
        %v564 = vpack.c.bf16 %v528, %v526
        %v565 = vpack.c.bf16 %v531, %v529
        %v566 = vpack.c.bf16 %v532, %v530
        %v567 = vpack.c.bf16 %v535, %v533
        %v568 = vpack.c.bf16 %v536, %v534
        %v569 = vld [vmem:[#allocation4] sm:$0xff]
        %v570 = vld [vmem:[#allocation4 + $0x8] sm:$0xff]
        %v571 = vld [vmem:[#allocation4 + $0x10] sm:$0xff]
        %v572 = vld [vmem:[#allocation4 + $0x18] sm:$0xff]
        %v573 = vld [vmem:[#allocation4 + $0x20] sm:$0xff]
        %v574 = vld [vmem:[#allocation4 + $0x28] sm:$0xff]
        %v575 = vld [vmem:[#allocation4 + $0x30] sm:$0xff]
        %v576 = vld [vmem:[#allocation4 + $0x38] sm:$0xff]
        %v577 = vld [vmem:[#allocation4 + $0x40] sm:$0xff]
        %v578 = vld [vmem:[#allocation4 + $0x48] sm:$0xff]
        %v579 = vld [vmem:[#allocation4 + $0x50] sm:$0xff]
        %v580 = vld [vmem:[#allocation4 + $0x58] sm:$0xff]
        %v581 = vld [vmem:[#allocation4 + $0x60] sm:$0xff]
        %v582 = vld [vmem:[#allocation4 + $0x68] sm:$0xff]
        %v583 = vld [vmem:[#allocation4 + $0x70] sm:$0xff]
        %v584 = vld [vmem:[#allocation4 + $0x78] sm:$0xff]
        %v585 = vld [vmem:[#allocation4 + $0x80] sm:$0xff]
        %v586 = vld [vmem:[#allocation4 + $0x88] sm:$0xff]
        %v587 = vld [vmem:[#allocation4 + $0x90] sm:$0xff]
        %v588 = vld [vmem:[#allocation4 + $0x98] sm:$0xff]
        %v589 = vld [vmem:[#allocation4 + $0xa0] sm:$0xff]
        %v590 = vld [vmem:[#allocation4 + $0xa8] sm:$0xff]
        %v591 = vld [vmem:[#allocation4 + $0xb0] sm:$0xff]
        %v592 = vld [vmem:[#allocation4 + $0xb8] sm:$0xff]
        %v593 = vld [vmem:[#allocation4 + $0xc0] sm:$0xff]
        %v594 = vld [vmem:[#allocation4 + $0xc8] sm:$0xff]
        %v595 = vld [vmem:[#allocation4 + $0xd0] sm:$0xff]
        %v596 = vld [vmem:[#allocation4 + $0xd8] sm:$0xff]
        %v597 = vld [vmem:[#allocation4 + $0xe0] sm:$0xff]
        %v598 = vld [vmem:[#allocation4 + $0xe8] sm:$0xff]
        %v599 = vld [vmem:[#allocation4 + $0xf0] sm:$0xff]
        %v600 = vld [vmem:[#allocation4 + $0xf8] sm:$0xff]
        %v601 = vld [vmem:[%s2] sm:$0x3]
        %v603 = vlaneseq
        %v604 = vshrl.u32 %v603, 7
        %v605 = vsub.s32 0, %v604
        %v606 = vrot.slane %v601, %v605
        %v607 = vlaneseq
        %v608 = vshrl.u32 %v607, 7
        %v609 = vsub.s32 1, %v608
        %v610 = vrot.slane %v601, %v609
        %v645 = vunpack.c.l.b16 %v569
        %v646 = vunpack.c.h.b16 %v569
        %v647 = vunpack.c.l.b16 %v570
        %v648 = vunpack.c.h.b16 %v570
        %v649 = vunpack.c.l.b16 %v571
        %v650 = vunpack.c.h.b16 %v571
        %v651 = vunpack.c.l.b16 %v572
        %v652 = vunpack.c.h.b16 %v572
        %v653 = vunpack.c.l.b16 %v573
        %v654 = vunpack.c.h.b16 %v573
        %v655 = vunpack.c.l.b16 %v574
        %v656 = vunpack.c.h.b16 %v574
        %v657 = vunpack.c.l.b16 %v575
        %v658 = vunpack.c.h.b16 %v575
        %v659 = vunpack.c.l.b16 %v576
        %v660 = vunpack.c.h.b16 %v576
        %v661 = vunpack.c.l.b16 %v577
        %v662 = vunpack.c.h.b16 %v577
        %v663 = vunpack.c.l.b16 %v578
        %v664 = vunpack.c.h.b16 %v578
        %v665 = vunpack.c.l.b16 %v579
        %v666 = vunpack.c.h.b16 %v579
        %v667 = vunpack.c.l.b16 %v580
        %v668 = vunpack.c.h.b16 %v580
        %v669 = vunpack.c.l.b16 %v581
        %v670 = vunpack.c.h.b16 %v581
        %v671 = vunpack.c.l.b16 %v582
        %v672 = vunpack.c.h.b16 %v582
        %v673 = vunpack.c.l.b16 %v583
        %v674 = vunpack.c.h.b16 %v583
        %v675 = vunpack.c.l.b16 %v584
        %v676 = vunpack.c.h.b16 %v584
        %v677 = vunpack.c.l.b16 %v585
        %v678 = vunpack.c.h.b16 %v585
        %v679 = vunpack.c.l.b16 %v586
        %v680 = vunpack.c.h.b16 %v586
        %v681 = vunpack.c.l.b16 %v587
        %v682 = vunpack.c.h.b16 %v587
        %v683 = vunpack.c.l.b16 %v588
        %v684 = vunpack.c.h.b16 %v588
        %v685 = vunpack.c.l.b16 %v589
        %v686 = vunpack.c.h.b16 %v589
        %v687 = vunpack.c.l.b16 %v590
        %v688 = vunpack.c.h.b16 %v590
        %v689 = vunpack.c.l.b16 %v591
        %v690 = vunpack.c.h.b16 %v591
        %v691 = vunpack.c.l.b16 %v592
        %v692 = vunpack.c.h.b16 %v592
        %v693 = vunpack.c.l.b16 %v593
        %v694 = vunpack.c.h.b16 %v593
        %v695 = vunpack.c.l.b16 %v594
        %v696 = vunpack.c.h.b16 %v594
        %v697 = vunpack.c.l.b16 %v595
        %v698 = vunpack.c.h.b16 %v595
        %v699 = vunpack.c.l.b16 %v596
        %v700 = vunpack.c.h.b16 %v596
        %v701 = vunpack.c.l.b16 %v597
        %v702 = vunpack.c.h.b16 %v597
        %v703 = vunpack.c.l.b16 %v598
        %v704 = vunpack.c.h.b16 %v598
        %v705 = vunpack.c.l.b16 %v599
        %v706 = vunpack.c.h.b16 %v599
        %v707 = vunpack.c.l.b16 %v600
        %v708 = vunpack.c.h.b16 %v600
        %v709 = vpack.c.b16 %v647, %v645
        %v710 = vpack.c.b16 %v648, %v646
        %v711 = vpack.c.b16 %v651, %v649
        %v712 = vpack.c.b16 %v652, %v650
        %v713 = vpack.c.b16 %v655, %v653
        %v714 = vpack.c.b16 %v656, %v654
        %v715 = vpack.c.b16 %v659, %v657
        %v716 = vpack.c.b16 %v660, %v658
        %v717 = vpack.c.b16 %v663, %v661
        %v718 = vpack.c.b16 %v664, %v662
        %v719 = vpack.c.b16 %v667, %v665
        %v720 = vpack.c.b16 %v668, %v666
        %v721 = vpack.c.b16 %v671, %v669
        %v722 = vpack.c.b16 %v672, %v670
        %v723 = vpack.c.b16 %v675, %v673
        %v724 = vpack.c.b16 %v676, %v674
        %v725 = vpack.c.b16 %v679, %v677
        %v726 = vpack.c.b16 %v680, %v678
        %v727 = vpack.c.b16 %v683, %v681
        %v728 = vpack.c.b16 %v684, %v682
        %v729 = vpack.c.b16 %v687, %v685
        %v730 = vpack.c.b16 %v688, %v686
        %v731 = vpack.c.b16 %v691, %v689
        %v732 = vpack.c.b16 %v692, %v690
        %v733 = vpack.c.b16 %v695, %v693
        %v734 = vpack.c.b16 %v696, %v694
        %v735 = vpack.c.b16 %v699, %v697
        %v736 = vpack.c.b16 %v700, %v698
        %v737 = vpack.c.b16 %v703, %v701
        %v738 = vpack.c.b16 %v704, %v702
        %v739 = vpack.c.b16 %v707, %v705
        %v740 = vpack.c.b16 %v708, %v706
        %773 = vmatprep.subr.bf16.mxu0 %v710
        %774 = vmatpush1.bf16.msra.mxu0 %v709
        %775 = vmatprep.subr.bf16.mxu0 %v712
        %776 = vmatpush1.bf16.msra.mxu0 %v711
        %777 = vmatprep.subr.bf16.mxu0 %v714
        %778 = vmatpush1.bf16.msra.mxu0 %v713
        %779 = vmatprep.subr.bf16.mxu0 %v716
        %780 = vmatpush1.bf16.msra.mxu0 %v715
        %781 = vmatprep.subr.bf16.mxu0 %v718
        %782 = vmatpush1.bf16.msra.mxu0 %v717
        %783 = vmatprep.subr.bf16.mxu0 %v720
        %784 = vmatpush1.bf16.msra.mxu0 %v719
        %785 = vmatprep.subr.bf16.mxu0 %v722
        %786 = vmatpush1.bf16.msra.mxu0 %v721
        %787 = vmatprep.subr.bf16.mxu0 %v724
        %788 = vmatpush1.bf16.msra.mxu0 %v723
        %789 = vmatprep.subr.bf16.mxu0 %v726
        %790 = vmatpush1.bf16.msra.mxu0 %v725
        %791 = vmatprep.subr.bf16.mxu0 %v728
        %792 = vmatpush1.bf16.msra.mxu0 %v727
        %793 = vmatprep.subr.bf16.mxu0 %v730
        %794 = vmatpush1.bf16.msra.mxu0 %v729
        %795 = vmatprep.subr.bf16.mxu0 %v732
        %796 = vmatpush1.bf16.msra.mxu0 %v731
        %797 = vmatprep.subr.bf16.mxu0 %v734
        %798 = vmatpush1.bf16.msra.mxu0 %v733
        %799 = vmatprep.subr.bf16.mxu0 %v736
        %800 = vmatpush1.bf16.msra.mxu0 %v735
        %801 = vmatprep.subr.bf16.mxu0 %v738
        %802 = vmatpush1.bf16.msra.mxu0 %v737
        %803 = vmatprep.subr.bf16.mxu0 %v740
        %804 = vmatpush1.bf16.msra.mxu0 %v739
        %805 = vmatprep.mubr.bf16.mxu0 %v538
        %806 = vmatmul.mubr.bf16.gmra.mrb[0].mxu0 %v537
        %v807 = vpop.f32.mrb[0].mxu0
        %v808 = vadd.f32 %v606, %v807
        %v809 = vpop.f32.mrb[0].mxu0
        %v810 = vadd.f32 %v610, %v809
        %v811 = vpop.f32.mrb[0].mxu0
        %v812 = vadd.f32 %v606, %v811
        %v813 = vpop.f32.mrb[0].mxu0
        %v814 = vadd.f32 %v610, %v813
        %815 = vmatprep.mubr.bf16.mxu0 %v540
        %816 = vmatmul.mubr.bf16.gmra.mrb[0].mxu0 %v539
        %v817 = vpop.f32.mrb[0].mxu0
        %v818 = vadd.f32 %v606, %v817
        %v819 = vpop.f32.mrb[0].mxu0
        %v820 = vadd.f32 %v610, %v819
        %v821 = vpop.f32.mrb[0].mxu0
        %v822 = vadd.f32 %v606, %v821
        %v823 = vpop.f32.mrb[0].mxu0
        %v824 = vadd.f32 %v610, %v823
        %825 = vmatprep.mubr.bf16.mxu0 %v542
        %826 = vmatmul.mubr.bf16.gmra.mrb[0].mxu0 %v541
        %v827 = vpop.f32.mrb[0].mxu0
        %v828 = vadd.f32 %v606, %v827
        %v829 = vpop.f32.mrb[0].mxu0
        %v830 = vadd.f32 %v610, %v829
        %v831 = vpop.f32.mrb[0].mxu0
        %v832 = vadd.f32 %v606, %v831
        %v833 = vpop.f32.mrb[0].mxu0
        %v834 = vadd.f32 %v610, %v833
        %835 = vmatprep.mubr.bf16.mxu0 %v544
        %836 = vmatmul.mubr.bf16.gmra.mrb[0].mxu0 %v543
        %v837 = vpop.f32.mrb[0].mxu0
        %v838 = vadd.f32 %v606, %v837
        %v839 = vpop.f32.mrb[0].mxu0
        %v840 = vadd.f32 %v610, %v839
        %v841 = vpop.f32.mrb[0].mxu0
        %v842 = vadd.f32 %v606, %v841
        %v843 = vpop.f32.mrb[0].mxu0
        %v844 = vadd.f32 %v610, %v843
        %845 = vmatprep.mubr.bf16.mxu0 %v546
        %846 = vmatmul.mubr.bf16.gmra.mrb[0].mxu0 %v545
        %v847 = vpop.f32.mrb[0].mxu0
        %v848 = vadd.f32 %v606, %v847
        %v849 = vpop.f32.mrb[0].mxu0
        %v850 = vadd.f32 %v610, %v849
        %v851 = vpop.f32.mrb[0].mxu0
        %v852 = vadd.f32 %v606, %v851
        %v853 = vpop.f32.mrb[0].mxu0
        %v854 = vadd.f32 %v610, %v853
        %855 = vmatprep.mubr.bf16.mxu0 %v548
        %856 = vmatmul.mubr.bf16.gmra.mrb[0].mxu0 %v547
        %v857 = vpop.f32.mrb[0].mxu0
        %v858 = vadd.f32 %v606, %v857
        %v859 = vpop.f32.mrb[0].mxu0
        %v860 = vadd.f32 %v610, %v859
        %v861 = vpop.f32.mrb[0].mxu0
        %v862 = vadd.f32 %v606, %v861
        %v863 = vpop.f32.mrb[0].mxu0
        %v864 = vadd.f32 %v610, %v863
        %865 = vmatprep.mubr.bf16.mxu0 %v550
        %866 = vmatmul.mubr.bf16.gmra.mrb[0].mxu0 %v549
        %v867 = vpop.f32.mrb[0].mxu0
        %v868 = vadd.f32 %v606, %v867
        %v869 = vpop.f32.mrb[0].mxu0
        %v870 = vadd.f32 %v610, %v869
        %v871 = vpop.f32.mrb[0].mxu0
        %v872 = vadd.f32 %v606, %v871
        %v873 = vpop.f32.mrb[0].mxu0
        %v874 = vadd.f32 %v610, %v873
        %875 = vmatprep.mubr.bf16.mxu0 %v552
        %876 = vmatmul.mubr.bf16.gmra.mrb[0].mxu0 %v551
        %v877 = vpop.f32.mrb[0].mxu0
        %v878 = vadd.f32 %v606, %v877
        %v879 = vpop.f32.mrb[0].mxu0
        %v880 = vadd.f32 %v610, %v879
        %v881 = vpop.f32.mrb[0].mxu0
        %v882 = vadd.f32 %v606, %v881
        %v883 = vpop.f32.mrb[0].mxu0
        %v884 = vadd.f32 %v610, %v883
        %885 = vmatprep.mubr.bf16.mxu0 %v554
        %886 = vmatmul.mubr.bf16.gmra.mrb[0].mxu0 %v553
        %v887 = vpop.f32.mrb[0].mxu0
        %v888 = vadd.f32 %v606, %v887
        %v889 = vpop.f32.mrb[0].mxu0
        %v890 = vadd.f32 %v610, %v889
        %v891 = vpop.f32.mrb[0].mxu0
        %v892 = vadd.f32 %v606, %v891
        %v893 = vpop.f32.mrb[0].mxu0
        %v894 = vadd.f32 %v610, %v893
        %895 = vmatprep.mubr.bf16.mxu0 %v556
        %896 = vmatmul.mubr.bf16.gmra.mrb[0].mxu0 %v555
        %v897 = vpop.f32.mrb[0].mxu0
        %v898 = vadd.f32 %v606, %v897
        %v899 = vpop.f32.mrb[0].mxu0
        %v900 = vadd.f32 %v610, %v899
        %v901 = vpop.f32.mrb[0].mxu0
        %v902 = vadd.f32 %v606, %v901
        %v903 = vpop.f32.mrb[0].mxu0
        %v904 = vadd.f32 %v610, %v903
        %905 = vmatprep.mubr.bf16.mxu0 %v558
        %906 = vmatmul.mubr.bf16.gmra.mrb[0].mxu0 %v557
        %v907 = vpop.f32.mrb[0].mxu0
        %v908 = vadd.f32 %v606, %v907
        %v909 = vpop.f32.mrb[0].mxu0
        %v910 = vadd.f32 %v610, %v909
        %v911 = vpop.f32.mrb[0].mxu0
        %v912 = vadd.f32 %v606, %v911
        %v913 = vpop.f32.mrb[0].mxu0
        %v914 = vadd.f32 %v610, %v913
        %915 = vmatprep.mubr.bf16.mxu0 %v560
        %916 = vmatmul.mubr.bf16.gmra.mrb[0].mxu0 %v559
        %v917 = vpop.f32.mrb[0].mxu0
        %v918 = vadd.f32 %v606, %v917
        %v919 = vpop.f32.mrb[0].mxu0
        %v920 = vadd.f32 %v610, %v919
        %v921 = vpop.f32.mrb[0].mxu0
        %v922 = vadd.f32 %v606, %v921
        %v923 = vpop.f32.mrb[0].mxu0
        %v924 = vadd.f32 %v610, %v923
        %925 = vmatprep.mubr.bf16.mxu0 %v562
        %926 = vmatmul.mubr.bf16.gmra.mrb[0].mxu0 %v561
        %v927 = vpop.f32.mrb[0].mxu0
        %v928 = vadd.f32 %v606, %v927
        %v929 = vpop.f32.mrb[0].mxu0
        %v930 = vadd.f32 %v610, %v929
        %v931 = vpop.f32.mrb[0].mxu0
        %v932 = vadd.f32 %v606, %v931
        %v933 = vpop.f32.mrb[0].mxu0
        %v934 = vadd.f32 %v610, %v933
        %935 = vmatprep.mubr.bf16.mxu0 %v564
        %936 = vmatmul.mubr.bf16.gmra.mrb[0].mxu0 %v563
        %v937 = vpop.f32.mrb[0].mxu0
        %v938 = vadd.f32 %v606, %v937
        %v939 = vpop.f32.mrb[0].mxu0
        %v940 = vadd.f32 %v610, %v939
        %v941 = vpop.f32.mrb[0].mxu0
        %v942 = vadd.f32 %v606, %v941
        %v943 = vpop.f32.mrb[0].mxu0
        %v944 = vadd.f32 %v610, %v943
        %945 = vmatprep.mubr.bf16.mxu0 %v566
        %946 = vmatmul.mubr.bf16.gmra.mrb[0].mxu0 %v565
        %v947 = vpop.f32.mrb[0].mxu0
        %v948 = vadd.f32 %v606, %v947
        %v949 = vpop.f32.mrb[0].mxu0
        %v950 = vadd.f32 %v610, %v949
        %v951 = vpop.f32.mrb[0].mxu0
        %v952 = vadd.f32 %v606, %v951
        %v953 = vpop.f32.mrb[0].mxu0
        %v954 = vadd.f32 %v610, %v953
        %955 = vmatprep.mubr.bf16.mxu0 %v568
        %956 = vmatmul.mubr.bf16.gmra.mrb[0].mxu0 %v567
        %v957 = vpop.f32.mrb[0].mxu0
        %v958 = vadd.f32 %v606, %v957
        %v959 = vpop.f32.mrb[0].mxu0
        %v960 = vadd.f32 %v610, %v959
        %v961 = vpop.f32.mrb[0].mxu0
        %v962 = vadd.f32 %v606, %v961
        %v963 = vpop.f32.mrb[0].mxu0
        %v964 = vadd.f32 %v610, %v963
        %965 = vdwg.mxu0
        %v966 = vmul.f32 %v808, 0.18033688
        %v967 = vmul.f32 %v810, 0.18033688
        %v968 = vmul.f32 %v812, 0.18033688
        %v969 = vmul.f32 %v814, 0.18033688
        %v970 = vmul.f32 %v818, 0.18033688
        %v971 = vmul.f32 %v820, 0.18033688
        %v972 = vmul.f32 %v822, 0.18033688
        %v973 = vmul.f32 %v824, 0.18033688
        %v974 = vmul.f32 %v828, 0.18033688
        %v975 = vmul.f32 %v830, 0.18033688
        %v976 = vmul.f32 %v832, 0.18033688
        %v977 = vmul.f32 %v834, 0.18033688
        %v978 = vmul.f32 %v838, 0.18033688
        %v979 = vmul.f32 %v840, 0.18033688
        %v980 = vmul.f32 %v842, 0.18033688
        %v981 = vmul.f32 %v844, 0.18033688
        %v982 = vmul.f32 %v848, 0.18033688
        %v983 = vmul.f32 %v850, 0.18033688
        %v984 = vmul.f32 %v852, 0.18033688
        %v985 = vmul.f32 %v854, 0.18033688
        %v986 = vmul.f32 %v858, 0.18033688
        %v987 = vmul.f32 %v860, 0.18033688
        %v988 = vmul.f32 %v862, 0.18033688
        %v989 = vmul.f32 %v864, 0.18033688
        %v990 = vmul.f32 %v868, 0.18033688
        %v991 = vmul.f32 %v870, 0.18033688
        %v992 = vmul.f32 %v872, 0.18033688
        %v993 = vmul.f32 %v874, 0.18033688
        %v994 = vmul.f32 %v878, 0.18033688
        %v995 = vmul.f32 %v880, 0.18033688
        %v996 = vmul.f32 %v882, 0.18033688
        %v997 = vmul.f32 %v884, 0.18033688
        %v998 = vmul.f32 %v888, 0.18033688
        %v999 = vmul.f32 %v890, 0.18033688
        %v1000 = vmul.f32 %v892, 0.18033688
        %v1001 = vmul.f32 %v894, 0.18033688
        %v1002 = vmul.f32 %v898, 0.18033688
        %v1003 = vmul.f32 %v900, 0.18033688
        %v1004 = vmul.f32 %v902, 0.18033688
        %v1005 = vmul.f32 %v904, 0.18033688
        %v1006 = vmul.f32 %v908, 0.18033688
        %v1007 = vmul.f32 %v910, 0.18033688
        %v1008 = vmul.f32 %v912, 0.18033688
        %v1009 = vmul.f32 %v914, 0.18033688
        %v1010 = vmul.f32 %v918, 0.18033688
        %v1011 = vmul.f32 %v920, 0.18033688
        %v1012 = vmul.f32 %v922, 0.18033688
        %v1013 = vmul.f32 %v924, 0.18033688
        %v1014 = vmul.f32 %v928, 0.18033688
        %v1015 = vmul.f32 %v930, 0.18033688
        %v1016 = vmul.f32 %v932, 0.18033688
        %v1017 = vmul.f32 %v934, 0.18033688
        %v1018 = vmul.f32 %v938, 0.18033688
        %v1019 = vmul.f32 %v940, 0.18033688
        %v1020 = vmul.f32 %v942, 0.18033688
        %v1021 = vmul.f32 %v944, 0.18033688
        %v1022 = vmul.f32 %v948, 0.18033688
        %v1023 = vmul.f32 %v950, 0.18033688
        %v1024 = vmul.f32 %v952, 0.18033688
        %v1025 = vmul.f32 %v954, 0.18033688
        %v1026 = vmul.f32 %v958, 0.18033688
        %v1027 = vmul.f32 %v960, 0.18033688
        %v1028 = vmul.f32 %v962, 0.18033688
        %v1029 = vmul.f32 %v964, 0.18033688
        %v1030 = vld [vmem:[#allocation6] sm:$0xff]
        %v1031 = vld [vmem:[#allocation6 + $0x8] sm:$0xff]
        %v1032 = vld [vmem:[#allocation6 + $0x10] sm:$0xff]
        %v1033 = vld [vmem:[#allocation6 + $0x18] sm:$0xff]
        %v1034 = vld [vmem:[#allocation6 + $0x20] sm:$0xff]
        %v1035 = vld [vmem:[#allocation6 + $0x28] sm:$0xff]
        %v1036 = vld [vmem:[#allocation6 + $0x30] sm:$0xff]
        %v1037 = vld [vmem:[#allocation6 + $0x38] sm:$0xff]
        %v1038 = vld [vmem:[#allocation6 + $0x40] sm:$0xff]
        %v1039 = vld [vmem:[#allocation6 + $0x48] sm:$0xff]
        %v1040 = vld [vmem:[#allocation6 + $0x50] sm:$0xff]
        %v1041 = vld [vmem:[#allocation6 + $0x58] sm:$0xff]
        %v1042 = vld [vmem:[#allocation6 + $0x60] sm:$0xff]
        %v1043 = vld [vmem:[#allocation6 + $0x68] sm:$0xff]
        %v1044 = vld [vmem:[#allocation6 + $0x70] sm:$0xff]
        %v1045 = vld [vmem:[#allocation6 + $0x78] sm:$0xff]
        %v1046 = vld [vmem:[#allocation6 + $0x80] sm:$0xff]
        %v1047 = vld [vmem:[#allocation6 + $0x88] sm:$0xff]
        %v1048 = vld [vmem:[#allocation6 + $0x90] sm:$0xff]
        %v1049 = vld [vmem:[#allocation6 + $0x98] sm:$0xff]
        %v1050 = vld [vmem:[#allocation6 + $0xa0] sm:$0xff]
        %v1051 = vld [vmem:[#allocation6 + $0xa8] sm:$0xff]
        %v1052 = vld [vmem:[#allocation6 + $0xb0] sm:$0xff]
        %v1053 = vld [vmem:[#allocation6 + $0xb8] sm:$0xff]
        %v1054 = vld [vmem:[#allocation6 + $0xc0] sm:$0xff]
        %v1055 = vld [vmem:[#allocation6 + $0xc8] sm:$0xff]
        %v1056 = vld [vmem:[#allocation6 + $0xd0] sm:$0xff]
        %v1057 = vld [vmem:[#allocation6 + $0xd8] sm:$0xff]
        %v1058 = vld [vmem:[#allocation6 + $0xe0] sm:$0xff]
        %v1059 = vld [vmem:[#allocation6 + $0xe8] sm:$0xff]
        %v1060 = vld [vmem:[#allocation6 + $0xf0] sm:$0xff]
        %v1061 = vld [vmem:[#allocation6 + $0xf8] sm:$0xff]
        %v1062 = vld [vmem:[%s4] sm:$0x3]
        %v1064 = vlaneseq
        %v1065 = vshrl.u32 %v1064, 7
        %v1066 = vsub.s32 0, %v1065
        %v1067 = vrot.slane %v1062, %v1066
        %v1068 = vlaneseq
        %v1069 = vshrl.u32 %v1068, 7
        %v1070 = vsub.s32 1, %v1069
        %v1071 = vrot.slane %v1062, %v1070
        %v1106 = vunpack.c.l.b16 %v1030
        %v1107 = vunpack.c.h.b16 %v1030
        %v1108 = vunpack.c.l.b16 %v1031
        %v1109 = vunpack.c.h.b16 %v1031
        %v1110 = vunpack.c.l.b16 %v1032
        %v1111 = vunpack.c.h.b16 %v1032
        %v1112 = vunpack.c.l.b16 %v1033
        %v1113 = vunpack.c.h.b16 %v1033
        %v1114 = vunpack.c.l.b16 %v1034
        %v1115 = vunpack.c.h.b16 %v1034
        %v1116 = vunpack.c.l.b16 %v1035
        %v1117 = vunpack.c.h.b16 %v1035
        %v1118 = vunpack.c.l.b16 %v1036
        %v1119 = vunpack.c.h.b16 %v1036
        %v1120 = vunpack.c.l.b16 %v1037
        %v1121 = vunpack.c.h.b16 %v1037
        %v1122 = vunpack.c.l.b16 %v1038
        %v1123 = vunpack.c.h.b16 %v1038
        %v1124 = vunpack.c.l.b16 %v1039
        %v1125 = vunpack.c.h.b16 %v1039
        %v1126 = vunpack.c.l.b16 %v1040
        %v1127 = vunpack.c.h.b16 %v1040
        %v1128 = vunpack.c.l.b16 %v1041
        %v1129 = vunpack.c.h.b16 %v1041
        %v1130 = vunpack.c.l.b16 %v1042
        %v1131 = vunpack.c.h.b16 %v1042
        %v1132 = vunpack.c.l.b16 %v1043
        %v1133 = vunpack.c.h.b16 %v1043
        %v1134 = vunpack.c.l.b16 %v1044
        %v1135 = vunpack.c.h.b16 %v1044
        %v1136 = vunpack.c.l.b16 %v1045
        %v1137 = vunpack.c.h.b16 %v1045
        %v1138 = vunpack.c.l.b16 %v1046
        %v1139 = vunpack.c.h.b16 %v1046
        %v1140 = vunpack.c.l.b16 %v1047
        %v1141 = vunpack.c.h.b16 %v1047
        %v1142 = vunpack.c.l.b16 %v1048
        %v1143 = vunpack.c.h.b16 %v1048
        %v1144 = vunpack.c.l.b16 %v1049
        %v1145 = vunpack.c.h.b16 %v1049
        %v1146 = vunpack.c.l.b16 %v1050
        %v1147 = vunpack.c.h.b16 %v1050
        %v1148 = vunpack.c.l.b16 %v1051
        %v1149 = vunpack.c.h.b16 %v1051
        %v1150 = vunpack.c.l.b16 %v1052
        %v1151 = vunpack.c.h.b16 %v1052
        %v1152 = vunpack.c.l.b16 %v1053
        %v1153 = vunpack.c.h.b16 %v1053
        %v1154 = vunpack.c.l.b16 %v1054
        %v1155 = vunpack.c.h.b16 %v1054
        %v1156 = vunpack.c.l.b16 %v1055
        %v1157 = vunpack.c.h.b16 %v1055
        %v1158 = vunpack.c.l.b16 %v1056
        %v1159 = vunpack.c.h.b16 %v1056
        %v1160 = vunpack.c.l.b16 %v1057
        %v1161 = vunpack.c.h.b16 %v1057
        %v1162 = vunpack.c.l.b16 %v1058
        %v1163 = vunpack.c.h.b16 %v1058
        %v1164 = vunpack.c.l.b16 %v1059
        %v1165 = vunpack.c.h.b16 %v1059
        %v1166 = vunpack.c.l.b16 %v1060
        %v1167 = vunpack.c.h.b16 %v1060
        %v1168 = vunpack.c.l.b16 %v1061
        %v1169 = vunpack.c.h.b16 %v1061
        %v1170 = vpack.c.b16 %v1108, %v1106
        %v1171 = vpack.c.b16 %v1109, %v1107
        %v1172 = vpack.c.b16 %v1112, %v1110
        %v1173 = vpack.c.b16 %v1113, %v1111
        %v1174 = vpack.c.b16 %v1116, %v1114
        %v1175 = vpack.c.b16 %v1117, %v1115
        %v1176 = vpack.c.b16 %v1120, %v1118
        %v1177 = vpack.c.b16 %v1121, %v1119
        %v1178 = vpack.c.b16 %v1124, %v1122
        %v1179 = vpack.c.b16 %v1125, %v1123
        %v1180 = vpack.c.b16 %v1128, %v1126
        %v1181 = vpack.c.b16 %v1129, %v1127
        %v1182 = vpack.c.b16 %v1132, %v1130
        %v1183 = vpack.c.b16 %v1133, %v1131
        %v1184 = vpack.c.b16 %v1136, %v1134
        %v1185 = vpack.c.b16 %v1137, %v1135
        %v1186 = vpack.c.b16 %v1140, %v1138
        %v1187 = vpack.c.b16 %v1141, %v1139
        %v1188 = vpack.c.b16 %v1144, %v1142
        %v1189 = vpack.c.b16 %v1145, %v1143
        %v1190 = vpack.c.b16 %v1148, %v1146
        %v1191 = vpack.c.b16 %v1149, %v1147
        %v1192 = vpack.c.b16 %v1152, %v1150
        %v1193 = vpack.c.b16 %v1153, %v1151
        %v1194 = vpack.c.b16 %v1156, %v1154
        %v1195 = vpack.c.b16 %v1157, %v1155
        %v1196 = vpack.c.b16 %v1160, %v1158
        %v1197 = vpack.c.b16 %v1161, %v1159
        %v1198 = vpack.c.b16 %v1164, %v1162
        %v1199 = vpack.c.b16 %v1165, %v1163
        %v1200 = vpack.c.b16 %v1168, %v1166
        %v1201 = vpack.c.b16 %v1169, %v1167
        %1234 = vmatprep.subr.bf16.mxu0 %v1171
        %1235 = vmatpush1.bf16.msra.mxu0 %v1170
        %1236 = vmatprep.subr.bf16.mxu0 %v1173
        %1237 = vmatpush1.bf16.msra.mxu0 %v1172
        %1238 = vmatprep.subr.bf16.mxu0 %v1175
        %1239 = vmatpush1.bf16.msra.mxu0 %v1174
        %1240 = vmatprep.subr.bf16.mxu0 %v1177
        %1241 = vmatpush1.bf16.msra.mxu0 %v1176
        %1242 = vmatprep.subr.bf16.mxu0 %v1179
        %1243 = vmatpush1.bf16.msra.mxu0 %v1178
        %1244 = vmatprep.subr.bf16.mxu0 %v1181
        %1245 = vmatpush1.bf16.msra.mxu0 %v1180
        %1246 = vmatprep.subr.bf16.mxu0 %v1183
        %1247 = vmatpush1.bf16.msra.mxu0 %v1182
        %1248 = vmatprep.subr.bf16.mxu0 %v1185
        %1249 = vmatpush1.bf16.msra.mxu0 %v1184
        %1250 = vmatprep.subr.bf16.mxu0 %v1187
        %1251 = vmatpush1.bf16.msra.mxu0 %v1186
        %1252 = vmatprep.subr.bf16.mxu0 %v1189
        %1253 = vmatpush1.bf16.msra.mxu0 %v1188
        %1254 = vmatprep.subr.bf16.mxu0 %v1191
        %1255 = vmatpush1.bf16.msra.mxu0 %v1190
        %1256 = vmatprep.subr.bf16.mxu0 %v1193
        %1257 = vmatpush1.bf16.msra.mxu0 %v1192
        %1258 = vmatprep.subr.bf16.mxu0 %v1195
        %1259 = vmatpush1.bf16.msra.mxu0 %v1194
        %1260 = vmatprep.subr.bf16.mxu0 %v1197
        %1261 = vmatpush1.bf16.msra.mxu0 %v1196
        %1262 = vmatprep.subr.bf16.mxu0 %v1199
        %1263 = vmatpush1.bf16.msra.mxu0 %v1198
        %1264 = vmatprep.subr.bf16.mxu0 %v1201
        %1265 = vmatpush1.bf16.msra.mxu0 %v1200
        %1266 = vmatprep.mubr.bf16.mxu0 %v538
        %1267 = vmatmul.mubr.bf16.gmra.mrb[0].mxu0 %v537
        %v1268 = vpop.f32.mrb[0].mxu0
        %v1269 = vadd.f32 %v1067, %v1268
        %v1270 = vpop.f32.mrb[0].mxu0
        %v1271 = vadd.f32 %v1071, %v1270
        %v1272 = vpop.f32.mrb[0].mxu0
        %v1273 = vadd.f32 %v1067, %v1272
        %v1274 = vpop.f32.mrb[0].mxu0
        %v1275 = vadd.f32 %v1071, %v1274
        %1276 = vmatprep.mubr.bf16.mxu0 %v540
        %1277 = vmatmul.mubr.bf16.gmra.mrb[0].mxu0 %v539
        %v1278 = vpop.f32.mrb[0].mxu0
        %v1279 = vadd.f32 %v1067, %v1278
        %v1280 = vpop.f32.mrb[0].mxu0
        %v1281 = vadd.f32 %v1071, %v1280
        %v1282 = vpop.f32.mrb[0].mxu0
        %v1283 = vadd.f32 %v1067, %v1282
        %v1284 = vpop.f32.mrb[0].mxu0
        %v1285 = vadd.f32 %v1071, %v1284
        %1286 = vmatprep.mubr.bf16.mxu0 %v542
        %1287 = vmatmul.mubr.bf16.gmra.mrb[0].mxu0 %v541
        %v1288 = vpop.f32.mrb[0].mxu0
        %v1289 = vadd.f32 %v1067, %v1288
        %v1290 = vpop.f32.mrb[0].mxu0
        %v1291 = vadd.f32 %v1071, %v1290
        %v1292 = vpop.f32.mrb[0].mxu0
        %v1293 = vadd.f32 %v1067, %v1292
        %v1294 = vpop.f32.mrb[0].mxu0
        %v1295 = vadd.f32 %v1071, %v1294
        %1296 = vmatprep.mubr.bf16.mxu0 %v544
        %1297 = vmatmul.mubr.bf16.gmra.mrb[0].mxu0 %v543
        %v1298 = vpop.f32.mrb[0].mxu0
        %v1299 = vadd.f32 %v1067, %v1298
        %v1300 = vpop.f32.mrb[0].mxu0
        %v1301 = vadd.f32 %v1071, %v1300
        %v1302 = vpop.f32.mrb[0].mxu0
        %v1303 = vadd.f32 %v1067, %v1302
        %v1304 = vpop.f32.mrb[0].mxu0
        %v1305 = vadd.f32 %v1071, %v1304
        %1306 = vmatprep.mubr.bf16.mxu0 %v546
        %1307 = vmatmul.mubr.bf16.gmra.mrb[0].mxu0 %v545
        %v1308 = vpop.f32.mrb[0].mxu0
        %v1309 = vadd.f32 %v1067, %v1308
        %v1310 = vpop.f32.mrb[0].mxu0
        %v1311 = vadd.f32 %v1071, %v1310
        %v1312 = vpop.f32.mrb[0].mxu0
        %v1313 = vadd.f32 %v1067, %v1312
        %v1314 = vpop.f32.mrb[0].mxu0
        %v1315 = vadd.f32 %v1071, %v1314
        %1316 = vmatprep.mubr.bf16.mxu0 %v548
        %1317 = vmatmul.mubr.bf16.gmra.mrb[0].mxu0 %v547
        %v1318 = vpop.f32.mrb[0].mxu0
        %v1319 = vadd.f32 %v1067, %v1318
        %v1320 = vpop.f32.mrb[0].mxu0
        %v1321 = vadd.f32 %v1071, %v1320
        %v1322 = vpop.f32.mrb[0].mxu0
        %v1323 = vadd.f32 %v1067, %v1322
        %v1324 = vpop.f32.mrb[0].mxu0
        %v1325 = vadd.f32 %v1071, %v1324
        %1326 = vmatprep.mubr.bf16.mxu0 %v550
        %1327 = vmatmul.mubr.bf16.gmra.mrb[0].mxu0 %v549
        %v1328 = vpop.f32.mrb[0].mxu0
        %v1329 = vadd.f32 %v1067, %v1328
        %v1330 = vpop.f32.mrb[0].mxu0
        %v1331 = vadd.f32 %v1071, %v1330
        %v1332 = vpop.f32.mrb[0].mxu0
        %v1333 = vadd.f32 %v1067, %v1332
        %v1334 = vpop.f32.mrb[0].mxu0
        %v1335 = vadd.f32 %v1071, %v1334
        %1336 = vmatprep.mubr.bf16.mxu0 %v552
        %1337 = vmatmul.mubr.bf16.gmra.mrb[0].mxu0 %v551
        %v1338 = vpop.f32.mrb[0].mxu0
        %v1339 = vadd.f32 %v1067, %v1338
        %v1340 = vpop.f32.mrb[0].mxu0
        %v1341 = vadd.f32 %v1071, %v1340
        %v1342 = vpop.f32.mrb[0].mxu0
        %v1343 = vadd.f32 %v1067, %v1342
        %v1344 = vpop.f32.mrb[0].mxu0
        %v1345 = vadd.f32 %v1071, %v1344
        %1346 = vmatprep.mubr.bf16.mxu0 %v554
        %1347 = vmatmul.mubr.bf16.gmra.mrb[0].mxu0 %v553
        %v1348 = vpop.f32.mrb[0].mxu0
        %v1349 = vadd.f32 %v1067, %v1348
        %v1350 = vpop.f32.mrb[0].mxu0
        %v1351 = vadd.f32 %v1071, %v1350
        %v1352 = vpop.f32.mrb[0].mxu0
        %v1353 = vadd.f32 %v1067, %v1352
        %v1354 = vpop.f32.mrb[0].mxu0
        %v1355 = vadd.f32 %v1071, %v1354
        %1356 = vmatprep.mubr.bf16.mxu0 %v556
        %1357 = vmatmul.mubr.bf16.gmra.mrb[0].mxu0 %v555
        %v1358 = vpop.f32.mrb[0].mxu0
        %v1359 = vadd.f32 %v1067, %v1358
        %v1360 = vpop.f32.mrb[0].mxu0
        %v1361 = vadd.f32 %v1071, %v1360
        %v1362 = vpop.f32.mrb[0].mxu0
        %v1363 = vadd.f32 %v1067, %v1362
        %v1364 = vpop.f32.mrb[0].mxu0
        %v1365 = vadd.f32 %v1071, %v1364
        %1366 = vmatprep.mubr.bf16.mxu0 %v558
        %1367 = vmatmul.mubr.bf16.gmra.mrb[0].mxu0 %v557
        %v1368 = vpop.f32.mrb[0].mxu0
        %v1369 = vadd.f32 %v1067, %v1368
        %v1370 = vpop.f32.mrb[0].mxu0
        %v1371 = vadd.f32 %v1071, %v1370
        %v1372 = vpop.f32.mrb[0].mxu0
        %v1373 = vadd.f32 %v1067, %v1372
        %v1374 = vpop.f32.mrb[0].mxu0
        %v1375 = vadd.f32 %v1071, %v1374
        %1376 = vmatprep.mubr.bf16.mxu0 %v560
        %1377 = vmatmul.mubr.bf16.gmra.mrb[0].mxu0 %v559
        %v1378 = vpop.f32.mrb[0].mxu0
        %v1379 = vadd.f32 %v1067, %v1378
        %v1380 = vpop.f32.mrb[0].mxu0
        %v1381 = vadd.f32 %v1071, %v1380
        %v1382 = vpop.f32.mrb[0].mxu0
        %v1383 = vadd.f32 %v1067, %v1382
        %v1384 = vpop.f32.mrb[0].mxu0
        %v1385 = vadd.f32 %v1071, %v1384
        %1386 = vmatprep.mubr.bf16.mxu0 %v562
        %1387 = vmatmul.mubr.bf16.gmra.mrb[0].mxu0 %v561
        %v1388 = vpop.f32.mrb[0].mxu0
        %v1389 = vadd.f32 %v1067, %v1388
        %v1390 = vpop.f32.mrb[0].mxu0
        %v1391 = vadd.f32 %v1071, %v1390
        %v1392 = vpop.f32.mrb[0].mxu0
        %v1393 = vadd.f32 %v1067, %v1392
        %v1394 = vpop.f32.mrb[0].mxu0
        %v1395 = vadd.f32 %v1071, %v1394
        %1396 = vmatprep.mubr.bf16.mxu0 %v564
        %1397 = vmatmul.mubr.bf16.gmra.mrb[0].mxu0 %v563
        %v1398 = vpop.f32.mrb[0].mxu0
        %v1399 = vadd.f32 %v1067, %v1398
        %v1400 = vpop.f32.mrb[0].mxu0
        %v1401 = vadd.f32 %v1071, %v1400
        %v1402 = vpop.f32.mrb[0].mxu0
        %v1403 = vadd.f32 %v1067, %v1402
        %v1404 = vpop.f32.mrb[0].mxu0
        %v1405 = vadd.f32 %v1071, %v1404
        %1406 = vmatprep.mubr.bf16.mxu0 %v566
        %1407 = vmatmul.mubr.bf16.gmra.mrb[0].mxu0 %v565
        %v1408 = vpop.f32.mrb[0].mxu0
        %v1409 = vadd.f32 %v1067, %v1408
        %v1410 = vpop.f32.mrb[0].mxu0
        %v1411 = vadd.f32 %v1071, %v1410
        %v1412 = vpop.f32.mrb[0].mxu0
        %v1413 = vadd.f32 %v1067, %v1412
        %v1414 = vpop.f32.mrb[0].mxu0
        %v1415 = vadd.f32 %v1071, %v1414
        %1416 = vmatprep.mubr.bf16.mxu0 %v568
        %1417 = vmatmul.mubr.bf16.gmra.mrb[0].mxu0 %v567
        %v1418 = vpop.f32.mrb[0].mxu0
        %v1419 = vadd.f32 %v1067, %v1418
        %v1420 = vpop.f32.mrb[0].mxu0
        %v1421 = vadd.f32 %v1071, %v1420
        %v1422 = vpop.f32.mrb[0].mxu0
        %v1423 = vadd.f32 %v1067, %v1422
        %v1424 = vpop.f32.mrb[0].mxu0
        %v1425 = vadd.f32 %v1071, %v1424
        %1426 = vdwg.mxu0
        %v1427 = vld [vmem:[#allocation7] sm:$0xff]
        %v1428 = vld [vmem:[#allocation7 + $0x8] sm:$0xff]
        %v1429 = vld [vmem:[#allocation7 + $0x10] sm:$0xff]
        %v1430 = vld [vmem:[#allocation7 + $0x18] sm:$0xff]
        %v1431 = vld [vmem:[#allocation7 + $0x20] sm:$0xff]
        %v1432 = vld [vmem:[#allocation7 + $0x28] sm:$0xff]
        %v1433 = vld [vmem:[#allocation7 + $0x30] sm:$0xff]
        %v1434 = vld [vmem:[#allocation7 + $0x38] sm:$0xff]
        %v1435 = vld [vmem:[#allocation7 + $0x40] sm:$0xff]
        %v1436 = vld [vmem:[#allocation7 + $0x48] sm:$0xff]
        %v1437 = vld [vmem:[#allocation7 + $0x50] sm:$0xff]
        %v1438 = vld [vmem:[#allocation7 + $0x58] sm:$0xff]
        %v1439 = vld [vmem:[#allocation7 + $0x60] sm:$0xff]
        %v1440 = vld [vmem:[#allocation7 + $0x68] sm:$0xff]
        %v1441 = vld [vmem:[#allocation7 + $0x70] sm:$0xff]
        %v1442 = vld [vmem:[#allocation7 + $0x78] sm:$0xff]
        %v1443 = vld [vmem:[#allocation7 + $0x80] sm:$0xff]
        %v1444 = vld [vmem:[#allocation7 + $0x88] sm:$0xff]
        %v1445 = vld [vmem:[#allocation7 + $0x90] sm:$0xff]
        %v1446 = vld [vmem:[#allocation7 + $0x98] sm:$0xff]
        %v1447 = vld [vmem:[#allocation7 + $0xa0] sm:$0xff]
        %v1448 = vld [vmem:[#allocation7 + $0xa8] sm:$0xff]
        %v1449 = vld [vmem:[#allocation7 + $0xb0] sm:$0xff]
        %v1450 = vld [vmem:[#allocation7 + $0xb8] sm:$0xff]
        %v1451 = vld [vmem:[#allocation7 + $0xc0] sm:$0xff]
        %v1452 = vld [vmem:[#allocation7 + $0xc8] sm:$0xff]
        %v1453 = vld [vmem:[#allocation7 + $0xd0] sm:$0xff]
        %v1454 = vld [vmem:[#allocation7 + $0xd8] sm:$0xff]
        %v1455 = vld [vmem:[#allocation7 + $0xe0] sm:$0xff]
        %v1456 = vld [vmem:[#allocation7 + $0xe8] sm:$0xff]
        %v1457 = vld [vmem:[#allocation7 + $0xf0] sm:$0xff]
        %v1458 = vld [vmem:[#allocation7 + $0xf8] sm:$0xff]
        %v1459 = vld [vmem:[%s6] sm:$0x3]
        %v1461 = vlaneseq
        %v1462 = vshrl.u32 %v1461, 7
        %v1463 = vsub.s32 0, %v1462
        %v1464 = vrot.slane %v1459, %v1463
        %v1465 = vlaneseq
        %v1466 = vshrl.u32 %v1465, 7
        %v1467 = vsub.s32 1, %v1466
        %v1468 = vrot.slane %v1459, %v1467
        %v1503 = vunpack.c.l.b16 %v1427
        %v1504 = vunpack.c.h.b16 %v1427
        %v1505 = vunpack.c.l.b16 %v1428
        %v1506 = vunpack.c.h.b16 %v1428
        %v1507 = vunpack.c.l.b16 %v1429
        %v1508 = vunpack.c.h.b16 %v1429
        %v1509 = vunpack.c.l.b16 %v1430
        %v1510 = vunpack.c.h.b16 %v1430
        %v1511 = vunpack.c.l.b16 %v1431
        %v1512 = vunpack.c.h.b16 %v1431
        %v1513 = vunpack.c.l.b16 %v1432
        %v1514 = vunpack.c.h.b16 %v1432
        %v1515 = vunpack.c.l.b16 %v1433
        %v1516 = vunpack.c.h.b16 %v1433
        %v1517 = vunpack.c.l.b16 %v1434
        %v1518 = vunpack.c.h.b16 %v1434
        %v1519 = vunpack.c.l.b16 %v1435
        %v1520 = vunpack.c.h.b16 %v1435
        %v1521 = vunpack.c.l.b16 %v1436
        %v1522 = vunpack.c.h.b16 %v1436
        %v1523 = vunpack.c.l.b16 %v1437
        %v1524 = vunpack.c.h.b16 %v1437
        %v1525 = vunpack.c.l.b16 %v1438
        %v1526 = vunpack.c.h.b16 %v1438
        %v1527 = vunpack.c.l.b16 %v1439
        %v1528 = vunpack.c.h.b16 %v1439
        %v1529 = vunpack.c.l.b16 %v1440
        %v1530 = vunpack.c.h.b16 %v1440
        %v1531 = vunpack.c.l.b16 %v1441
        %v1532 = vunpack.c.h.b16 %v1441
        %v1533 = vunpack.c.l.b16 %v1442
        %v1534 = vunpack.c.h.b16 %v1442
        %v1535 = vunpack.c.l.b16 %v1443
        %v1536 = vunpack.c.h.b16 %v1443
        %v1537 = vunpack.c.l.b16 %v1444
        %v1538 = vunpack.c.h.b16 %v1444
        %v1539 = vunpack.c.l.b16 %v1445
        %v1540 = vunpack.c.h.b16 %v1445
        %v1541 = vunpack.c.l.b16 %v1446
        %v1542 = vunpack.c.h.b16 %v1446
        %v1543 = vunpack.c.l.b16 %v1447
        %v1544 = vunpack.c.h.b16 %v1447
        %v1545 = vunpack.c.l.b16 %v1448
        %v1546 = vunpack.c.h.b16 %v1448
        %v1547 = vunpack.c.l.b16 %v1449
        %v1548 = vunpack.c.h.b16 %v1449
        %v1549 = vunpack.c.l.b16 %v1450
        %v1550 = vunpack.c.h.b16 %v1450
        %v1551 = vunpack.c.l.b16 %v1451
        %v1552 = vunpack.c.h.b16 %v1451
        %v1553 = vunpack.c.l.b16 %v1452
        %v1554 = vunpack.c.h.b16 %v1452
        %v1555 = vunpack.c.l.b16 %v1453
        %v1556 = vunpack.c.h.b16 %v1453
        %v1557 = vunpack.c.l.b16 %v1454
        %v1558 = vunpack.c.h.b16 %v1454
        %v1559 = vunpack.c.l.b16 %v1455
        %v1560 = vunpack.c.h.b16 %v1455
        %v1561 = vunpack.c.l.b16 %v1456
        %v1562 = vunpack.c.h.b16 %v1456
        %v1563 = vunpack.c.l.b16 %v1457
        %v1564 = vunpack.c.h.b16 %v1457
        %v1565 = vunpack.c.l.b16 %v1458
        %v1566 = vunpack.c.h.b16 %v1458
        %v1567 = vpack.c.b16 %v1505, %v1503
        %v1568 = vpack.c.b16 %v1506, %v1504
        %v1569 = vpack.c.b16 %v1509, %v1507
        %v1570 = vpack.c.b16 %v1510, %v1508
        %v1571 = vpack.c.b16 %v1513, %v1511
        %v1572 = vpack.c.b16 %v1514, %v1512
        %v1573 = vpack.c.b16 %v1517, %v1515
        %v1574 = vpack.c.b16 %v1518, %v1516
        %v1575 = vpack.c.b16 %v1521, %v1519
        %v1576 = vpack.c.b16 %v1522, %v1520
        %v1577 = vpack.c.b16 %v1525, %v1523
        %v1578 = vpack.c.b16 %v1526, %v1524
        %v1579 = vpack.c.b16 %v1529, %v1527
        %v1580 = vpack.c.b16 %v1530, %v1528
        %v1581 = vpack.c.b16 %v1533, %v1531
        %v1582 = vpack.c.b16 %v1534, %v1532
        %v1583 = vpack.c.b16 %v1537, %v1535
        %v1584 = vpack.c.b16 %v1538, %v1536
        %v1585 = vpack.c.b16 %v1541, %v1539
        %v1586 = vpack.c.b16 %v1542, %v1540
        %v1587 = vpack.c.b16 %v1545, %v1543
        %v1588 = vpack.c.b16 %v1546, %v1544
        %v1589 = vpack.c.b16 %v1549, %v1547
        %v1590 = vpack.c.b16 %v1550, %v1548
        %v1591 = vpack.c.b16 %v1553, %v1551
        %v1592 = vpack.c.b16 %v1554, %v1552
        %v1593 = vpack.c.b16 %v1557, %v1555
        %v1594 = vpack.c.b16 %v1558, %v1556
        %v1595 = vpack.c.b16 %v1561, %v1559
        %v1596 = vpack.c.b16 %v1562, %v1560
        %v1597 = vpack.c.b16 %v1565, %v1563
        %v1598 = vpack.c.b16 %v1566, %v1564
        %1631 = vmatprep.subr.bf16.mxu0 %v1568
        %1632 = vmatpush1.bf16.msra.mxu0 %v1567
        %1633 = vmatprep.subr.bf16.mxu0 %v1570
        %1634 = vmatpush1.bf16.msra.mxu0 %v1569
        %1635 = vmatprep.subr.bf16.mxu0 %v1572
        %1636 = vmatpush1.bf16.msra.mxu0 %v1571
        %1637 = vmatprep.subr.bf16.mxu0 %v1574
        %1638 = vmatpush1.bf16.msra.mxu0 %v1573
        %1639 = vmatprep.subr.bf16.mxu0 %v1576
        %1640 = vmatpush1.bf16.msra.mxu0 %v1575
        %1641 = vmatprep.subr.bf16.mxu0 %v1578
        %1642 = vmatpush1.bf16.msra.mxu0 %v1577
        %1643 = vmatprep.subr.bf16.mxu0 %v1580
        %1644 = vmatpush1.bf16.msra.mxu0 %v1579
        %1645 = vmatprep.subr.bf16.mxu0 %v1582
        %1646 = vmatpush1.bf16.msra.mxu0 %v1581
        %1647 = vmatprep.subr.bf16.mxu0 %v1584
        %1648 = vmatpush1.bf16.msra.mxu0 %v1583
        %1649 = vmatprep.subr.bf16.mxu0 %v1586
        %1650 = vmatpush1.bf16.msra.mxu0 %v1585
        %1651 = vmatprep.subr.bf16.mxu0 %v1588
        %1652 = vmatpush1.bf16.msra.mxu0 %v1587
        %1653 = vmatprep.subr.bf16.mxu0 %v1590
        %1654 = vmatpush1.bf16.msra.mxu0 %v1589
        %1655 = vmatprep.subr.bf16.mxu0 %v1592
        %1656 = vmatpush1.bf16.msra.mxu0 %v1591
        %1657 = vmatprep.subr.bf16.mxu0 %v1594
        %1658 = vmatpush1.bf16.msra.mxu0 %v1593
        %1659 = vmatprep.subr.bf16.mxu0 %v1596
        %1660 = vmatpush1.bf16.msra.mxu0 %v1595
        %1661 = vmatprep.subr.bf16.mxu0 %v1598
        %1662 = vmatpush1.bf16.msra.mxu0 %v1597
        %1663 = vmatprep.mubr.bf16.mxu0 %v538
        %1664 = vmatmul.mubr.bf16.gmra.mrb[0].mxu0 %v537
        %v1665 = vpop.f32.mrb[0].mxu0
        %v1666 = vadd.f32 %v1464, %v1665
        %v1667 = vpop.f32.mrb[0].mxu0
        %v1668 = vadd.f32 %v1468, %v1667
        %v1669 = vpop.f32.mrb[0].mxu0
        %v1670 = vadd.f32 %v1464, %v1669
        %v1671 = vpop.f32.mrb[0].mxu0
        %v1672 = vadd.f32 %v1468, %v1671
        %1673 = vmatprep.mubr.bf16.mxu0 %v540
        %1674 = vmatmul.mubr.bf16.gmra.mrb[0].mxu0 %v539
        %v1675 = vpop.f32.mrb[0].mxu0
        %v1676 = vadd.f32 %v1464, %v1675
        %v1677 = vpop.f32.mrb[0].mxu0
        %v1678 = vadd.f32 %v1468, %v1677
        %v1679 = vpop.f32.mrb[0].mxu0
        %v1680 = vadd.f32 %v1464, %v1679
        %v1681 = vpop.f32.mrb[0].mxu0
        %v1682 = vadd.f32 %v1468, %v1681
        %1683 = vmatprep.mubr.bf16.mxu0 %v542
        %1684 = vmatmul.mubr.bf16.gmra.mrb[0].mxu0 %v541
        %v1685 = vpop.f32.mrb[0].mxu0
        %v1686 = vadd.f32 %v1464, %v1685
        %v1687 = vpop.f32.mrb[0].mxu0
        %v1688 = vadd.f32 %v1468, %v1687
        %v1689 = vpop.f32.mrb[0].mxu0
        %v1690 = vadd.f32 %v1464, %v1689
        %v1691 = vpop.f32.mrb[0].mxu0
        %v1692 = vadd.f32 %v1468, %v1691
        %1693 = vmatprep.mubr.bf16.mxu0 %v544
        %1694 = vmatmul.mubr.bf16.gmra.mrb[0].mxu0 %v543
        %v1695 = vpop.f32.mrb[0].mxu0
        %v1696 = vadd.f32 %v1464, %v1695
        %v1697 = vpop.f32.mrb[0].mxu0
        %v1698 = vadd.f32 %v1468, %v1697
        %v1699 = vpop.f32.mrb[0].mxu0
        %v1700 = vadd.f32 %v1464, %v1699
        %v1701 = vpop.f32.mrb[0].mxu0
        %v1702 = vadd.f32 %v1468, %v1701
        %1703 = vmatprep.mubr.bf16.mxu0 %v546
        %1704 = vmatmul.mubr.bf16.gmra.mrb[0].mxu0 %v545
        %v1705 = vpop.f32.mrb[0].mxu0
        %v1706 = vadd.f32 %v1464, %v1705
        %v1707 = vpop.f32.mrb[0].mxu0
        %v1708 = vadd.f32 %v1468, %v1707
        %v1709 = vpop.f32.mrb[0].mxu0
        %v1710 = vadd.f32 %v1464, %v1709
        %v1711 = vpop.f32.mrb[0].mxu0
        %v1712 = vadd.f32 %v1468, %v1711
        %1713 = vmatprep.mubr.bf16.mxu0 %v548
        %1714 = vmatmul.mubr.bf16.gmra.mrb[0].mxu0 %v547
        %v1715 = vpop.f32.mrb[0].mxu0
        %v1716 = vadd.f32 %v1464, %v1715
        %v1717 = vpop.f32.mrb[0].mxu0
        %v1718 = vadd.f32 %v1468, %v1717
        %v1719 = vpop.f32.mrb[0].mxu0
        %v1720 = vadd.f32 %v1464, %v1719
        %v1721 = vpop.f32.mrb[0].mxu0
        %v1722 = vadd.f32 %v1468, %v1721
        %1723 = vmatprep.mubr.bf16.mxu0 %v550
        %1724 = vmatmul.mubr.bf16.gmra.mrb[0].mxu0 %v549
        %v1725 = vpop.f32.mrb[0].mxu0
        %v1726 = vadd.f32 %v1464, %v1725
        %v1727 = vpop.f32.mrb[0].mxu0
        %v1728 = vadd.f32 %v1468, %v1727
        %v1729 = vpop.f32.mrb[0].mxu0
        %v1730 = vadd.f32 %v1464, %v1729
        %v1731 = vpop.f32.mrb[0].mxu0
        %v1732 = vadd.f32 %v1468, %v1731
        %1733 = vmatprep.mubr.bf16.mxu0 %v552
        %1734 = vmatmul.mubr.bf16.gmra.mrb[0].mxu0 %v551
        %v1735 = vpop.f32.mrb[0].mxu0
        %v1736 = vadd.f32 %v1464, %v1735
        %v1737 = vpop.f32.mrb[0].mxu0
        %v1738 = vadd.f32 %v1468, %v1737
        %v1739 = vpop.f32.mrb[0].mxu0
        %v1740 = vadd.f32 %v1464, %v1739
        %v1741 = vpop.f32.mrb[0].mxu0
        %v1742 = vadd.f32 %v1468, %v1741
        %1743 = vmatprep.mubr.bf16.mxu0 %v554
        %1744 = vmatmul.mubr.bf16.gmra.mrb[0].mxu0 %v553
        %v1745 = vpop.f32.mrb[0].mxu0
        %v1746 = vadd.f32 %v1464, %v1745
        %v1747 = vpop.f32.mrb[0].mxu0
        %v1748 = vadd.f32 %v1468, %v1747
        %v1749 = vpop.f32.mrb[0].mxu0
        %v1750 = vadd.f32 %v1464, %v1749
        %v1751 = vpop.f32.mrb[0].mxu0
        %v1752 = vadd.f32 %v1468, %v1751
        %1753 = vmatprep.mubr.bf16.mxu0 %v556
        %1754 = vmatmul.mubr.bf16.gmra.mrb[0].mxu0 %v555
        %v1755 = vpop.f32.mrb[0].mxu0
        %v1756 = vadd.f32 %v1464, %v1755
        %v1757 = vpop.f32.mrb[0].mxu0
        %v1758 = vadd.f32 %v1468, %v1757
        %v1759 = vpop.f32.mrb[0].mxu0
        %v1760 = vadd.f32 %v1464, %v1759
        %v1761 = vpop.f32.mrb[0].mxu0
        %v1762 = vadd.f32 %v1468, %v1761
        %1763 = vmatprep.mubr.bf16.mxu0 %v558
        %1764 = vmatmul.mubr.bf16.gmra.mrb[0].mxu0 %v557
        %v1765 = vpop.f32.mrb[0].mxu0
        %v1766 = vadd.f32 %v1464, %v1765
        %v1767 = vpop.f32.mrb[0].mxu0
        %v1768 = vadd.f32 %v1468, %v1767
        %v1769 = vpop.f32.mrb[0].mxu0
        %v1770 = vadd.f32 %v1464, %v1769
        %v1771 = vpop.f32.mrb[0].mxu0
        %v1772 = vadd.f32 %v1468, %v1771
        %1773 = vmatprep.mubr.bf16.mxu0 %v560
        %1774 = vmatmul.mubr.bf16.gmra.mrb[0].mxu0 %v559
        %v1775 = vpop.f32.mrb[0].mxu0
        %v1776 = vadd.f32 %v1464, %v1775
        %v1777 = vpop.f32.mrb[0].mxu0
        %v1778 = vadd.f32 %v1468, %v1777
        %v1779 = vpop.f32.mrb[0].mxu0
        %v1780 = vadd.f32 %v1464, %v1779
        %v1781 = vpop.f32.mrb[0].mxu0
        %v1782 = vadd.f32 %v1468, %v1781
        %1783 = vmatprep.mubr.bf16.mxu0 %v562
        %1784 = vmatmul.mubr.bf16.gmra.mrb[0].mxu0 %v561
        %v1785 = vpop.f32.mrb[0].mxu0
        %v1786 = vadd.f32 %v1464, %v1785
        %v1787 = vpop.f32.mrb[0].mxu0
        %v1788 = vadd.f32 %v1468, %v1787
        %v1789 = vpop.f32.mrb[0].mxu0
        %v1790 = vadd.f32 %v1464, %v1789
        %v1791 = vpop.f32.mrb[0].mxu0
        %v1792 = vadd.f32 %v1468, %v1791
        %1793 = vmatprep.mubr.bf16.mxu0 %v564
        %1794 = vmatmul.mubr.bf16.gmra.mrb[0].mxu0 %v563
        %v1795 = vpop.f32.mrb[0].mxu0
        %v1796 = vadd.f32 %v1464, %v1795
        %v1797 = vpop.f32.mrb[0].mxu0
        %v1798 = vadd.f32 %v1468, %v1797
        %v1799 = vpop.f32.mrb[0].mxu0
        %v1800 = vadd.f32 %v1464, %v1799
        %v1801 = vpop.f32.mrb[0].mxu0
        %v1802 = vadd.f32 %v1468, %v1801
        %1803 = vmatprep.mubr.bf16.mxu0 %v566
        %1804 = vmatmul.mubr.bf16.gmra.mrb[0].mxu0 %v565
        %v1805 = vpop.f32.mrb[0].mxu0
        %v1806 = vadd.f32 %v1464, %v1805
        %v1807 = vpop.f32.mrb[0].mxu0
        %v1808 = vadd.f32 %v1468, %v1807
        %v1809 = vpop.f32.mrb[0].mxu0
        %v1810 = vadd.f32 %v1464, %v1809
        %v1811 = vpop.f32.mrb[0].mxu0
        %v1812 = vadd.f32 %v1468, %v1811
        %1813 = vmatprep.mubr.bf16.mxu0 %v568
        %1814 = vmatmul.mubr.bf16.gmra.mrb[0].mxu0 %v567
        %v1815 = vpop.f32.mrb[0].mxu0
        %v1816 = vadd.f32 %v1464, %v1815
        %v1817 = vpop.f32.mrb[0].mxu0
        %v1818 = vadd.f32 %v1468, %v1817
        %v1819 = vpop.f32.mrb[0].mxu0
        %v1820 = vadd.f32 %v1464, %v1819
        %v1821 = vpop.f32.mrb[0].mxu0
        %v1822 = vadd.f32 %v1468, %v1821
        %1823 = vdwg.mxu0
        %v1824 = vpack.c.bf16 %v968, %v966
        %v1825 = vpack.c.bf16 %v969, %v967
        %v1826 = vpack.c.bf16 %v972, %v970
        %v1827 = vpack.c.bf16 %v973, %v971
        %v1828 = vpack.c.bf16 %v976, %v974
        %v1829 = vpack.c.bf16 %v977, %v975
        %v1830 = vpack.c.bf16 %v980, %v978
        %v1831 = vpack.c.bf16 %v981, %v979
        %v1832 = vpack.c.bf16 %v984, %v982
        %v1833 = vpack.c.bf16 %v985, %v983
        %v1834 = vpack.c.bf16 %v988, %v986
        %v1835 = vpack.c.bf16 %v989, %v987
        %v1836 = vpack.c.bf16 %v992, %v990
        %v1837 = vpack.c.bf16 %v993, %v991
        %v1838 = vpack.c.bf16 %v996, %v994
        %v1839 = vpack.c.bf16 %v997, %v995
        %v1840 = vpack.c.bf16 %v1000, %v998
        %v1841 = vpack.c.bf16 %v1001, %v999
        %v1842 = vpack.c.bf16 %v1004, %v1002
        %v1843 = vpack.c.bf16 %v1005, %v1003
        %v1844 = vpack.c.bf16 %v1008, %v1006
        %v1845 = vpack.c.bf16 %v1009, %v1007
        %v1846 = vpack.c.bf16 %v1012, %v1010
        %v1847 = vpack.c.bf16 %v1013, %v1011
        %v1848 = vpack.c.bf16 %v1016, %v1014
        %v1849 = vpack.c.bf16 %v1017, %v1015
        %v1850 = vpack.c.bf16 %v1020, %v1018
        %v1851 = vpack.c.bf16 %v1021, %v1019
        %v1852 = vpack.c.bf16 %v1024, %v1022
        %v1853 = vpack.c.bf16 %v1025, %v1023
        %v1854 = vpack.c.bf16 %v1028, %v1026
        %v1855 = vpack.c.bf16 %v1029, %v1027
        %v1856 = vpack.c.bf16 %v1273, %v1269
        %v1857 = vpack.c.bf16 %v1275, %v1271
        %v1858 = vpack.c.bf16 %v1283, %v1279
        %v1859 = vpack.c.bf16 %v1285, %v1281
        %v1860 = vpack.c.bf16 %v1293, %v1289
        %v1861 = vpack.c.bf16 %v1295, %v1291
        %v1862 = vpack.c.bf16 %v1303, %v1299
        %v1863 = vpack.c.bf16 %v1305, %v1301
        %v1864 = vpack.c.bf16 %v1313, %v1309
        %v1865 = vpack.c.bf16 %v1315, %v1311
        %v1866 = vpack.c.bf16 %v1323, %v1319
        %v1867 = vpack.c.bf16 %v1325, %v1321
        %v1868 = vpack.c.bf16 %v1333, %v1329
        %v1869 = vpack.c.bf16 %v1335, %v1331
        %v1870 = vpack.c.bf16 %v1343, %v1339
        %v1871 = vpack.c.bf16 %v1345, %v1341
        %v1872 = vpack.c.bf16 %v1353, %v1349
        %v1873 = vpack.c.bf16 %v1355, %v1351
        %v1874 = vpack.c.bf16 %v1363, %v1359
        %v1875 = vpack.c.bf16 %v1365, %v1361
        %v1876 = vpack.c.bf16 %v1373, %v1369
        %v1877 = vpack.c.bf16 %v1375, %v1371
        %v1878 = vpack.c.bf16 %v1383, %v1379
        %v1879 = vpack.c.bf16 %v1385, %v1381
        %v1880 = vpack.c.bf16 %v1393, %v1389
        %v1881 = vpack.c.bf16 %v1395, %v1391
        %v1882 = vpack.c.bf16 %v1403, %v1399
        %v1883 = vpack.c.bf16 %v1405, %v1401
        %v1884 = vpack.c.bf16 %v1413, %v1409
        %v1885 = vpack.c.bf16 %v1415, %v1411
        %v1886 = vpack.c.bf16 %v1423, %v1419
        %v1887 = vpack.c.bf16 %v1425, %v1421
        %v1888 = vpack.c.bf16 %v1670, %v1666
        %v1889 = vpack.c.bf16 %v1672, %v1668
        %v1890 = vpack.c.bf16 %v1680, %v1676
        %v1891 = vpack.c.bf16 %v1682, %v1678
        %v1892 = vpack.c.bf16 %v1690, %v1686
        %v1893 = vpack.c.bf16 %v1692, %v1688
        %v1894 = vpack.c.bf16 %v1700, %v1696
        %v1895 = vpack.c.bf16 %v1702, %v1698
        %v1896 = vpack.c.bf16 %v1710, %v1706
        %v1897 = vpack.c.bf16 %v1712, %v1708
        %v1898 = vpack.c.bf16 %v1720, %v1716
        %v1899 = vpack.c.bf16 %v1722, %v1718
        %v1900 = vpack.c.bf16 %v1730, %v1726
        %v1901 = vpack.c.bf16 %v1732, %v1728
        %v1902 = vpack.c.bf16 %v1740, %v1736
        %v1903 = vpack.c.bf16 %v1742, %v1738
        %v1904 = vpack.c.bf16 %v1750, %v1746
        %v1905 = vpack.c.bf16 %v1752, %v1748
        %v1906 = vpack.c.bf16 %v1760, %v1756
        %v1907 = vpack.c.bf16 %v1762, %v1758
        %v1908 = vpack.c.bf16 %v1770, %v1766
        %v1909 = vpack.c.bf16 %v1772, %v1768
        %v1910 = vpack.c.bf16 %v1780, %v1776
        %v1911 = vpack.c.bf16 %v1782, %v1778
        %v1912 = vpack.c.bf16 %v1790, %v1786
        %v1913 = vpack.c.bf16 %v1792, %v1788
        %v1914 = vpack.c.bf16 %v1800, %v1796
        %v1915 = vpack.c.bf16 %v1802, %v1798
        %v1916 = vpack.c.bf16 %v1810, %v1806
        %v1917 = vpack.c.bf16 %v1812, %v1808
        %v1918 = vpack.c.bf16 %v1820, %v1816
        %v1919 = vpack.c.bf16 %v1822, %v1818
        %v1936 = vunpack.c.l.b16 %v1824
        %v1937 = vunpack.c.h.b16 %v1824
        %v1938 = vunpack.c.l.b16 %v1826
        %v1939 = vunpack.c.h.b16 %v1826
        %v1940 = vunpack.c.l.b16 %v1828
        %v1941 = vunpack.c.h.b16 %v1828
        %v1942 = vunpack.c.l.b16 %v1830
        %v1943 = vunpack.c.h.b16 %v1830
        %v1944 = vunpack.c.l.b16 %v1832
        %v1945 = vunpack.c.h.b16 %v1832
        %v1946 = vunpack.c.l.b16 %v1834
        %v1947 = vunpack.c.h.b16 %v1834
        %v1948 = vunpack.c.l.b16 %v1836
        %v1949 = vunpack.c.h.b16 %v1836
        %v1950 = vunpack.c.l.b16 %v1838
        %v1951 = vunpack.c.h.b16 %v1838
        %v1952 = vunpack.c.l.b16 %v1840
        %v1953 = vunpack.c.h.b16 %v1840
        %v1954 = vunpack.c.l.b16 %v1842
        %v1955 = vunpack.c.h.b16 %v1842
        %v1956 = vunpack.c.l.b16 %v1844
        %v1957 = vunpack.c.h.b16 %v1844
        %v1958 = vunpack.c.l.b16 %v1846
        %v1959 = vunpack.c.h.b16 %v1846
        %v1960 = vunpack.c.l.b16 %v1848
        %v1961 = vunpack.c.h.b16 %v1848
        %v1962 = vunpack.c.l.b16 %v1850
        %v1963 = vunpack.c.h.b16 %v1850
        %v1964 = vunpack.c.l.b16 %v1852
        %v1965 = vunpack.c.h.b16 %v1852
        %v1966 = vunpack.c.l.b16 %v1854
        %v1967 = vunpack.c.h.b16 %v1854
        %v1968 = vpack.c.b16 %v1936, %v1936
        %v1969 = vpack.c.b16 %v1937, %v1937
        %v1970 = vpack.c.b16 %v1938, %v1938
        %v1971 = vpack.c.b16 %v1939, %v1939
        %v1972 = vpack.c.b16 %v1940, %v1940
        %v1973 = vpack.c.b16 %v1941, %v1941
        %v1974 = vpack.c.b16 %v1942, %v1942
        %v1975 = vpack.c.b16 %v1943, %v1943
        %v1976 = vpack.c.b16 %v1944, %v1944
        %v1977 = vpack.c.b16 %v1945, %v1945
        %v1978 = vpack.c.b16 %v1946, %v1946
        %v1979 = vpack.c.b16 %v1947, %v1947
        %v1980 = vpack.c.b16 %v1948, %v1948
        %v1981 = vpack.c.b16 %v1949, %v1949
        %v1982 = vpack.c.b16 %v1950, %v1950
        %v1983 = vpack.c.b16 %v1951, %v1951
        %v1984 = vpack.c.b16 %v1952, %v1952
        %v1985 = vpack.c.b16 %v1953, %v1953
        %v1986 = vpack.c.b16 %v1954, %v1954
        %v1987 = vpack.c.b16 %v1955, %v1955
        %v1988 = vpack.c.b16 %v1956, %v1956
        %v1989 = vpack.c.b16 %v1957, %v1957
        %v1990 = vpack.c.b16 %v1958, %v1958
        %v1991 = vpack.c.b16 %v1959, %v1959
        %v1992 = vpack.c.b16 %v1960, %v1960
        %v1993 = vpack.c.b16 %v1961, %v1961
        %v1994 = vpack.c.b16 %v1962, %v1962
        %v1995 = vpack.c.b16 %v1963, %v1963
        %v1996 = vpack.c.b16 %v1964, %v1964
        %v1997 = vpack.c.b16 %v1965, %v1965
        %v1998 = vpack.c.b16 %v1966, %v1966
        %v1999 = vpack.c.b16 %v1967, %v1967
        %vm2032 = vcmask 519168
        %2033 = vst.msk [vmem:[%s451] sm:$0xf] %vm2032, %v1968
        %2034 = vst.msk [vmem:[%s451 + $0x4] sm:$0xf] %vm2032, %v1969
        %2035 = vst.msk [vmem:[%s451 + $0x8] sm:$0xf] %vm2032, %v1970
        %2036 = vst.msk [vmem:[%s451 + $0xc] sm:$0xf] %vm2032, %v1971
        %2037 = vst.msk [vmem:[%s451 + $0x10] sm:$0xf] %vm2032, %v1972
        %2038 = vst.msk [vmem:[%s451 + $0x14] sm:$0xf] %vm2032, %v1973
        %2039 = vst.msk [vmem:[%s451 + $0x18] sm:$0xf] %vm2032, %v1974
        %2040 = vst.msk [vmem:[%s451 + $0x1c] sm:$0xf] %vm2032, %v1975
        %2041 = vst.msk [vmem:[%s451 + $0x20] sm:$0xf] %vm2032, %v1976
        %2042 = vst.msk [vmem:[%s451 + $0x24] sm:$0xf] %vm2032, %v1977
        %2043 = vst.msk [vmem:[%s451 + $0x28] sm:$0xf] %vm2032, %v1978
        %2044 = vst.msk [vmem:[%s451 + $0x2c] sm:$0xf] %vm2032, %v1979
        %2045 = vst.msk [vmem:[%s451 + $0x30] sm:$0xf] %vm2032, %v1980
        %2046 = vst.msk [vmem:[%s451 + $0x34] sm:$0xf] %vm2032, %v1981
        %2047 = vst.msk [vmem:[%s451 + $0x38] sm:$0xf] %vm2032, %v1982
        %2048 = vst.msk [vmem:[%s451 + $0x3c] sm:$0xf] %vm2032, %v1983
        %2049 = vst.msk [vmem:[%s451 + $0x40] sm:$0xf] %vm2032, %v1984
        %2050 = vst.msk [vmem:[%s451 + $0x44] sm:$0xf] %vm2032, %v1985
        %2051 = vst.msk [vmem:[%s451 + $0x48] sm:$0xf] %vm2032, %v1986
        %2052 = vst.msk [vmem:[%s451 + $0x4c] sm:$0xf] %vm2032, %v1987
        %2053 = vst.msk [vmem:[%s451 + $0x50] sm:$0xf] %vm2032, %v1988
        %2054 = vst.msk [vmem:[%s451 + $0x54] sm:$0xf] %vm2032, %v1989
        %2055 = vst.msk [vmem:[%s451 + $0x58] sm:$0xf] %vm2032, %v1990
        %2056 = vst.msk [vmem:[%s451 + $0x5c] sm:$0xf] %vm2032, %v1991
        %2057 = vst.msk [vmem:[%s451 + $0x60] sm:$0xf] %vm2032, %v1992
        %2058 = vst.msk [vmem:[%s451 + $0x64] sm:$0xf] %vm2032, %v1993
        %2059 = vst.msk [vmem:[%s451 + $0x68] sm:$0xf] %vm2032, %v1994
        %2060 = vst.msk [vmem:[%s451 + $0x6c] sm:$0xf] %vm2032, %v1995
        %2061 = vst.msk [vmem:[%s451 + $0x70] sm:$0xf] %vm2032, %v1996
        %2062 = vst.msk [vmem:[%s451 + $0x74] sm:$0xf] %vm2032, %v1997
        %2063 = vst.msk [vmem:[%s451 + $0x78] sm:$0xf] %vm2032, %v1998
        %2064 = vst.msk [vmem:[%s451 + $0x7c] sm:$0xf] %vm2032, %v1999
        %v2081 = vunpack.c.l.b16 %v1856
        %v2082 = vunpack.c.h.b16 %v1856
        %v2083 = vunpack.c.l.b16 %v1858
        %v2084 = vunpack.c.h.b16 %v1858
        %v2085 = vunpack.c.l.b16 %v1860
        %v2086 = vunpack.c.h.b16 %v1860
        %v2087 = vunpack.c.l.b16 %v1862
        %v2088 = vunpack.c.h.b16 %v1862
        %v2089 = vunpack.c.l.b16 %v1864
        %v2090 = vunpack.c.h.b16 %v1864
        %v2091 = vunpack.c.l.b16 %v1866
        %v2092 = vunpack.c.h.b16 %v1866
        %v2093 = vunpack.c.l.b16 %v1868
        %v2094 = vunpack.c.h.b16 %v1868
        %v2095 = vunpack.c.l.b16 %v1870
        %v2096 = vunpack.c.h.b16 %v1870
        %v2097 = vunpack.c.l.b16 %v1872
        %v2098 = vunpack.c.h.b16 %v1872
        %v2099 = vunpack.c.l.b16 %v1874
        %v2100 = vunpack.c.h.b16 %v1874
        %v2101 = vunpack.c.l.b16 %v1876
        %v2102 = vunpack.c.h.b16 %v1876
        %v2103 = vunpack.c.l.b16 %v1878
        %v2104 = vunpack.c.h.b16 %v1878
        %v2105 = vunpack.c.l.b16 %v1880
        %v2106 = vunpack.c.h.b16 %v1880
        %v2107 = vunpack.c.l.b16 %v1882
        %v2108 = vunpack.c.h.b16 %v1882
        %v2109 = vunpack.c.l.b16 %v1884
        %v2110 = vunpack.c.h.b16 %v1884
        %v2111 = vunpack.c.l.b16 %v1886
        %v2112 = vunpack.c.h.b16 %v1886
        %v2113 = vpack.c.b16 %v2081, %v2081
        %v2114 = vpack.c.b16 %v2082, %v2082
        %v2115 = vpack.c.b16 %v2083, %v2083
        %v2116 = vpack.c.b16 %v2084, %v2084
        %v2117 = vpack.c.b16 %v2085, %v2085
        %v2118 = vpack.c.b16 %v2086, %v2086
        %v2119 = vpack.c.b16 %v2087, %v2087
        %v2120 = vpack.c.b16 %v2088, %v2088
        %v2121 = vpack.c.b16 %v2089, %v2089
        %v2122 = vpack.c.b16 %v2090, %v2090
        %v2123 = vpack.c.b16 %v2091, %v2091
        %v2124 = vpack.c.b16 %v2092, %v2092
        %v2125 = vpack.c.b16 %v2093, %v2093
        %v2126 = vpack.c.b16 %v2094, %v2094
        %v2127 = vpack.c.b16 %v2095, %v2095
        %v2128 = vpack.c.b16 %v2096, %v2096
        %v2129 = vpack.c.b16 %v2097, %v2097
        %v2130 = vpack.c.b16 %v2098, %v2098
        %v2131 = vpack.c.b16 %v2099, %v2099
        %v2132 = vpack.c.b16 %v2100, %v2100
        %v2133 = vpack.c.b16 %v2101, %v2101
        %v2134 = vpack.c.b16 %v2102, %v2102
        %v2135 = vpack.c.b16 %v2103, %v2103
        %v2136 = vpack.c.b16 %v2104, %v2104
        %v2137 = vpack.c.b16 %v2105, %v2105
        %v2138 = vpack.c.b16 %v2106, %v2106
        %v2139 = vpack.c.b16 %v2107, %v2107
        %v2140 = vpack.c.b16 %v2108, %v2108
        %v2141 = vpack.c.b16 %v2109, %v2109
        %v2142 = vpack.c.b16 %v2110, %v2110
        %v2143 = vpack.c.b16 %v2111, %v2111
        %v2144 = vpack.c.b16 %v2112, %v2112
        %2177 = vst.msk [vmem:[%s461] sm:$0xf] %vm2032, %v2113
        %2178 = vst.msk [vmem:[%s461 + $0x4] sm:$0xf] %vm2032, %v2114
        %2179 = vst.msk [vmem:[%s461 + $0x8] sm:$0xf] %vm2032, %v2115
        %2180 = vst.msk [vmem:[%s461 + $0xc] sm:$0xf] %vm2032, %v2116
        %2181 = vst.msk [vmem:[%s461 + $0x10] sm:$0xf] %vm2032, %v2117
        %2182 = vst.msk [vmem:[%s461 + $0x14] sm:$0xf] %vm2032, %v2118
        %2183 = vst.msk [vmem:[%s461 + $0x18] sm:$0xf] %vm2032, %v2119
        %2184 = vst.msk [vmem:[%s461 + $0x1c] sm:$0xf] %vm2032, %v2120
        %2185 = vst.msk [vmem:[%s461 + $0x20] sm:$0xf] %vm2032, %v2121
        %2186 = vst.msk [vmem:[%s461 + $0x24] sm:$0xf] %vm2032, %v2122
        %2187 = vst.msk [vmem:[%s461 + $0x28] sm:$0xf] %vm2032, %v2123
        %2188 = vst.msk [vmem:[%s461 + $0x2c] sm:$0xf] %vm2032, %v2124
        %2189 = vst.msk [vmem:[%s461 + $0x30] sm:$0xf] %vm2032, %v2125
        %2190 = vst.msk [vmem:[%s461 + $0x34] sm:$0xf] %vm2032, %v2126
        %2191 = vst.msk [vmem:[%s461 + $0x38] sm:$0xf] %vm2032, %v2127
        %2192 = vst.msk [vmem:[%s461 + $0x3c] sm:$0xf] %vm2032, %v2128
        %2193 = vst.msk [vmem:[%s461 + $0x40] sm:$0xf] %vm2032, %v2129
        %2194 = vst.msk [vmem:[%s461 + $0x44] sm:$0xf] %vm2032, %v2130
        %2195 = vst.msk [vmem:[%s461 + $0x48] sm:$0xf] %vm2032, %v2131
        %2196 = vst.msk [vmem:[%s461 + $0x4c] sm:$0xf] %vm2032, %v2132
        %2197 = vst.msk [vmem:[%s461 + $0x50] sm:$0xf] %vm2032, %v2133
        %2198 = vst.msk [vmem:[%s461 + $0x54] sm:$0xf] %vm2032, %v2134
        %2199 = vst.msk [vmem:[%s461 + $0x58] sm:$0xf] %vm2032, %v2135
        %2200 = vst.msk [vmem:[%s461 + $0x5c] sm:$0xf] %vm2032, %v2136
        %2201 = vst.msk [vmem:[%s461 + $0x60] sm:$0xf] %vm2032, %v2137
        %2202 = vst.msk [vmem:[%s461 + $0x64] sm:$0xf] %vm2032, %v2138
        %2203 = vst.msk [vmem:[%s461 + $0x68] sm:$0xf] %vm2032, %v2139
        %2204 = vst.msk [vmem:[%s461 + $0x6c] sm:$0xf] %vm2032, %v2140
        %2205 = vst.msk [vmem:[%s461 + $0x70] sm:$0xf] %vm2032, %v2141
        %2206 = vst.msk [vmem:[%s461 + $0x74] sm:$0xf] %vm2032, %v2142
        %2207 = vst.msk [vmem:[%s461 + $0x78] sm:$0xf] %vm2032, %v2143
        %2208 = vst.msk [vmem:[%s461 + $0x7c] sm:$0xf] %vm2032, %v2144
        %v2225 = vunpack.c.l.b16 %v1888
        %v2226 = vunpack.c.h.b16 %v1888
        %v2227 = vunpack.c.l.b16 %v1890
        %v2228 = vunpack.c.h.b16 %v1890
        %v2229 = vunpack.c.l.b16 %v1892
        %v2230 = vunpack.c.h.b16 %v1892
        %v2231 = vunpack.c.l.b16 %v1894
        %v2232 = vunpack.c.h.b16 %v1894
        %v2233 = vunpack.c.l.b16 %v1896
        %v2234 = vunpack.c.h.b16 %v1896
        %v2235 = vunpack.c.l.b16 %v1898
        %v2236 = vunpack.c.h.b16 %v1898
        %v2237 = vunpack.c.l.b16 %v1900
        %v2238 = vunpack.c.h.b16 %v1900
        %v2239 = vunpack.c.l.b16 %v1902
        %v2240 = vunpack.c.h.b16 %v1902
        %v2241 = vunpack.c.l.b16 %v1904
        %v2242 = vunpack.c.h.b16 %v1904
        %v2243 = vunpack.c.l.b16 %v1906
        %v2244 = vunpack.c.h.b16 %v1906
        %v2245 = vunpack.c.l.b16 %v1908
        %v2246 = vunpack.c.h.b16 %v1908
        %v2247 = vunpack.c.l.b16 %v1910
        %v2248 = vunpack.c.h.b16 %v1910
        %v2249 = vunpack.c.l.b16 %v1912
        %v2250 = vunpack.c.h.b16 %v1912
        %v2251 = vunpack.c.l.b16 %v1914
        %v2252 = vunpack.c.h.b16 %v1914
        %v2253 = vunpack.c.l.b16 %v1916
        %v2254 = vunpack.c.h.b16 %v1916
        %v2255 = vunpack.c.l.b16 %v1918
        %v2256 = vunpack.c.h.b16 %v1918
        %v2257 = vpack.c.b16 %v2225, %v2225
        %v2258 = vpack.c.b16 %v2226, %v2226
        %v2259 = vpack.c.b16 %v2227, %v2227
        %v2260 = vpack.c.b16 %v2228, %v2228
        %v2261 = vpack.c.b16 %v2229, %v2229
        %v2262 = vpack.c.b16 %v2230, %v2230
        %v2263 = vpack.c.b16 %v2231, %v2231
        %v2264 = vpack.c.b16 %v2232, %v2232
        %v2265 = vpack.c.b16 %v2233, %v2233
        %v2266 = vpack.c.b16 %v2234, %v2234
        %v2267 = vpack.c.b16 %v2235, %v2235
        %v2268 = vpack.c.b16 %v2236, %v2236
        %v2269 = vpack.c.b16 %v2237, %v2237
        %v2270 = vpack.c.b16 %v2238, %v2238
        %v2271 = vpack.c.b16 %v2239, %v2239
        %v2272 = vpack.c.b16 %v2240, %v2240
        %v2273 = vpack.c.b16 %v2241, %v2241
        %v2274 = vpack.c.b16 %v2242, %v2242
        %v2275 = vpack.c.b16 %v2243, %v2243
        %v2276 = vpack.c.b16 %v2244, %v2244
        %v2277 = vpack.c.b16 %v2245, %v2245
        %v2278 = vpack.c.b16 %v2246, %v2246
        %v2279 = vpack.c.b16 %v2247, %v2247
        %v2280 = vpack.c.b16 %v2248, %v2248
        %v2281 = vpack.c.b16 %v2249, %v2249
        %v2282 = vpack.c.b16 %v2250, %v2250
        %v2283 = vpack.c.b16 %v2251, %v2251
        %v2284 = vpack.c.b16 %v2252, %v2252
        %v2285 = vpack.c.b16 %v2253, %v2253
        %v2286 = vpack.c.b16 %v2254, %v2254
        %v2287 = vpack.c.b16 %v2255, %v2255
        %v2288 = vpack.c.b16 %v2256, %v2256
        %2321 = vst.msk [vmem:[%s471] sm:$0xf] %vm2032, %v2257
        %2322 = vst.msk [vmem:[%s471 + $0x4] sm:$0xf] %vm2032, %v2258
        %2323 = vst.msk [vmem:[%s471 + $0x8] sm:$0xf] %vm2032, %v2259
        %2324 = vst.msk [vmem:[%s471 + $0xc] sm:$0xf] %vm2032, %v2260
        %2325 = vst.msk [vmem:[%s471 + $0x10] sm:$0xf] %vm2032, %v2261
        %2326 = vst.msk [vmem:[%s471 + $0x14] sm:$0xf] %vm2032, %v2262
        %2327 = vst.msk [vmem:[%s471 + $0x18] sm:$0xf] %vm2032, %v2263
        %2328 = vst.msk [vmem:[%s471 + $0x1c] sm:$0xf] %vm2032, %v2264
        %2329 = vst.msk [vmem:[%s471 + $0x20] sm:$0xf] %vm2032, %v2265
        %2330 = vst.msk [vmem:[%s471 + $0x24] sm:$0xf] %vm2032, %v2266
        %2331 = vst.msk [vmem:[%s471 + $0x28] sm:$0xf] %vm2032, %v2267
        %2332 = vst.msk [vmem:[%s471 + $0x2c] sm:$0xf] %vm2032, %v2268
        %2333 = vst.msk [vmem:[%s471 + $0x30] sm:$0xf] %vm2032, %v2269
        %2334 = vst.msk [vmem:[%s471 + $0x34] sm:$0xf] %vm2032, %v2270
        %2335 = vst.msk [vmem:[%s471 + $0x38] sm:$0xf] %vm2032, %v2271
        %2336 = vst.msk [vmem:[%s471 + $0x3c] sm:$0xf] %vm2032, %v2272
        %2337 = vst.msk [vmem:[%s471 + $0x40] sm:$0xf] %vm2032, %v2273
        %2338 = vst.msk [vmem:[%s471 + $0x44] sm:$0xf] %vm2032, %v2274
        %2339 = vst.msk [vmem:[%s471 + $0x48] sm:$0xf] %vm2032, %v2275
        %2340 = vst.msk [vmem:[%s471 + $0x4c] sm:$0xf] %vm2032, %v2276
        %2341 = vst.msk [vmem:[%s471 + $0x50] sm:$0xf] %vm2032, %v2277
        %2342 = vst.msk [vmem:[%s471 + $0x54] sm:$0xf] %vm2032, %v2278
        %2343 = vst.msk [vmem:[%s471 + $0x58] sm:$0xf] %vm2032, %v2279
        %2344 = vst.msk [vmem:[%s471 + $0x5c] sm:$0xf] %vm2032, %v2280
        %2345 = vst.msk [vmem:[%s471 + $0x60] sm:$0xf] %vm2032, %v2281
        %2346 = vst.msk [vmem:[%s471 + $0x64] sm:$0xf] %vm2032, %v2282
        %2347 = vst.msk [vmem:[%s471 + $0x68] sm:$0xf] %vm2032, %v2283
        %2348 = vst.msk [vmem:[%s471 + $0x6c] sm:$0xf] %vm2032, %v2284
        %2349 = vst.msk [vmem:[%s471 + $0x70] sm:$0xf] %vm2032, %v2285
        %2350 = vst.msk [vmem:[%s471 + $0x74] sm:$0xf] %vm2032, %v2286
        %2351 = vst.msk [vmem:[%s471 + $0x78] sm:$0xf] %vm2032, %v2287
        %2352 = vst.msk [vmem:[%s471 + $0x7c] sm:$0xf] %vm2032, %v2288
        %2353 = vrot.lane.b32.xlu0 %v1968, 64
        %v2354 = vpop.permute.xlu0 %2353
        %2355 = vrot.lane.b32.xlu0 %v1969, 64
        %v2356 = vpop.permute.xlu0 %2355
        %2357 = vrot.lane.b32.xlu0 %v1970, 64
        %v2358 = vpop.permute.xlu0 %2357
        %2359 = vrot.lane.b32.xlu0 %v1971, 64
        %v2360 = vpop.permute.xlu0 %2359
        %2361 = vrot.lane.b32.xlu0 %v1972, 64
        %v2362 = vpop.permute.xlu0 %2361
        %2363 = vrot.lane.b32.xlu0 %v1973, 64
        %v2364 = vpop.permute.xlu0 %2363
        %2365 = vrot.lane.b32.xlu0 %v1974, 64
        %v2366 = vpop.permute.xlu0 %2365
        %2367 = vrot.lane.b32.xlu0 %v1975, 64
        %v2368 = vpop.permute.xlu0 %2367
        %2369 = vrot.lane.b32.xlu0 %v1976, 64
        %v2370 = vpop.permute.xlu0 %2369
        %2371 = vrot.lane.b32.xlu0 %v1977, 64
        %v2372 = vpop.permute.xlu0 %2371
        %2373 = vrot.lane.b32.xlu0 %v1978, 64
        %v2374 = vpop.permute.xlu0 %2373
        %2375 = vrot.lane.b32.xlu0 %v1979, 64
        %v2376 = vpop.permute.xlu0 %2375
        %2377 = vrot.lane.b32.xlu0 %v1980, 64
        %v2378 = vpop.permute.xlu0 %2377
        %2379 = vrot.lane.b32.xlu0 %v1981, 64
        %v2380 = vpop.permute.xlu0 %2379
        %2381 = vrot.lane.b32.xlu0 %v1982, 64
        %v2382 = vpop.permute.xlu0 %2381
        %2383 = vrot.lane.b32.xlu0 %v1983, 64
        %v2384 = vpop.permute.xlu0 %2383
        %2385 = vrot.lane.b32.xlu0 %v1984, 64
        %v2386 = vpop.permute.xlu0 %2385
        %2387 = vrot.lane.b32.xlu0 %v1985, 64
        %v2388 = vpop.permute.xlu0 %2387
        %2389 = vrot.lane.b32.xlu0 %v1986, 64
        %v2390 = vpop.permute.xlu0 %2389
        %2391 = vrot.lane.b32.xlu0 %v1987, 64
        %v2392 = vpop.permute.xlu0 %2391
        %2393 = vrot.lane.b32.xlu0 %v1988, 64
        %v2394 = vpop.permute.xlu0 %2393
        %2395 = vrot.lane.b32.xlu0 %v1989, 64
        %v2396 = vpop.permute.xlu0 %2395
        %2397 = vrot.lane.b32.xlu0 %v1990, 64
        %v2398 = vpop.permute.xlu0 %2397
        %2399 = vrot.lane.b32.xlu0 %v1991, 64
        %v2400 = vpop.permute.xlu0 %2399
        %2401 = vrot.lane.b32.xlu0 %v1992, 64
        %v2402 = vpop.permute.xlu0 %2401
        %2403 = vrot.lane.b32.xlu0 %v1993, 64
        %v2404 = vpop.permute.xlu0 %2403
        %2405 = vrot.lane.b32.xlu0 %v1994, 64
        %v2406 = vpop.permute.xlu0 %2405
        %2407 = vrot.lane.b32.xlu0 %v1995, 64
        %v2408 = vpop.permute.xlu0 %2407
        %2409 = vrot.lane.b32.xlu0 %v1996, 64
        %v2410 = vpop.permute.xlu0 %2409
        %2411 = vrot.lane.b32.xlu0 %v1997, 64
        %v2412 = vpop.permute.xlu0 %2411
        %2413 = vrot.lane.b32.xlu0 %v1998, 64
        %v2414 = vpop.permute.xlu0 %2413
        %2415 = vrot.lane.b32.xlu0 %v1999, 64
        %v2416 = vpop.permute.xlu0 %2415
        %s2449 = scalar_lea.vmem %s451, 128
        %2450 = vst.msk [vmem:[%s2449] sm:$0xf] %vm2032, %v2354
        %2451 = vst.msk [vmem:[%s2449 + $0x4] sm:$0xf] %vm2032, %v2356
        %2452 = vst.msk [vmem:[%s2449 + $0x8] sm:$0xf] %vm2032, %v2358
        %2453 = vst.msk [vmem:[%s2449 + $0xc] sm:$0xf] %vm2032, %v2360
        %2454 = vst.msk [vmem:[%s2449 + $0x10] sm:$0xf] %vm2032, %v2362
        %2455 = vst.msk [vmem:[%s2449 + $0x14] sm:$0xf] %vm2032, %v2364
        %2456 = vst.msk [vmem:[%s2449 + $0x18] sm:$0xf] %vm2032, %v2366
        %2457 = vst.msk [vmem:[%s2449 + $0x1c] sm:$0xf] %vm2032, %v2368
        %2458 = vst.msk [vmem:[%s2449 + $0x20] sm:$0xf] %vm2032, %v2370
        %2459 = vst.msk [vmem:[%s2449 + $0x24] sm:$0xf] %vm2032, %v2372
        %2460 = vst.msk [vmem:[%s2449 + $0x28] sm:$0xf] %vm2032, %v2374
        %2461 = vst.msk [vmem:[%s2449 + $0x2c] sm:$0xf] %vm2032, %v2376
        %2462 = vst.msk [vmem:[%s2449 + $0x30] sm:$0xf] %vm2032, %v2378
        %2463 = vst.msk [vmem:[%s2449 + $0x34] sm:$0xf] %vm2032, %v2380
        %2464 = vst.msk [vmem:[%s2449 + $0x38] sm:$0xf] %vm2032, %v2382
        %2465 = vst.msk [vmem:[%s2449 + $0x3c] sm:$0xf] %vm2032, %v2384
        %2466 = vst.msk [vmem:[%s2449 + $0x40] sm:$0xf] %vm2032, %v2386
        %2467 = vst.msk [vmem:[%s2449 + $0x44] sm:$0xf] %vm2032, %v2388
        %2468 = vst.msk [vmem:[%s2449 + $0x48] sm:$0xf] %vm2032, %v2390
        %2469 = vst.msk [vmem:[%s2449 + $0x4c] sm:$0xf] %vm2032, %v2392
        %2470 = vst.msk [vmem:[%s2449 + $0x50] sm:$0xf] %vm2032, %v2394
        %2471 = vst.msk [vmem:[%s2449 + $0x54] sm:$0xf] %vm2032, %v2396
        %2472 = vst.msk [vmem:[%s2449 + $0x58] sm:$0xf] %vm2032, %v2398
        %2473 = vst.msk [vmem:[%s2449 + $0x5c] sm:$0xf] %vm2032, %v2400
        %2474 = vst.msk [vmem:[%s2449 + $0x60] sm:$0xf] %vm2032, %v2402
        %2475 = vst.msk [vmem:[%s2449 + $0x64] sm:$0xf] %vm2032, %v2404
        %2476 = vst.msk [vmem:[%s2449 + $0x68] sm:$0xf] %vm2032, %v2406
        %2477 = vst.msk [vmem:[%s2449 + $0x6c] sm:$0xf] %vm2032, %v2408
        %2478 = vst.msk [vmem:[%s2449 + $0x70] sm:$0xf] %vm2032, %v2410
        %2479 = vst.msk [vmem:[%s2449 + $0x74] sm:$0xf] %vm2032, %v2412
        %2480 = vst.msk [vmem:[%s2449 + $0x78] sm:$0xf] %vm2032, %v2414
        %2481 = vst.msk [vmem:[%s2449 + $0x7c] sm:$0xf] %vm2032, %v2416
        %2482 = vrot.lane.b32.xlu0 %v2113, 64
        %v2483 = vpop.permute.xlu0 %2482
        %2484 = vrot.lane.b32.xlu0 %v2114, 64
        %v2485 = vpop.permute.xlu0 %2484
        %2486 = vrot.lane.b32.xlu0 %v2115, 64
        %v2487 = vpop.permute.xlu0 %2486
        %2488 = vrot.lane.b32.xlu0 %v2116, 64
        %v2489 = vpop.permute.xlu0 %2488
        %2490 = vrot.lane.b32.xlu0 %v2117, 64
        %v2491 = vpop.permute.xlu0 %2490
        %2492 = vrot.lane.b32.xlu0 %v2118, 64
        %v2493 = vpop.permute.xlu0 %2492
        %2494 = vrot.lane.b32.xlu0 %v2119, 64
        %v2495 = vpop.permute.xlu0 %2494
        %2496 = vrot.lane.b32.xlu0 %v2120, 64
        %v2497 = vpop.permute.xlu0 %2496
        %2498 = vrot.lane.b32.xlu0 %v2121, 64
        %v2499 = vpop.permute.xlu0 %2498
        %2500 = vrot.lane.b32.xlu0 %v2122, 64
        %v2501 = vpop.permute.xlu0 %2500
        %2502 = vrot.lane.b32.xlu0 %v2123, 64
        %v2503 = vpop.permute.xlu0 %2502
        %2504 = vrot.lane.b32.xlu0 %v2124, 64
        %v2505 = vpop.permute.xlu0 %2504
        %2506 = vrot.lane.b32.xlu0 %v2125, 64
        %v2507 = vpop.permute.xlu0 %2506
        %2508 = vrot.lane.b32.xlu0 %v2126, 64
        %v2509 = vpop.permute.xlu0 %2508
        %2510 = vrot.lane.b32.xlu0 %v2127, 64
        %v2511 = vpop.permute.xlu0 %2510
        %2512 = vrot.lane.b32.xlu0 %v2128, 64
        %v2513 = vpop.permute.xlu0 %2512
        %2514 = vrot.lane.b32.xlu0 %v2129, 64
        %v2515 = vpop.permute.xlu0 %2514
        %2516 = vrot.lane.b32.xlu0 %v2130, 64
        %v2517 = vpop.permute.xlu0 %2516
        %2518 = vrot.lane.b32.xlu0 %v2131, 64
        %v2519 = vpop.permute.xlu0 %2518
        %2520 = vrot.lane.b32.xlu0 %v2132, 64
        %v2521 = vpop.permute.xlu0 %2520
        %2522 = vrot.lane.b32.xlu0 %v2133, 64
        %v2523 = vpop.permute.xlu0 %2522
        %2524 = vrot.lane.b32.xlu0 %v2134, 64
        %v2525 = vpop.permute.xlu0 %2524
        %2526 = vrot.lane.b32.xlu0 %v2135, 64
        %v2527 = vpop.permute.xlu0 %2526
        %2528 = vrot.lane.b32.xlu0 %v2136, 64
        %v2529 = vpop.permute.xlu0 %2528
        %2530 = vrot.lane.b32.xlu0 %v2137, 64
        %v2531 = vpop.permute.xlu0 %2530
        %2532 = vrot.lane.b32.xlu0 %v2138, 64
        %v2533 = vpop.permute.xlu0 %2532
        %2534 = vrot.lane.b32.xlu0 %v2139, 64
        %v2535 = vpop.permute.xlu0 %2534
        %2536 = vrot.lane.b32.xlu0 %v2140, 64
        %v2537 = vpop.permute.xlu0 %2536
        %2538 = vrot.lane.b32.xlu0 %v2141, 64
        %v2539 = vpop.permute.xlu0 %2538
        %2540 = vrot.lane.b32.xlu0 %v2142, 64
        %v2541 = vpop.permute.xlu0 %2540
        %2542 = vrot.lane.b32.xlu0 %v2143, 64
        %v2543 = vpop.permute.xlu0 %2542
        %2544 = vrot.lane.b32.xlu0 %v2144, 64
        %v2545 = vpop.permute.xlu0 %2544
        %s2578 = scalar_lea.vmem %s461, 128
        %2579 = vst.msk [vmem:[%s2578] sm:$0xf] %vm2032, %v2483
        %2580 = vst.msk [vmem:[%s2578 + $0x4] sm:$0xf] %vm2032, %v2485
        %2581 = vst.msk [vmem:[%s2578 + $0x8] sm:$0xf] %vm2032, %v2487
        %2582 = vst.msk [vmem:[%s2578 + $0xc] sm:$0xf] %vm2032, %v2489
        %2583 = vst.msk [vmem:[%s2578 + $0x10] sm:$0xf] %vm2032, %v2491
        %2584 = vst.msk [vmem:[%s2578 + $0x14] sm:$0xf] %vm2032, %v2493
        %2585 = vst.msk [vmem:[%s2578 + $0x18] sm:$0xf] %vm2032, %v2495
        %2586 = vst.msk [vmem:[%s2578 + $0x1c] sm:$0xf] %vm2032, %v2497
        %2587 = vst.msk [vmem:[%s2578 + $0x20] sm:$0xf] %vm2032, %v2499
        %2588 = vst.msk [vmem:[%s2578 + $0x24] sm:$0xf] %vm2032, %v2501
        %2589 = vst.msk [vmem:[%s2578 + $0x28] sm:$0xf] %vm2032, %v2503
        %2590 = vst.msk [vmem:[%s2578 + $0x2c] sm:$0xf] %vm2032, %v2505
        %2591 = vst.msk [vmem:[%s2578 + $0x30] sm:$0xf] %vm2032, %v2507
        %2592 = vst.msk [vmem:[%s2578 + $0x34] sm:$0xf] %vm2032, %v2509
        %2593 = vst.msk [vmem:[%s2578 + $0x38] sm:$0xf] %vm2032, %v2511
        %2594 = vst.msk [vmem:[%s2578 + $0x3c] sm:$0xf] %vm2032, %v2513
        %2595 = vst.msk [vmem:[%s2578 + $0x40] sm:$0xf] %vm2032, %v2515
        %2596 = vst.msk [vmem:[%s2578 + $0x44] sm:$0xf] %vm2032, %v2517
        %2597 = vst.msk [vmem:[%s2578 + $0x48] sm:$0xf] %vm2032, %v2519
        %2598 = vst.msk [vmem:[%s2578 + $0x4c] sm:$0xf] %vm2032, %v2521
        %2599 = vst.msk [vmem:[%s2578 + $0x50] sm:$0xf] %vm2032, %v2523
        %2600 = vst.msk [vmem:[%s2578 + $0x54] sm:$0xf] %vm2032, %v2525
        %2601 = vst.msk [vmem:[%s2578 + $0x58] sm:$0xf] %vm2032, %v2527
        %2602 = vst.msk [vmem:[%s2578 + $0x5c] sm:$0xf] %vm2032, %v2529
        %2603 = vst.msk [vmem:[%s2578 + $0x60] sm:$0xf] %vm2032, %v2531
        %2604 = vst.msk [vmem:[%s2578 + $0x64] sm:$0xf] %vm2032, %v2533
        %2605 = vst.msk [vmem:[%s2578 + $0x68] sm:$0xf] %vm2032, %v2535
        %2606 = vst.msk [vmem:[%s2578 + $0x6c] sm:$0xf] %vm2032, %v2537
        %2607 = vst.msk [vmem:[%s2578 + $0x70] sm:$0xf] %vm2032, %v2539
        %2608 = vst.msk [vmem:[%s2578 + $0x74] sm:$0xf] %vm2032, %v2541
        %2609 = vst.msk [vmem:[%s2578 + $0x78] sm:$0xf] %vm2032, %v2543
        %2610 = vst.msk [vmem:[%s2578 + $0x7c] sm:$0xf] %vm2032, %v2545
        %2611 = vrot.lane.b32.xlu0 %v2257, 64
        %v2612 = vpop.permute.xlu0 %2611
        %2613 = vrot.lane.b32.xlu0 %v2258, 64
        %v2614 = vpop.permute.xlu0 %2613
        %2615 = vrot.lane.b32.xlu0 %v2259, 64
        %v2616 = vpop.permute.xlu0 %2615
        %2617 = vrot.lane.b32.xlu0 %v2260, 64
        %v2618 = vpop.permute.xlu0 %2617
        %2619 = vrot.lane.b32.xlu0 %v2261, 64
        %v2620 = vpop.permute.xlu0 %2619
        %2621 = vrot.lane.b32.xlu0 %v2262, 64
        %v2622 = vpop.permute.xlu0 %2621
        %2623 = vrot.lane.b32.xlu0 %v2263, 64
        %v2624 = vpop.permute.xlu0 %2623
        %2625 = vrot.lane.b32.xlu0 %v2264, 64
        %v2626 = vpop.permute.xlu0 %2625
        %2627 = vrot.lane.b32.xlu0 %v2265, 64
        %v2628 = vpop.permute.xlu0 %2627
        %2629 = vrot.lane.b32.xlu0 %v2266, 64
        %v2630 = vpop.permute.xlu0 %2629
        %2631 = vrot.lane.b32.xlu0 %v2267, 64
        %v2632 = vpop.permute.xlu0 %2631
        %2633 = vrot.lane.b32.xlu0 %v2268, 64
        %v2634 = vpop.permute.xlu0 %2633
        %2635 = vrot.lane.b32.xlu0 %v2269, 64
        %v2636 = vpop.permute.xlu0 %2635
        %2637 = vrot.lane.b32.xlu0 %v2270, 64
        %v2638 = vpop.permute.xlu0 %2637
        %2639 = vrot.lane.b32.xlu0 %v2271, 64
        %v2640 = vpop.permute.xlu0 %2639
        %2641 = vrot.lane.b32.xlu0 %v2272, 64
        %v2642 = vpop.permute.xlu0 %2641
        %2643 = vrot.lane.b32.xlu0 %v2273, 64
        %v2644 = vpop.permute.xlu0 %2643
        %2645 = vrot.lane.b32.xlu0 %v2274, 64
        %v2646 = vpop.permute.xlu0 %2645
        %2647 = vrot.lane.b32.xlu0 %v2275, 64
        %v2648 = vpop.permute.xlu0 %2647
        %2649 = vrot.lane.b32.xlu0 %v2276, 64
        %v2650 = vpop.permute.xlu0 %2649
        %2651 = vrot.lane.b32.xlu0 %v2277, 64
        %v2652 = vpop.permute.xlu0 %2651
        %2653 = vrot.lane.b32.xlu0 %v2278, 64
        %v2654 = vpop.permute.xlu0 %2653
        %2655 = vrot.lane.b32.xlu0 %v2279, 64
        %v2656 = vpop.permute.xlu0 %2655
        %2657 = vrot.lane.b32.xlu0 %v2280, 64
        %v2658 = vpop.permute.xlu0 %2657
        %2659 = vrot.lane.b32.xlu0 %v2281, 64
        %v2660 = vpop.permute.xlu0 %2659
        %2661 = vrot.lane.b32.xlu0 %v2282, 64
        %v2662 = vpop.permute.xlu0 %2661
        %2663 = vrot.lane.b32.xlu0 %v2283, 64
        %v2664 = vpop.permute.xlu0 %2663
        %2665 = vrot.lane.b32.xlu0 %v2284, 64
        %v2666 = vpop.permute.xlu0 %2665
        %2667 = vrot.lane.b32.xlu0 %v2285, 64
        %v2668 = vpop.permute.xlu0 %2667
        %2669 = vrot.lane.b32.xlu0 %v2286, 64
        %v2670 = vpop.permute.xlu0 %2669
        %2671 = vrot.lane.b32.xlu0 %v2287, 64
        %v2672 = vpop.permute.xlu0 %2671
        %2673 = vrot.lane.b32.xlu0 %v2288, 64
        %v2674 = vpop.permute.xlu0 %2673
        %s2707 = scalar_lea.vmem %s471, 128
        %2708 = vst.msk [vmem:[%s2707] sm:$0xf] %vm2032, %v2612
        %2709 = vst.msk [vmem:[%s2707 + $0x4] sm:$0xf] %vm2032, %v2614
        %2710 = vst.msk [vmem:[%s2707 + $0x8] sm:$0xf] %vm2032, %v2616
        %2711 = vst.msk [vmem:[%s2707 + $0xc] sm:$0xf] %vm2032, %v2618
        %2712 = vst.msk [vmem:[%s2707 + $0x10] sm:$0xf] %vm2032, %v2620
        %2713 = vst.msk [vmem:[%s2707 + $0x14] sm:$0xf] %vm2032, %v2622
        %2714 = vst.msk [vmem:[%s2707 + $0x18] sm:$0xf] %vm2032, %v2624
        %2715 = vst.msk [vmem:[%s2707 + $0x1c] sm:$0xf] %vm2032, %v2626
        %2716 = vst.msk [vmem:[%s2707 + $0x20] sm:$0xf] %vm2032, %v2628
        %2717 = vst.msk [vmem:[%s2707 + $0x24] sm:$0xf] %vm2032, %v2630
        %2718 = vst.msk [vmem:[%s2707 + $0x28] sm:$0xf] %vm2032, %v2632
        %2719 = vst.msk [vmem:[%s2707 + $0x2c] sm:$0xf] %vm2032, %v2634
        %2720 = vst.msk [vmem:[%s2707 + $0x30] sm:$0xf] %vm2032, %v2636
        %2721 = vst.msk [vmem:[%s2707 + $0x34] sm:$0xf] %vm2032, %v2638
        %2722 = vst.msk [vmem:[%s2707 + $0x38] sm:$0xf] %vm2032, %v2640
        %2723 = vst.msk [vmem:[%s2707 + $0x3c] sm:$0xf] %vm2032, %v2642
        %2724 = vst.msk [vmem:[%s2707 + $0x40] sm:$0xf] %vm2032, %v2644
        %2725 = vst.msk [vmem:[%s2707 + $0x44] sm:$0xf] %vm2032, %v2646
        %2726 = vst.msk [vmem:[%s2707 + $0x48] sm:$0xf] %vm2032, %v2648
        %2727 = vst.msk [vmem:[%s2707 + $0x4c] sm:$0xf] %vm2032, %v2650
        %2728 = vst.msk [vmem:[%s2707 + $0x50] sm:$0xf] %vm2032, %v2652
        %2729 = vst.msk [vmem:[%s2707 + $0x54] sm:$0xf] %vm2032, %v2654
        %2730 = vst.msk [vmem:[%s2707 + $0x58] sm:$0xf] %vm2032, %v2656
        %2731 = vst.msk [vmem:[%s2707 + $0x5c] sm:$0xf] %vm2032, %v2658
        %2732 = vst.msk [vmem:[%s2707 + $0x60] sm:$0xf] %vm2032, %v2660
        %2733 = vst.msk [vmem:[%s2707 + $0x64] sm:$0xf] %vm2032, %v2662
        %2734 = vst.msk [vmem:[%s2707 + $0x68] sm:$0xf] %vm2032, %v2664
        %2735 = vst.msk [vmem:[%s2707 + $0x6c] sm:$0xf] %vm2032, %v2666
        %2736 = vst.msk [vmem:[%s2707 + $0x70] sm:$0xf] %vm2032, %v2668
        %2737 = vst.msk [vmem:[%s2707 + $0x74] sm:$0xf] %vm2032, %v2670
        %2738 = vst.msk [vmem:[%s2707 + $0x78] sm:$0xf] %vm2032, %v2672
        %2739 = vst.msk [vmem:[%s2707 + $0x7c] sm:$0xf] %vm2032, %v2674
        %v2756 = vunpack.c.l.b16 %v1825
        %v2757 = vunpack.c.h.b16 %v1825
        %v2758 = vunpack.c.l.b16 %v1827
        %v2759 = vunpack.c.h.b16 %v1827
        %v2760 = vunpack.c.l.b16 %v1829
        %v2761 = vunpack.c.h.b16 %v1829
        %v2762 = vunpack.c.l.b16 %v1831
        %v2763 = vunpack.c.h.b16 %v1831
        %v2764 = vunpack.c.l.b16 %v1833
        %v2765 = vunpack.c.h.b16 %v1833
        %v2766 = vunpack.c.l.b16 %v1835
        %v2767 = vunpack.c.h.b16 %v1835
        %v2768 = vunpack.c.l.b16 %v1837
        %v2769 = vunpack.c.h.b16 %v1837
        %v2770 = vunpack.c.l.b16 %v1839
        %v2771 = vunpack.c.h.b16 %v1839
        %v2772 = vunpack.c.l.b16 %v1841
        %v2773 = vunpack.c.h.b16 %v1841
        %v2774 = vunpack.c.l.b16 %v1843
        %v2775 = vunpack.c.h.b16 %v1843
        %v2776 = vunpack.c.l.b16 %v1845
        %v2777 = vunpack.c.h.b16 %v1845
        %v2778 = vunpack.c.l.b16 %v1847
        %v2779 = vunpack.c.h.b16 %v1847
        %v2780 = vunpack.c.l.b16 %v1849
        %v2781 = vunpack.c.h.b16 %v1849
        %v2782 = vunpack.c.l.b16 %v1851
        %v2783 = vunpack.c.h.b16 %v1851
        %v2784 = vunpack.c.l.b16 %v1853
        %v2785 = vunpack.c.h.b16 %v1853
        %v2786 = vunpack.c.l.b16 %v1855
        %v2787 = vunpack.c.h.b16 %v1855
        %v2788 = vpack.c.b16 %v2756, %v2756
        %v2789 = vpack.c.b16 %v2757, %v2757
        %v2790 = vpack.c.b16 %v2758, %v2758
        %v2791 = vpack.c.b16 %v2759, %v2759
        %v2792 = vpack.c.b16 %v2760, %v2760
        %v2793 = vpack.c.b16 %v2761, %v2761
        %v2794 = vpack.c.b16 %v2762, %v2762
        %v2795 = vpack.c.b16 %v2763, %v2763
        %v2796 = vpack.c.b16 %v2764, %v2764
        %v2797 = vpack.c.b16 %v2765, %v2765
        %v2798 = vpack.c.b16 %v2766, %v2766
        %v2799 = vpack.c.b16 %v2767, %v2767
        %v2800 = vpack.c.b16 %v2768, %v2768
        %v2801 = vpack.c.b16 %v2769, %v2769
        %v2802 = vpack.c.b16 %v2770, %v2770
        %v2803 = vpack.c.b16 %v2771, %v2771
        %v2804 = vpack.c.b16 %v2772, %v2772
        %v2805 = vpack.c.b16 %v2773, %v2773
        %v2806 = vpack.c.b16 %v2774, %v2774
        %v2807 = vpack.c.b16 %v2775, %v2775
        %v2808 = vpack.c.b16 %v2776, %v2776
        %v2809 = vpack.c.b16 %v2777, %v2777
        %v2810 = vpack.c.b16 %v2778, %v2778
        %v2811 = vpack.c.b16 %v2779, %v2779
        %v2812 = vpack.c.b16 %v2780, %v2780
        %v2813 = vpack.c.b16 %v2781, %v2781
        %v2814 = vpack.c.b16 %v2782, %v2782
        %v2815 = vpack.c.b16 %v2783, %v2783
        %v2816 = vpack.c.b16 %v2784, %v2784
        %v2817 = vpack.c.b16 %v2785, %v2785
        %v2818 = vpack.c.b16 %v2786, %v2786
        %v2819 = vpack.c.b16 %v2787, %v2787
        %s2852 = scalar_lea.vmem %s451, 256
        %2853 = vst.msk [vmem:[%s2852] sm:$0xf] %vm2032, %v2788
        %2854 = vst.msk [vmem:[%s2852 + $0x4] sm:$0xf] %vm2032, %v2789
        %2855 = vst.msk [vmem:[%s2852 + $0x8] sm:$0xf] %vm2032, %v2790
        %2856 = vst.msk [vmem:[%s2852 + $0xc] sm:$0xf] %vm2032, %v2791
        %2857 = vst.msk [vmem:[%s2852 + $0x10] sm:$0xf] %vm2032, %v2792
        %2858 = vst.msk [vmem:[%s2852 + $0x14] sm:$0xf] %vm2032, %v2793
        %2859 = vst.msk [vmem:[%s2852 + $0x18] sm:$0xf] %vm2032, %v2794
        %2860 = vst.msk [vmem:[%s2852 + $0x1c] sm:$0xf] %vm2032, %v2795
        %2861 = vst.msk [vmem:[%s2852 + $0x20] sm:$0xf] %vm2032, %v2796
        %2862 = vst.msk [vmem:[%s2852 + $0x24] sm:$0xf] %vm2032, %v2797
        %2863 = vst.msk [vmem:[%s2852 + $0x28] sm:$0xf] %vm2032, %v2798
        %2864 = vst.msk [vmem:[%s2852 + $0x2c] sm:$0xf] %vm2032, %v2799
        %2865 = vst.msk [vmem:[%s2852 + $0x30] sm:$0xf] %vm2032, %v2800
        %2866 = vst.msk [vmem:[%s2852 + $0x34] sm:$0xf] %vm2032, %v2801
        %2867 = vst.msk [vmem:[%s2852 + $0x38] sm:$0xf] %vm2032, %v2802
        %2868 = vst.msk [vmem:[%s2852 + $0x3c] sm:$0xf] %vm2032, %v2803
        %2869 = vst.msk [vmem:[%s2852 + $0x40] sm:$0xf] %vm2032, %v2804
        %2870 = vst.msk [vmem:[%s2852 + $0x44] sm:$0xf] %vm2032, %v2805
        %2871 = vst.msk [vmem:[%s2852 + $0x48] sm:$0xf] %vm2032, %v2806
        %2872 = vst.msk [vmem:[%s2852 + $0x4c] sm:$0xf] %vm2032, %v2807
        %2873 = vst.msk [vmem:[%s2852 + $0x50] sm:$0xf] %vm2032, %v2808
        %2874 = vst.msk [vmem:[%s2852 + $0x54] sm:$0xf] %vm2032, %v2809
        %2875 = vst.msk [vmem:[%s2852 + $0x58] sm:$0xf] %vm2032, %v2810
        %2876 = vst.msk [vmem:[%s2852 + $0x5c] sm:$0xf] %vm2032, %v2811
        %2877 = vst.msk [vmem:[%s2852 + $0x60] sm:$0xf] %vm2032, %v2812
        %2878 = vst.msk [vmem:[%s2852 + $0x64] sm:$0xf] %vm2032, %v2813
        %2879 = vst.msk [vmem:[%s2852 + $0x68] sm:$0xf] %vm2032, %v2814
        %2880 = vst.msk [vmem:[%s2852 + $0x6c] sm:$0xf] %vm2032, %v2815
        %2881 = vst.msk [vmem:[%s2852 + $0x70] sm:$0xf] %vm2032, %v2816
        %2882 = vst.msk [vmem:[%s2852 + $0x74] sm:$0xf] %vm2032, %v2817
        %2883 = vst.msk [vmem:[%s2852 + $0x78] sm:$0xf] %vm2032, %v2818
        %2884 = vst.msk [vmem:[%s2852 + $0x7c] sm:$0xf] %vm2032, %v2819
        %v2901 = vunpack.c.l.b16 %v1857
        %v2902 = vunpack.c.h.b16 %v1857
        %v2903 = vunpack.c.l.b16 %v1859
        %v2904 = vunpack.c.h.b16 %v1859
        %v2905 = vunpack.c.l.b16 %v1861
        %v2906 = vunpack.c.h.b16 %v1861
        %v2907 = vunpack.c.l.b16 %v1863
        %v2908 = vunpack.c.h.b16 %v1863
        %v2909 = vunpack.c.l.b16 %v1865
        %v2910 = vunpack.c.h.b16 %v1865
        %v2911 = vunpack.c.l.b16 %v1867
        %v2912 = vunpack.c.h.b16 %v1867
        %v2913 = vunpack.c.l.b16 %v1869
        %v2914 = vunpack.c.h.b16 %v1869
        %v2915 = vunpack.c.l.b16 %v1871
        %v2916 = vunpack.c.h.b16 %v1871
        %v2917 = vunpack.c.l.b16 %v1873
        %v2918 = vunpack.c.h.b16 %v1873
        %v2919 = vunpack.c.l.b16 %v1875
        %v2920 = vunpack.c.h.b16 %v1875
        %v2921 = vunpack.c.l.b16 %v1877
        %v2922 = vunpack.c.h.b16 %v1877
        %v2923 = vunpack.c.l.b16 %v1879
        %v2924 = vunpack.c.h.b16 %v1879
        %v2925 = vunpack.c.l.b16 %v1881
        %v2926 = vunpack.c.h.b16 %v1881
        %v2927 = vunpack.c.l.b16 %v1883
        %v2928 = vunpack.c.h.b16 %v1883
        %v2929 = vunpack.c.l.b16 %v1885
        %v2930 = vunpack.c.h.b16 %v1885
        %v2931 = vunpack.c.l.b16 %v1887
        %v2932 = vunpack.c.h.b16 %v1887
        %v2933 = vpack.c.b16 %v2901, %v2901
        %v2934 = vpack.c.b16 %v2902, %v2902
        %v2935 = vpack.c.b16 %v2903, %v2903
        %v2936 = vpack.c.b16 %v2904, %v2904
        %v2937 = vpack.c.b16 %v2905, %v2905
        %v2938 = vpack.c.b16 %v2906, %v2906
        %v2939 = vpack.c.b16 %v2907, %v2907
        %v2940 = vpack.c.b16 %v2908, %v2908
        %v2941 = vpack.c.b16 %v2909, %v2909
        %v2942 = vpack.c.b16 %v2910, %v2910
        %v2943 = vpack.c.b16 %v2911, %v2911
        %v2944 = vpack.c.b16 %v2912, %v2912
        %v2945 = vpack.c.b16 %v2913, %v2913
        %v2946 = vpack.c.b16 %v2914, %v2914
        %v2947 = vpack.c.b16 %v2915, %v2915
        %v2948 = vpack.c.b16 %v2916, %v2916
        %v2949 = vpack.c.b16 %v2917, %v2917
        %v2950 = vpack.c.b16 %v2918, %v2918
        %v2951 = vpack.c.b16 %v2919, %v2919
        %v2952 = vpack.c.b16 %v2920, %v2920
        %v2953 = vpack.c.b16 %v2921, %v2921
        %v2954 = vpack.c.b16 %v2922, %v2922
        %v2955 = vpack.c.b16 %v2923, %v2923
        %v2956 = vpack.c.b16 %v2924, %v2924
        %v2957 = vpack.c.b16 %v2925, %v2925
        %v2958 = vpack.c.b16 %v2926, %v2926
        %v2959 = vpack.c.b16 %v2927, %v2927
        %v2960 = vpack.c.b16 %v2928, %v2928
        %v2961 = vpack.c.b16 %v2929, %v2929
        %v2962 = vpack.c.b16 %v2930, %v2930
        %v2963 = vpack.c.b16 %v2931, %v2931
        %v2964 = vpack.c.b16 %v2932, %v2932
        %s2997 = scalar_lea.vmem %s461, 256
        %2998 = vst.msk [vmem:[%s2997] sm:$0xf] %vm2032, %v2933
        %2999 = vst.msk [vmem:[%s2997 + $0x4] sm:$0xf] %vm2032, %v2934
        %3000 = vst.msk [vmem:[%s2997 + $0x8] sm:$0xf] %vm2032, %v2935
        %3001 = vst.msk [vmem:[%s2997 + $0xc] sm:$0xf] %vm2032, %v2936
        %3002 = vst.msk [vmem:[%s2997 + $0x10] sm:$0xf] %vm2032, %v2937
        %3003 = vst.msk [vmem:[%s2997 + $0x14] sm:$0xf] %vm2032, %v2938
        %3004 = vst.msk [vmem:[%s2997 + $0x18] sm:$0xf] %vm2032, %v2939
        %3005 = vst.msk [vmem:[%s2997 + $0x1c] sm:$0xf] %vm2032, %v2940
        %3006 = vst.msk [vmem:[%s2997 + $0x20] sm:$0xf] %vm2032, %v2941
        %3007 = vst.msk [vmem:[%s2997 + $0x24] sm:$0xf] %vm2032, %v2942
        %3008 = vst.msk [vmem:[%s2997 + $0x28] sm:$0xf] %vm2032, %v2943
        %3009 = vst.msk [vmem:[%s2997 + $0x2c] sm:$0xf] %vm2032, %v2944
        %3010 = vst.msk [vmem:[%s2997 + $0x30] sm:$0xf] %vm2032, %v2945
        %3011 = vst.msk [vmem:[%s2997 + $0x34] sm:$0xf] %vm2032, %v2946
        %3012 = vst.msk [vmem:[%s2997 + $0x38] sm:$0xf] %vm2032, %v2947
        %3013 = vst.msk [vmem:[%s2997 + $0x3c] sm:$0xf] %vm2032, %v2948
        %3014 = vst.msk [vmem:[%s2997 + $0x40] sm:$0xf] %vm2032, %v2949
        %3015 = vst.msk [vmem:[%s2997 + $0x44] sm:$0xf] %vm2032, %v2950
        %3016 = vst.msk [vmem:[%s2997 + $0x48] sm:$0xf] %vm2032, %v2951
        %3017 = vst.msk [vmem:[%s2997 + $0x4c] sm:$0xf] %vm2032, %v2952
        %3018 = vst.msk [vmem:[%s2997 + $0x50] sm:$0xf] %vm2032, %v2953
        %3019 = vst.msk [vmem:[%s2997 + $0x54] sm:$0xf] %vm2032, %v2954
        %3020 = vst.msk [vmem:[%s2997 + $0x58] sm:$0xf] %vm2032, %v2955
        %3021 = vst.msk [vmem:[%s2997 + $0x5c] sm:$0xf] %vm2032, %v2956
        %3022 = vst.msk [vmem:[%s2997 + $0x60] sm:$0xf] %vm2032, %v2957
        %3023 = vst.msk [vmem:[%s2997 + $0x64] sm:$0xf] %vm2032, %v2958
        %3024 = vst.msk [vmem:[%s2997 + $0x68] sm:$0xf] %vm2032, %v2959
        %3025 = vst.msk [vmem:[%s2997 + $0x6c] sm:$0xf] %vm2032, %v2960
        %3026 = vst.msk [vmem:[%s2997 + $0x70] sm:$0xf] %vm2032, %v2961
        %3027 = vst.msk [vmem:[%s2997 + $0x74] sm:$0xf] %vm2032, %v2962
        %3028 = vst.msk [vmem:[%s2997 + $0x78] sm:$0xf] %vm2032, %v2963
        %3029 = vst.msk [vmem:[%s2997 + $0x7c] sm:$0xf] %vm2032, %v2964
        %v3046 = vunpack.c.l.b16 %v1889
        %v3047 = vunpack.c.h.b16 %v1889
        %v3048 = vunpack.c.l.b16 %v1891
        %v3049 = vunpack.c.h.b16 %v1891
        %v3050 = vunpack.c.l.b16 %v1893
        %v3051 = vunpack.c.h.b16 %v1893
        %v3052 = vunpack.c.l.b16 %v1895
        %v3053 = vunpack.c.h.b16 %v1895
        %v3054 = vunpack.c.l.b16 %v1897
        %v3055 = vunpack.c.h.b16 %v1897
        %v3056 = vunpack.c.l.b16 %v1899
        %v3057 = vunpack.c.h.b16 %v1899
        %v3058 = vunpack.c.l.b16 %v1901
        %v3059 = vunpack.c.h.b16 %v1901
        %v3060 = vunpack.c.l.b16 %v1903
        %v3061 = vunpack.c.h.b16 %v1903
        %v3062 = vunpack.c.l.b16 %v1905
        %v3063 = vunpack.c.h.b16 %v1905
        %v3064 = vunpack.c.l.b16 %v1907
        %v3065 = vunpack.c.h.b16 %v1907
        %v3066 = vunpack.c.l.b16 %v1909
        %v3067 = vunpack.c.h.b16 %v1909
        %v3068 = vunpack.c.l.b16 %v1911
        %v3069 = vunpack.c.h.b16 %v1911
        %v3070 = vunpack.c.l.b16 %v1913
        %v3071 = vunpack.c.h.b16 %v1913
        %v3072 = vunpack.c.l.b16 %v1915
        %v3073 = vunpack.c.h.b16 %v1915
        %v3074 = vunpack.c.l.b16 %v1917
        %v3075 = vunpack.c.h.b16 %v1917
        %v3076 = vunpack.c.l.b16 %v1919
        %v3077 = vunpack.c.h.b16 %v1919
        %v3078 = vpack.c.b16 %v3046, %v3046
        %v3079 = vpack.c.b16 %v3047, %v3047
        %v3080 = vpack.c.b16 %v3048, %v3048
        %v3081 = vpack.c.b16 %v3049, %v3049
        %v3082 = vpack.c.b16 %v3050, %v3050
        %v3083 = vpack.c.b16 %v3051, %v3051
        %v3084 = vpack.c.b16 %v3052, %v3052
        %v3085 = vpack.c.b16 %v3053, %v3053
        %v3086 = vpack.c.b16 %v3054, %v3054
        %v3087 = vpack.c.b16 %v3055, %v3055
        %v3088 = vpack.c.b16 %v3056, %v3056
        %v3089 = vpack.c.b16 %v3057, %v3057
        %v3090 = vpack.c.b16 %v3058, %v3058
        %v3091 = vpack.c.b16 %v3059, %v3059
        %v3092 = vpack.c.b16 %v3060, %v3060
        %v3093 = vpack.c.b16 %v3061, %v3061
        %v3094 = vpack.c.b16 %v3062, %v3062
        %v3095 = vpack.c.b16 %v3063, %v3063
        %v3096 = vpack.c.b16 %v3064, %v3064
        %v3097 = vpack.c.b16 %v3065, %v3065
        %v3098 = vpack.c.b16 %v3066, %v3066
        %v3099 = vpack.c.b16 %v3067, %v3067
        %v3100 = vpack.c.b16 %v3068, %v3068
        %v3101 = vpack.c.b16 %v3069, %v3069
        %v3102 = vpack.c.b16 %v3070, %v3070
        %v3103 = vpack.c.b16 %v3071, %v3071
        %v3104 = vpack.c.b16 %v3072, %v3072
        %v3105 = vpack.c.b16 %v3073, %v3073
        %v3106 = vpack.c.b16 %v3074, %v3074
        %v3107 = vpack.c.b16 %v3075, %v3075
        %v3108 = vpack.c.b16 %v3076, %v3076
        %v3109 = vpack.c.b16 %v3077, %v3077
        %s3142 = scalar_lea.vmem %s471, 256
        %3143 = vst.msk [vmem:[%s3142] sm:$0xf] %vm2032, %v3078
        %3144 = vst.msk [vmem:[%s3142 + $0x4] sm:$0xf] %vm2032, %v3079
        %3145 = vst.msk [vmem:[%s3142 + $0x8] sm:$0xf] %vm2032, %v3080
        %3146 = vst.msk [vmem:[%s3142 + $0xc] sm:$0xf] %vm2032, %v3081
        %3147 = vst.msk [vmem:[%s3142 + $0x10] sm:$0xf] %vm2032, %v3082
        %3148 = vst.msk [vmem:[%s3142 + $0x14] sm:$0xf] %vm2032, %v3083
        %3149 = vst.msk [vmem:[%s3142 + $0x18] sm:$0xf] %vm2032, %v3084
        %3150 = vst.msk [vmem:[%s3142 + $0x1c] sm:$0xf] %vm2032, %v3085
        %3151 = vst.msk [vmem:[%s3142 + $0x20] sm:$0xf] %vm2032, %v3086
        %3152 = vst.msk [vmem:[%s3142 + $0x24] sm:$0xf] %vm2032, %v3087
        %3153 = vst.msk [vmem:[%s3142 + $0x28] sm:$0xf] %vm2032, %v3088
        %3154 = vst.msk [vmem:[%s3142 + $0x2c] sm:$0xf] %vm2032, %v3089
        %3155 = vst.msk [vmem:[%s3142 + $0x30] sm:$0xf] %vm2032, %v3090
        %3156 = vst.msk [vmem:[%s3142 + $0x34] sm:$0xf] %vm2032, %v3091
        %3157 = vst.msk [vmem:[%s3142 + $0x38] sm:$0xf] %vm2032, %v3092
        %3158 = vst.msk [vmem:[%s3142 + $0x3c] sm:$0xf] %vm2032, %v3093
        %3159 = vst.msk [vmem:[%s3142 + $0x40] sm:$0xf] %vm2032, %v3094
        %3160 = vst.msk [vmem:[%s3142 + $0x44] sm:$0xf] %vm2032, %v3095
        %3161 = vst.msk [vmem:[%s3142 + $0x48] sm:$0xf] %vm2032, %v3096
        %3162 = vst.msk [vmem:[%s3142 + $0x4c] sm:$0xf] %vm2032, %v3097
        %3163 = vst.msk [vmem:[%s3142 + $0x50] sm:$0xf] %vm2032, %v3098
        %3164 = vst.msk [vmem:[%s3142 + $0x54] sm:$0xf] %vm2032, %v3099
        %3165 = vst.msk [vmem:[%s3142 + $0x58] sm:$0xf] %vm2032, %v3100
        %3166 = vst.msk [vmem:[%s3142 + $0x5c] sm:$0xf] %vm2032, %v3101
        %3167 = vst.msk [vmem:[%s3142 + $0x60] sm:$0xf] %vm2032, %v3102
        %3168 = vst.msk [vmem:[%s3142 + $0x64] sm:$0xf] %vm2032, %v3103
        %3169 = vst.msk [vmem:[%s3142 + $0x68] sm:$0xf] %vm2032, %v3104
        %3170 = vst.msk [vmem:[%s3142 + $0x6c] sm:$0xf] %vm2032, %v3105
        %3171 = vst.msk [vmem:[%s3142 + $0x70] sm:$0xf] %vm2032, %v3106
        %3172 = vst.msk [vmem:[%s3142 + $0x74] sm:$0xf] %vm2032, %v3107
        %3173 = vst.msk [vmem:[%s3142 + $0x78] sm:$0xf] %vm2032, %v3108
        %3174 = vst.msk [vmem:[%s3142 + $0x7c] sm:$0xf] %vm2032, %v3109
        %3175 = vrot.lane.b32.xlu0 %v2788, 64
        %v3176 = vpop.permute.xlu0 %3175
        %3177 = vrot.lane.b32.xlu0 %v2789, 64
        %v3178 = vpop.permute.xlu0 %3177
        %3179 = vrot.lane.b32.xlu0 %v2790, 64
        %v3180 = vpop.permute.xlu0 %3179
        %3181 = vrot.lane.b32.xlu0 %v2791, 64
        %v3182 = vpop.permute.xlu0 %3181
        %3183 = vrot.lane.b32.xlu0 %v2792, 64
        %v3184 = vpop.permute.xlu0 %3183
        %3185 = vrot.lane.b32.xlu0 %v2793, 64
        %v3186 = vpop.permute.xlu0 %3185
        %3187 = vrot.lane.b32.xlu0 %v2794, 64
        %v3188 = vpop.permute.xlu0 %3187
        %3189 = vrot.lane.b32.xlu0 %v2795, 64
        %v3190 = vpop.permute.xlu0 %3189
        %3191 = vrot.lane.b32.xlu0 %v2796, 64
        %v3192 = vpop.permute.xlu0 %3191
        %3193 = vrot.lane.b32.xlu0 %v2797, 64
        %v3194 = vpop.permute.xlu0 %3193
        %3195 = vrot.lane.b32.xlu0 %v2798, 64
        %v3196 = vpop.permute.xlu0 %3195
        %3197 = vrot.lane.b32.xlu0 %v2799, 64
        %v3198 = vpop.permute.xlu0 %3197
        %3199 = vrot.lane.b32.xlu0 %v2800, 64
        %v3200 = vpop.permute.xlu0 %3199
        %3201 = vrot.lane.b32.xlu0 %v2801, 64
        %v3202 = vpop.permute.xlu0 %3201
        %3203 = vrot.lane.b32.xlu0 %v2802, 64
        %v3204 = vpop.permute.xlu0 %3203
        %3205 = vrot.lane.b32.xlu0 %v2803, 64
        %v3206 = vpop.permute.xlu0 %3205
        %3207 = vrot.lane.b32.xlu0 %v2804, 64
        %v3208 = vpop.permute.xlu0 %3207
        %3209 = vrot.lane.b32.xlu0 %v2805, 64
        %v3210 = vpop.permute.xlu0 %3209
        %3211 = vrot.lane.b32.xlu0 %v2806, 64
        %v3212 = vpop.permute.xlu0 %3211
        %3213 = vrot.lane.b32.xlu0 %v2807, 64
        %v3214 = vpop.permute.xlu0 %3213
        %3215 = vrot.lane.b32.xlu0 %v2808, 64
        %v3216 = vpop.permute.xlu0 %3215
        %3217 = vrot.lane.b32.xlu0 %v2809, 64
        %v3218 = vpop.permute.xlu0 %3217
        %3219 = vrot.lane.b32.xlu0 %v2810, 64
        %v3220 = vpop.permute.xlu0 %3219
        %3221 = vrot.lane.b32.xlu0 %v2811, 64
        %v3222 = vpop.permute.xlu0 %3221
        %3223 = vrot.lane.b32.xlu0 %v2812, 64
        %v3224 = vpop.permute.xlu0 %3223
        %3225 = vrot.lane.b32.xlu0 %v2813, 64
        %v3226 = vpop.permute.xlu0 %3225
        %3227 = vrot.lane.b32.xlu0 %v2814, 64
        %v3228 = vpop.permute.xlu0 %3227
        %3229 = vrot.lane.b32.xlu0 %v2815, 64
        %v3230 = vpop.permute.xlu0 %3229
        %3231 = vrot.lane.b32.xlu0 %v2816, 64
        %v3232 = vpop.permute.xlu0 %3231
        %3233 = vrot.lane.b32.xlu0 %v2817, 64
        %v3234 = vpop.permute.xlu0 %3233
        %3235 = vrot.lane.b32.xlu0 %v2818, 64
        %v3236 = vpop.permute.xlu0 %3235
        %3237 = vrot.lane.b32.xlu0 %v2819, 64
        %v3238 = vpop.permute.xlu0 %3237
        %s3271 = scalar_lea.vmem %s451, 384
        %3272 = vst.msk [vmem:[%s3271] sm:$0xf] %vm2032, %v3176
        %3273 = vst.msk [vmem:[%s3271 + $0x4] sm:$0xf] %vm2032, %v3178
        %3274 = vst.msk [vmem:[%s3271 + $0x8] sm:$0xf] %vm2032, %v3180
        %3275 = vst.msk [vmem:[%s3271 + $0xc] sm:$0xf] %vm2032, %v3182
        %3276 = vst.msk [vmem:[%s3271 + $0x10] sm:$0xf] %vm2032, %v3184
        %3277 = vst.msk [vmem:[%s3271 + $0x14] sm:$0xf] %vm2032, %v3186
        %3278 = vst.msk [vmem:[%s3271 + $0x18] sm:$0xf] %vm2032, %v3188
        %3279 = vst.msk [vmem:[%s3271 + $0x1c] sm:$0xf] %vm2032, %v3190
        %3280 = vst.msk [vmem:[%s3271 + $0x20] sm:$0xf] %vm2032, %v3192
        %3281 = vst.msk [vmem:[%s3271 + $0x24] sm:$0xf] %vm2032, %v3194
        %3282 = vst.msk [vmem:[%s3271 + $0x28] sm:$0xf] %vm2032, %v3196
        %3283 = vst.msk [vmem:[%s3271 + $0x2c] sm:$0xf] %vm2032, %v3198
        %3284 = vst.msk [vmem:[%s3271 + $0x30] sm:$0xf] %vm2032, %v3200
        %3285 = vst.msk [vmem:[%s3271 + $0x34] sm:$0xf] %vm2032, %v3202
        %3286 = vst.msk [vmem:[%s3271 + $0x38] sm:$0xf] %vm2032, %v3204
        %3287 = vst.msk [vmem:[%s3271 + $0x3c] sm:$0xf] %vm2032, %v3206
        %3288 = vst.msk [vmem:[%s3271 + $0x40] sm:$0xf] %vm2032, %v3208
        %3289 = vst.msk [vmem:[%s3271 + $0x44] sm:$0xf] %vm2032, %v3210
        %3290 = vst.msk [vmem:[%s3271 + $0x48] sm:$0xf] %vm2032, %v3212
        %3291 = vst.msk [vmem:[%s3271 + $0x4c] sm:$0xf] %vm2032, %v3214
        %3292 = vst.msk [vmem:[%s3271 + $0x50] sm:$0xf] %vm2032, %v3216
        %3293 = vst.msk [vmem:[%s3271 + $0x54] sm:$0xf] %vm2032, %v3218
        %3294 = vst.msk [vmem:[%s3271 + $0x58] sm:$0xf] %vm2032, %v3220
        %3295 = vst.msk [vmem:[%s3271 + $0x5c] sm:$0xf] %vm2032, %v3222
        %3296 = vst.msk [vmem:[%s3271 + $0x60] sm:$0xf] %vm2032, %v3224
        %3297 = vst.msk [vmem:[%s3271 + $0x64] sm:$0xf] %vm2032, %v3226
        %3298 = vst.msk [vmem:[%s3271 + $0x68] sm:$0xf] %vm2032, %v3228
        %3299 = vst.msk [vmem:[%s3271 + $0x6c] sm:$0xf] %vm2032, %v3230
        %3300 = vst.msk [vmem:[%s3271 + $0x70] sm:$0xf] %vm2032, %v3232
        %3301 = vst.msk [vmem:[%s3271 + $0x74] sm:$0xf] %vm2032, %v3234
        %3302 = vst.msk [vmem:[%s3271 + $0x78] sm:$0xf] %vm2032, %v3236
        %3303 = vst.msk [vmem:[%s3271 + $0x7c] sm:$0xf] %vm2032, %v3238
        %3304 = vrot.lane.b32.xlu0 %v2933, 64
        %v3305 = vpop.permute.xlu0 %3304
        %3306 = vrot.lane.b32.xlu0 %v2934, 64
        %v3307 = vpop.permute.xlu0 %3306
        %3308 = vrot.lane.b32.xlu0 %v2935, 64
        %v3309 = vpop.permute.xlu0 %3308
        %3310 = vrot.lane.b32.xlu0 %v2936, 64
        %v3311 = vpop.permute.xlu0 %3310
        %3312 = vrot.lane.b32.xlu0 %v2937, 64
        %v3313 = vpop.permute.xlu0 %3312
        %3314 = vrot.lane.b32.xlu0 %v2938, 64
        %v3315 = vpop.permute.xlu0 %3314
        %3316 = vrot.lane.b32.xlu0 %v2939, 64
        %v3317 = vpop.permute.xlu0 %3316
        %3318 = vrot.lane.b32.xlu0 %v2940, 64
        %v3319 = vpop.permute.xlu0 %3318
        %3320 = vrot.lane.b32.xlu0 %v2941, 64
        %v3321 = vpop.permute.xlu0 %3320
        %3322 = vrot.lane.b32.xlu0 %v2942, 64
        %v3323 = vpop.permute.xlu0 %3322
        %3324 = vrot.lane.b32.xlu0 %v2943, 64
        %v3325 = vpop.permute.xlu0 %3324
        %3326 = vrot.lane.b32.xlu0 %v2944, 64
        %v3327 = vpop.permute.xlu0 %3326
        %3328 = vrot.lane.b32.xlu0 %v2945, 64
        %v3329 = vpop.permute.xlu0 %3328
        %3330 = vrot.lane.b32.xlu0 %v2946, 64
        %v3331 = vpop.permute.xlu0 %3330
        %3332 = vrot.lane.b32.xlu0 %v2947, 64
        %v3333 = vpop.permute.xlu0 %3332
        %3334 = vrot.lane.b32.xlu0 %v2948, 64
        %v3335 = vpop.permute.xlu0 %3334
        %3336 = vrot.lane.b32.xlu0 %v2949, 64
        %v3337 = vpop.permute.xlu0 %3336
        %3338 = vrot.lane.b32.xlu0 %v2950, 64
        %v3339 = vpop.permute.xlu0 %3338
        %3340 = vrot.lane.b32.xlu0 %v2951, 64
        %v3341 = vpop.permute.xlu0 %3340
        %3342 = vrot.lane.b32.xlu0 %v2952, 64
        %v3343 = vpop.permute.xlu0 %3342
        %3344 = vrot.lane.b32.xlu0 %v2953, 64
        %v3345 = vpop.permute.xlu0 %3344
        %3346 = vrot.lane.b32.xlu0 %v2954, 64
        %v3347 = vpop.permute.xlu0 %3346
        %3348 = vrot.lane.b32.xlu0 %v2955, 64
        %v3349 = vpop.permute.xlu0 %3348
        %3350 = vrot.lane.b32.xlu0 %v2956, 64
        %v3351 = vpop.permute.xlu0 %3350
        %3352 = vrot.lane.b32.xlu0 %v2957, 64
        %v3353 = vpop.permute.xlu0 %3352
        %3354 = vrot.lane.b32.xlu0 %v2958, 64
        %v3355 = vpop.permute.xlu0 %3354
        %3356 = vrot.lane.b32.xlu0 %v2959, 64
        %v3357 = vpop.permute.xlu0 %3356
        %3358 = vrot.lane.b32.xlu0 %v2960, 64
        %v3359 = vpop.permute.xlu0 %3358
        %3360 = vrot.lane.b32.xlu0 %v2961, 64
        %v3361 = vpop.permute.xlu0 %3360
        %3362 = vrot.lane.b32.xlu0 %v2962, 64
        %v3363 = vpop.permute.xlu0 %3362
        %3364 = vrot.lane.b32.xlu0 %v2963, 64
        %v3365 = vpop.permute.xlu0 %3364
        %3366 = vrot.lane.b32.xlu0 %v2964, 64
        %v3367 = vpop.permute.xlu0 %3366
        %s3400 = scalar_lea.vmem %s461, 384
        %3401 = vst.msk [vmem:[%s3400] sm:$0xf] %vm2032, %v3305
        %3402 = vst.msk [vmem:[%s3400 + $0x4] sm:$0xf] %vm2032, %v3307
        %3403 = vst.msk [vmem:[%s3400 + $0x8] sm:$0xf] %vm2032, %v3309
        %3404 = vst.msk [vmem:[%s3400 + $0xc] sm:$0xf] %vm2032, %v3311
        %3405 = vst.msk [vmem:[%s3400 + $0x10] sm:$0xf] %vm2032, %v3313
        %3406 = vst.msk [vmem:[%s3400 + $0x14] sm:$0xf] %vm2032, %v3315
        %3407 = vst.msk [vmem:[%s3400 + $0x18] sm:$0xf] %vm2032, %v3317
        %3408 = vst.msk [vmem:[%s3400 + $0x1c] sm:$0xf] %vm2032, %v3319
        %3409 = vst.msk [vmem:[%s3400 + $0x20] sm:$0xf] %vm2032, %v3321
        %3410 = vst.msk [vmem:[%s3400 + $0x24] sm:$0xf] %vm2032, %v3323
        %3411 = vst.msk [vmem:[%s3400 + $0x28] sm:$0xf] %vm2032, %v3325
        %3412 = vst.msk [vmem:[%s3400 + $0x2c] sm:$0xf] %vm2032, %v3327
        %3413 = vst.msk [vmem:[%s3400 + $0x30] sm:$0xf] %vm2032, %v3329
        %3414 = vst.msk [vmem:[%s3400 + $0x34] sm:$0xf] %vm2032, %v3331
        %3415 = vst.msk [vmem:[%s3400 + $0x38] sm:$0xf] %vm2032, %v3333
        %3416 = vst.msk [vmem:[%s3400 + $0x3c] sm:$0xf] %vm2032, %v3335
        %3417 = vst.msk [vmem:[%s3400 + $0x40] sm:$0xf] %vm2032, %v3337
        %3418 = vst.msk [vmem:[%s3400 + $0x44] sm:$0xf] %vm2032, %v3339
        %3419 = vst.msk [vmem:[%s3400 + $0x48] sm:$0xf] %vm2032, %v3341
        %3420 = vst.msk [vmem:[%s3400 + $0x4c] sm:$0xf] %vm2032, %v3343
        %3421 = vst.msk [vmem:[%s3400 + $0x50] sm:$0xf] %vm2032, %v3345
        %3422 = vst.msk [vmem:[%s3400 + $0x54] sm:$0xf] %vm2032, %v3347
        %3423 = vst.msk [vmem:[%s3400 + $0x58] sm:$0xf] %vm2032, %v3349
        %3424 = vst.msk [vmem:[%s3400 + $0x5c] sm:$0xf] %vm2032, %v3351
        %3425 = vst.msk [vmem:[%s3400 + $0x60] sm:$0xf] %vm2032, %v3353
        %3426 = vst.msk [vmem:[%s3400 + $0x64] sm:$0xf] %vm2032, %v3355
        %3427 = vst.msk [vmem:[%s3400 + $0x68] sm:$0xf] %vm2032, %v3357
        %3428 = vst.msk [vmem:[%s3400 + $0x6c] sm:$0xf] %vm2032, %v3359
        %3429 = vst.msk [vmem:[%s3400 + $0x70] sm:$0xf] %vm2032, %v3361
        %3430 = vst.msk [vmem:[%s3400 + $0x74] sm:$0xf] %vm2032, %v3363
        %3431 = vst.msk [vmem:[%s3400 + $0x78] sm:$0xf] %vm2032, %v3365
        %3432 = vst.msk [vmem:[%s3400 + $0x7c] sm:$0xf] %vm2032, %v3367
        %3433 = vrot.lane.b32.xlu0 %v3078, 64
        %v3434 = vpop.permute.xlu0 %3433
        %3435 = vrot.lane.b32.xlu0 %v3079, 64
        %v3436 = vpop.permute.xlu0 %3435
        %3437 = vrot.lane.b32.xlu0 %v3080, 64
        %v3438 = vpop.permute.xlu0 %3437
        %3439 = vrot.lane.b32.xlu0 %v3081, 64
        %v3440 = vpop.permute.xlu0 %3439
        %3441 = vrot.lane.b32.xlu0 %v3082, 64
        %v3442 = vpop.permute.xlu0 %3441
        %3443 = vrot.lane.b32.xlu0 %v3083, 64
        %v3444 = vpop.permute.xlu0 %3443
        %3445 = vrot.lane.b32.xlu0 %v3084, 64
        %v3446 = vpop.permute.xlu0 %3445
        %3447 = vrot.lane.b32.xlu0 %v3085, 64
        %v3448 = vpop.permute.xlu0 %3447
        %3449 = vrot.lane.b32.xlu0 %v3086, 64
        %v3450 = vpop.permute.xlu0 %3449
        %3451 = vrot.lane.b32.xlu0 %v3087, 64
        %v3452 = vpop.permute.xlu0 %3451
        %3453 = vrot.lane.b32.xlu0 %v3088, 64
        %v3454 = vpop.permute.xlu0 %3453
        %3455 = vrot.lane.b32.xlu0 %v3089, 64
        %v3456 = vpop.permute.xlu0 %3455
        %3457 = vrot.lane.b32.xlu0 %v3090, 64
        %v3458 = vpop.permute.xlu0 %3457
        %3459 = vrot.lane.b32.xlu0 %v3091, 64
        %v3460 = vpop.permute.xlu0 %3459
        %3461 = vrot.lane.b32.xlu0 %v3092, 64
        %v3462 = vpop.permute.xlu0 %3461
        %3463 = vrot.lane.b32.xlu0 %v3093, 64
        %v3464 = vpop.permute.xlu0 %3463
        %3465 = vrot.lane.b32.xlu0 %v3094, 64
        %v3466 = vpop.permute.xlu0 %3465
        %3467 = vrot.lane.b32.xlu0 %v3095, 64
        %v3468 = vpop.permute.xlu0 %3467
        %3469 = vrot.lane.b32.xlu0 %v3096, 64
        %v3470 = vpop.permute.xlu0 %3469
        %3471 = vrot.lane.b32.xlu0 %v3097, 64
        %v3472 = vpop.permute.xlu0 %3471
        %3473 = vrot.lane.b32.xlu0 %v3098, 64
        %v3474 = vpop.permute.xlu0 %3473
        %3475 = vrot.lane.b32.xlu0 %v3099, 64
        %v3476 = vpop.permute.xlu0 %3475
        %3477 = vrot.lane.b32.xlu0 %v3100, 64
        %v3478 = vpop.permute.xlu0 %3477
        %3479 = vrot.lane.b32.xlu0 %v3101, 64
        %v3480 = vpop.permute.xlu0 %3479
        %3481 = vrot.lane.b32.xlu0 %v3102, 64
        %v3482 = vpop.permute.xlu0 %3481
        %3483 = vrot.lane.b32.xlu0 %v3103, 64
        %v3484 = vpop.permute.xlu0 %3483
        %3485 = vrot.lane.b32.xlu0 %v3104, 64
        %v3486 = vpop.permute.xlu0 %3485
        %3487 = vrot.lane.b32.xlu0 %v3105, 64
        %v3488 = vpop.permute.xlu0 %3487
        %3489 = vrot.lane.b32.xlu0 %v3106, 64
        %v3490 = vpop.permute.xlu0 %3489
        %3491 = vrot.lane.b32.xlu0 %v3107, 64
        %v3492 = vpop.permute.xlu0 %3491
        %3493 = vrot.lane.b32.xlu0 %v3108, 64
        %v3494 = vpop.permute.xlu0 %3493
        %3495 = vrot.lane.b32.xlu0 %v3109, 64
        %v3496 = vpop.permute.xlu0 %3495
        %s3529 = scalar_lea.vmem %s471, 384
        %3530 = vst.msk [vmem:[%s3529] sm:$0xf] %vm2032, %v3434
        %3531 = vst.msk [vmem:[%s3529 + $0x4] sm:$0xf] %vm2032, %v3436
        %3532 = vst.msk [vmem:[%s3529 + $0x8] sm:$0xf] %vm2032, %v3438
        %3533 = vst.msk [vmem:[%s3529 + $0xc] sm:$0xf] %vm2032, %v3440
        %3534 = vst.msk [vmem:[%s3529 + $0x10] sm:$0xf] %vm2032, %v3442
        %3535 = vst.msk [vmem:[%s3529 + $0x14] sm:$0xf] %vm2032, %v3444
        %3536 = vst.msk [vmem:[%s3529 + $0x18] sm:$0xf] %vm2032, %v3446
        %3537 = vst.msk [vmem:[%s3529 + $0x1c] sm:$0xf] %vm2032, %v3448
        %3538 = vst.msk [vmem:[%s3529 + $0x20] sm:$0xf] %vm2032, %v3450
        %3539 = vst.msk [vmem:[%s3529 + $0x24] sm:$0xf] %vm2032, %v3452
        %3540 = vst.msk [vmem:[%s3529 + $0x28] sm:$0xf] %vm2032, %v3454
        %3541 = vst.msk [vmem:[%s3529 + $0x2c] sm:$0xf] %vm2032, %v3456
        %3542 = vst.msk [vmem:[%s3529 + $0x30] sm:$0xf] %vm2032, %v3458
        %3543 = vst.msk [vmem:[%s3529 + $0x34] sm:$0xf] %vm2032, %v3460
        %3544 = vst.msk [vmem:[%s3529 + $0x38] sm:$0xf] %vm2032, %v3462
        %3545 = vst.msk [vmem:[%s3529 + $0x3c] sm:$0xf] %vm2032, %v3464
        %3546 = vst.msk [vmem:[%s3529 + $0x40] sm:$0xf] %vm2032, %v3466
        %3547 = vst.msk [vmem:[%s3529 + $0x44] sm:$0xf] %vm2032, %v3468
        %3548 = vst.msk [vmem:[%s3529 + $0x48] sm:$0xf] %vm2032, %v3470
        %3549 = vst.msk [vmem:[%s3529 + $0x4c] sm:$0xf] %vm2032, %v3472
        %3550 = vst.msk [vmem:[%s3529 + $0x50] sm:$0xf] %vm2032, %v3474
        %3551 = vst.msk [vmem:[%s3529 + $0x54] sm:$0xf] %vm2032, %v3476
        %3552 = vst.msk [vmem:[%s3529 + $0x58] sm:$0xf] %vm2032, %v3478
        %3553 = vst.msk [vmem:[%s3529 + $0x5c] sm:$0xf] %vm2032, %v3480
        %3554 = vst.msk [vmem:[%s3529 + $0x60] sm:$0xf] %vm2032, %v3482
        %3555 = vst.msk [vmem:[%s3529 + $0x64] sm:$0xf] %vm2032, %v3484
        %3556 = vst.msk [vmem:[%s3529 + $0x68] sm:$0xf] %vm2032, %v3486
        %3557 = vst.msk [vmem:[%s3529 + $0x6c] sm:$0xf] %vm2032, %v3488
        %3558 = vst.msk [vmem:[%s3529 + $0x70] sm:$0xf] %vm2032, %v3490
        %3559 = vst.msk [vmem:[%s3529 + $0x74] sm:$0xf] %vm2032, %v3492
        %3560 = vst.msk [vmem:[%s3529 + $0x78] sm:$0xf] %vm2032, %v3494
        %3561 = vst.msk [vmem:[%s3529 + $0x7c] sm:$0xf] %vm2032, %v3496
        %s3562 = smul.u32 32, %s31
        %p3563 = scmp.lt.s32.totalorder %s30, 1
        %s3564 = scalar_select %p3563, %s30, 1
        %p3565 = scmp.lt.s32.totalorder %s3562, 31
        %s3566 = scalar_select %p3565, %s3562, 31
        %s3567 = smul.addr %s3564, 128
        %s3568 = sadd.s32 %s3566, %s3567
        %s3569 = smul.addr %s3568, 4
        %s3570 = scalar_lea.vmem %s7, %s3569
        %s3571 = smul.u32 32, %s31
        %p3572 = scmp.lt.s32.totalorder %s30, 1
        %s3573 = scalar_select %p3572, %s30, 1
        %p3574 = scmp.lt.s32.totalorder %s3571, 31
        %s3575 = scalar_select %p3574, %s3571, 31
        %s3576 = smul.addr %s3573, 128
        %s3577 = sadd.s32 %s3575, %s3576
        %s3578 = smul.addr %s3577, 4
        %s3579 = scalar_lea.vmem %s8, %s3578
        %s3580 = smul.u32 32, %s31
        %p3581 = scmp.lt.s32.totalorder %s30, 1
        %s3582 = scalar_select %p3581, %s30, 1
        %p3583 = scmp.lt.s32.totalorder %s3580, 31
        %s3584 = scalar_select %p3583, %s3580, 31
        %s3585 = smul.addr %s3582, 128
        %s3586 = sadd.s32 %s3584, %s3585
        %s3587 = smul.addr %s3586, 4
        %s3588 = scalar_lea.vmem %s9, %s3587
        // Predicated region
        $region65: #{tpu_custom_call.1} parent=47 // pred_check
          %p3589 = pneg %p212
        $region66: #{tpu_custom_call.1} parent=47 // pred_check_branch
          %3591 = sbr.rel (%p3589) target = $region68
        $region67: #{tpu_custom_call.1} parent=47 // pred_region
          %s3592 = smul.u32 32, %s31
        $region68: #{tpu_custom_call.1} parent=47 // pred_fallthru
          _
        // Predicated region
        $region69: #{tpu_custom_call.1} parent=47 // pred_check
          %p3593 = pneg %p240
        $region70: #{tpu_custom_call.1} parent=47 // pred_check_branch
          %3595 = sbr.rel (%p3593) target = $region72
        $region71: #{tpu_custom_call.1} parent=47 // pred_region
          %s3596 = smul.u32 32, %s31
        $region72: #{tpu_custom_call.1} parent=47 // pred_fallthru
          _
        // Predicated region
        $region73: #{tpu_custom_call.1} parent=47 // pred_check
          %p3597 = pneg %p268
        $region74: #{tpu_custom_call.1} parent=47 // pred_check_branch
          %3599 = sbr.rel (%p3597) target = $region76
        $region75: #{tpu_custom_call.1} parent=47 // pred_region
          %s3600 = smul.u32 32, %s31
        $region76: #{tpu_custom_call.1} parent=47 // pred_fallthru
          _
      $region48: #{tpu_custom_call.1} parent=5 // pred_fallthru
        _
      %p3601 = scmp.le.s32.totalorder 2, %s21
      // Predicated region
      $region77: #{tpu_custom_call.1} parent=5 // pred_check
        %p3602 = pneg %p3601
      $region78: #{tpu_custom_call.1} parent=5 // pred_check_branch
        %3604 = sbr.rel (%p3602) target = $region80
      $region79: #{tpu_custom_call.1} parent=5 // pred_region
        %s3605 = ssub.s32 %s21, 2
        // Predicated region
        $region81: #{tpu_custom_call.1} parent=79 // pred_check
          %p3606 = pneg %p218
        $region82: #{tpu_custom_call.1} parent=79 // pred_check_branch
          %3608 = sbr.rel (%p3606) target = $region84
        $region83: #{tpu_custom_call.1} parent=79 // pred_region
          %s3609 = smul.u32 32, %s33
          %p3610 = scmp.lt.s32.totalorder %s32, 1
          %s3611 = scalar_select %p3610, %s32, 1
          %p3612 = scmp.lt.s32.totalorder %s3609, 31
          %s3613 = scalar_select %p3612, %s3609, 31
          %s3614 = smul.addr %s3611, 128
          %s3615 = sadd.s32 %s3613, %s3614
          %s3616 = smul.addr %s3615, 4
          %s3617 = scalar_lea.vmem %s7, %s3616
        $region84: #{tpu_custom_call.1} parent=79 // pred_fallthru
          _
        // Predicated region
        $region85: #{tpu_custom_call.1} parent=79 // pred_check
          %p3618 = pneg %p246
        $region86: #{tpu_custom_call.1} parent=79 // pred_check_branch
          %3620 = sbr.rel (%p3618) target = $region88
        $region87: #{tpu_custom_call.1} parent=79 // pred_region
          %s3621 = smul.u32 32, %s33
          %p3622 = scmp.lt.s32.totalorder %s32, 1
          %s3623 = scalar_select %p3622, %s32, 1
          %p3624 = scmp.lt.s32.totalorder %s3621, 31
          %s3625 = scalar_select %p3624, %s3621, 31
          %s3626 = smul.addr %s3623, 128
          %s3627 = sadd.s32 %s3625, %s3626
          %s3628 = smul.addr %s3627, 4
          %s3629 = scalar_lea.vmem %s8, %s3628
        $region88: #{tpu_custom_call.1} parent=79 // pred_fallthru
          _
        // Predicated region
        $region89: #{tpu_custom_call.1} parent=79 // pred_check
          %p3630 = pneg %p274
        $region90: #{tpu_custom_call.1} parent=79 // pred_check_branch
          %3632 = sbr.rel (%p3630) target = $region92
        $region91: #{tpu_custom_call.1} parent=79 // pred_region
          %s3633 = smul.u32 32, %s33
          %p3634 = scmp.lt.s32.totalorder %s32, 1
          %s3635 = scalar_select %p3634, %s32, 1
          %p3636 = scmp.lt.s32.totalorder %s3633, 31
          %s3637 = scalar_select %p3636, %s3633, 31
          %s3638 = smul.addr %s3635, 128
          %s3639 = sadd.s32 %s3637, %s3638
          %s3640 = smul.addr %s3639, 4
          %s3641 = scalar_lea.vmem %s9, %s3640
        $region92: #{tpu_custom_call.1} parent=79 // pred_fallthru
          _
      $region80: #{tpu_custom_call.1} parent=5 // pred_fallthru
        _
    $region6: #{tpu_custom_call.1} parent=1 // loop_footer
      %s25 = sadd.s32 1, %s21
    $region7: #{tpu_custom_call.1} parent=1 // loop_footer_branch
      %20 = sbr.rel target = $region3
    $region8: #{tpu_custom_call.1} parent=1 // loop_exit
      _
    %3642 = vsyncpa [#allocation3], 1
    %s3643 = scalar_lea.sflag [#allocation3], 1
    %3644 = vsyncpa %s3643, 1
    %3645 = vsyncpa [#allocation5], 1
    %3646 = vsyncpa [#allocation8], 1

</llo_original>
